<compile_context>
chip_gen: v6e
topology: v6e:2x2x1
jax: 0.10.0
libtpu: 0.0.40
codegen_flags: <defaults>
</compile_context>

<pallas_src>
import math

import jax
import jax.numpy as jnp
from jax.experimental import pallas as pl
from jax.experimental.pallas import tpu as pltpu

_VMEM_LIMIT_BYTES = 32 * 1024 * 1024   # raises v5e's 16 MiB default, safe on v7x
_BLOCK_BUDGET_BYTES = 2 * 1024 * 1024  # per-block target (x2 dbl-buffer, x2 in/out)


def _compiler_params(n_parallel_axes):
    return pltpu.CompilerParams(
        dimension_semantics=("parallel",) * n_parallel_axes,
        vmem_limit_bytes=_VMEM_LIMIT_BYTES,
    )


def _choose_row_tile(H, row_bytes, granule, budget=_BLOCK_BUDGET_BYTES):
    """Largest row-tile Ht that is legal: Ht == H (full) or Ht % granule == 0."""
    if H * row_bytes <= budget:
        return H
    ht = (budget // max(row_bytes, 1)) // granule * granule
    ht = max(ht, granule)
    return min(ht, H)


def _to_channels_last(x):
    """(B, C, S1, ..., Sk) -> (B, S1, ..., Sk, C)   e.g. NCHW -> NHWC."""
    B, C = x.shape[0], x.shape[1]
    spatial = x.shape[2:]
    H = spatial[0]
    W = math.prod(spatial[1:])  # == 1 if there is a single spatial dim
    itemsize = jnp.dtype(x.dtype).itemsize
    row_bytes = C * W * itemsize
    # Ht sits in a second-minor block position -> sublane aligned (packed
    # dtypes pack along sublanes) unless Ht == H.
    sublane_granule = 8 * max(1, 4 // itemsize)
    Ht = _choose_row_tile(H, row_bytes, sublane_granule)
    nH = pl.cdiv(H, Ht)

    x4 = x.reshape(B, C, H, W)  # free: merges trailing contiguous dims

    def kernel(x_ref, o_ref):
        c, ht, w = x_ref.shape
        y = jnp.transpose(x_ref[...], (1, 2, 0))   # (Ht, W, C)
        o_ref[...] = y.reshape(ht, w * c)          # lane-dense (Ht, W*C) store

    out2 = pl.pallas_call(
        kernel,
        out_shape=jax.ShapeDtypeStruct((B, H, W * C), x.dtype),
        grid_spec=pltpu.PrefetchScalarGridSpec(
            num_scalar_prefetch=0,
            grid=(B, nH),
            in_specs=[pl.BlockSpec((None, C, Ht, W), lambda b, h: (b, 0, h, 0))],
            out_specs=pl.BlockSpec((None, Ht, W * C), lambda b, h: (b, h, 0)),
        ),
        compiler_params=_compiler_params(2),
    )(x4)
    return out2.reshape((B,) + spatial + (C,))  # free: splits trailing dims


def _to_channels_first(x):
    """(B, S1, ..., Sk, C) -> (B, C, S1, ..., Sk)   e.g. NHWC -> NCHW."""
    B, C = x.shape[0], x.shape[-1]
    spatial = x.shape[1:-1]
    H = spatial[0]
    W = math.prod(spatial[1:])
    L = H * W
    itemsize = jnp.dtype(x.dtype).itemsize
    row_bytes = C * W * itemsize
    # Output block's minor dim is Ht*W -> multiple of 128 lanes unless full.
    lane_granule = 128 // math.gcd(W, 128)
    Ht = _choose_row_tile(H, row_bytes, lane_granule)
    nH = pl.cdiv(H, Ht)

    x4 = x.reshape(B, H, W, C)  # free

    def kernel(x_ref, o_ref):
        ht, w, c = x_ref.shape
        y = jnp.transpose(x_ref[...], (2, 0, 1))   # (C, Ht, W)
        o_ref[...] = y.reshape(c, ht * w)          # lane-dense (C, Ht*W) store

    out2 = pl.pallas_call(
        kernel,
        out_shape=jax.ShapeDtypeStruct((B, C, L), x.dtype),
        grid_spec=pltpu.PrefetchScalarGridSpec(
            num_scalar_prefetch=0,
            grid=(B, nH),
            in_specs=[pl.BlockSpec((None, Ht, W, C), lambda b, h: (b, h, 0, 0))],
            out_specs=pl.BlockSpec((None, C, Ht * W), lambda b, h: (b, 0, h)),
        ),
        compiler_params=_compiler_params(2),
    )(x4)
    return out2.reshape((B, C) + spatial)  # free


def _generic_permute(x, dims):
    """Generic tiled permute: grid over one major axis when legal."""
    out_shape = tuple(x.shape[d] for d in dims)
    n = x.ndim

    def kernel(x_ref, o_ref):
        o_ref[...] = jnp.transpose(x_ref[...], dims)

    d0 = dims[0]
    # Tile over the leading output axis whenever it is a major (non-minor)
    # dim of the input view so the (8, 128) block rule is met with
    # full-extent minor dims and per-step VMEM stays bounded.
    if n >= 3 and d0 < n - 2 and x.shape[d0] > 1:
        G = x.shape[d0]
        in_block = tuple(1 if a == d0 else x.shape[a] for a in range(n))
        out_block = (1,) + out_shape[1:]

        def in_map(g):
            return tuple(g if a == d0 else 0 for a in range(n))

        def out_map(g):
            return (g,) + (0,) * (n - 1)

        return pl.pallas_call(
            kernel,
            out_shape=jax.ShapeDtypeStruct(out_shape, x.dtype),
            grid_spec=pltpu.PrefetchScalarGridSpec(
                num_scalar_prefetch=0,
                grid=(G,),
                in_specs=[pl.BlockSpec(in_block, in_map)],
                out_specs=pl.BlockSpec(out_block, out_map),
            ),
            compiler_params=_compiler_params(1),
        )(x)

    # Small / unusual permutations: whole array in one VMEM block.
    return pl.pallas_call(
        kernel,
        out_shape=jax.ShapeDtypeStruct(out_shape, x.dtype),
        grid=(),
        in_specs=[pl.BlockSpec(x.shape, lambda: (0,) * n)],
        out_specs=pl.BlockSpec(out_shape, lambda: (0,) * n),
        compiler_params=pltpu.CompilerParams(vmem_limit_bytes=_VMEM_LIMIT_BYTES),
    )(x)


def permute(x: jax.Array, dims) -> jax.Array:
    """Pallas equivalent of torch.permute(x, dims)."""
    dims = tuple(int(d) for d in dims)
    n = x.ndim
    assert sorted(dims) == list(range(n)), "dims must be a permutation of axes"

    if dims == tuple(range(n)):
        return x  # identity permutation

    channels_last = n >= 3 and dims == (0,) + tuple(range(2, n)) + (1,)
    channels_first = n >= 3 and dims == (0, n - 1) + tuple(range(1, n - 1))

    if channels_last or channels_first:
        specialized = _to_channels_last if channels_last else _to_channels_first
        try:
            return specialized(x)
        except Exception:
            # Defensive: if this Mosaic/JAX version rejects the in-kernel
            # minor-dim reshape, fall back to the generic (proven) formulation.
            return _generic_permute(x, dims)

    return _generic_permute(x, dims)


class Permute:
    """Mirror of the PyTorch module: returns the input with dims permuted."""

    def __init__(self, dims):
        self.dims = tuple(dims)

    def __call__(self, x: jax.Array) -> jax.Array:
        return permute(x, self.dims)


if __name__ == "__main__":
    key = jax.random.PRNGKey(0)
    # Small NCHW input consistent with ConvNeXt usage: B=2, C=4, H=W=16.
    x = jax.random.normal(key, (2, 4, 16, 16), dtype=jnp.float32)

    # ConvNeXt's Permute([0, 2, 3, 1]) (NCHW -> NHWC).
    out = jax.block_until_ready(Permute([0, 2, 3, 1])(x))
    ref = jnp.transpose(x, (0, 2, 3, 1))
    assert out.shape == ref.shape == (2, 16, 16, 4)
    assert out.dtype == x.dtype
    assert jnp.array_equal(out, ref)

    # Inverse permutation (NHWC -> NCHW), also used in ConvNeXt.
    out2 = jax.block_until_ready(Permute([0, 3, 1, 2])(out))
    assert jnp.array_equal(out2, x)

    # A generic (non-ConvNeXt) permutation to exercise the fallback path.
    out3 = jax.block_until_ready(Permute([1, 0, 2, 3])(x))
    assert jnp.array_equal(out3, jnp.transpose(x, (1, 0, 2, 3)))

    print("KERNEL_OK")
</pallas_src>

<mosaic_0001>
module attributes {stable_mosaic.version = 11 : i64} {
  func.func @kernel(%arg0: i32, %arg1: i32, %arg2: memref<1x4x16x16xf32, #tpu.memory_space<vmem>>, %arg3: memref<1x16x64xf32, #tpu.memory_space<vmem>>) attributes {dimension_semantics = [#tpu.dimension_semantics<parallel>, #tpu.dimension_semantics<parallel>], iteration_bounds = array<i64: 2, 1>, scalar_prefetch = 0 : i64, scratch_operands = 0 : i64, tpu.core_type = #tpu.core_type<tc>, window_params = [{transform_indices = @transform_0, window_bounds = array<i64: 1, 4, 16, 16>}, {transform_indices = @transform_1, window_bounds = array<i64: 1, 16, 64>}]} {
    %c0 = arith.constant 0 : index
    %c0_0 = arith.constant 0 : index
    %c0_1 = arith.constant 0 : index
    %c0_2 = arith.constant 0 : index
    %0 = vector.load %arg2[%c0, %c0_0, %c0_1, %c0_2] : memref<1x4x16x16xf32, #tpu.memory_space<vmem>>, vector<1x4x16x16xf32>
    %1 = vector.shape_cast %0 : vector<1x4x16x16xf32> to vector<4x16x16xf32>
    %2 = tpu.transpose %1, [1, 2, 0] : vector<4x16x16xf32> -> vector<16x16x4xf32>
    %3 = vector.shape_cast %2 : vector<16x16x4xf32> to vector<16x64xf32>
    %c0_3 = arith.constant 0 : index
    %c0_4 = arith.constant 0 : index
    %c0_5 = arith.constant 0 : index
    %4 = vector.load %arg3[%c0_3, %c0_4, %c0_5] : memref<1x16x64xf32, #tpu.memory_space<vmem>>, vector<1x16x64xf32>
    %5 = vector.shape_cast %4 : vector<1x16x64xf32> to vector<16x64xf32>
    %6 = vector.shape_cast %3 : vector<16x64xf32> to vector<1x16x64xf32>
    tpu.vector_store %arg3[%c0_3, %c0_4, %c0_5], %6 {strides = array<i32>} : memref<1x16x64xf32, #tpu.memory_space<vmem>>, vector<1x16x64xf32>,
    return
  }
  func.func @transform_0(%arg0: i32, %arg1: i32) -> (i32, i32, i32, i32) {
    %c0_i32 = arith.constant 0 : i32
    %c0_i32_0 = arith.constant 0 : i32
    %c0_i32_1 = arith.constant 0 : i32
    return %arg0, %c0_i32, %arg1, %c0_i32_0 : i32, i32, i32, i32
  }
  func.func @transform_1(%arg0: i32, %arg1: i32) -> (i32, i32, i32) {
    %c0_i32 = arith.constant 0 : i32
    %c0_i32_0 = arith.constant 0 : i32
    return %arg0, %arg1, %c0_i32 : i32, i32, i32
  }
}

module attributes {stable_mosaic.version = 11 : i64} {
  func.func @kernel(%arg0: i32, %arg1: memref<1x4x16x16xf32, #tpu.memory_space<vmem>>, %arg2: memref<1x16x16x4xf32, #tpu.memory_space<vmem>>) attributes {dimension_semantics = [#tpu.dimension_semantics<parallel>], iteration_bounds = array<i64: 2>, scalar_prefetch = 0 : i64, scratch_operands = 0 : i64, tpu.core_type = #tpu.core_type<tc>, window_params = [{transform_indices = @transform_0, window_bounds = array<i64: 1, 4, 16, 16>}, {transform_indices = @transform_1, window_bounds = array<i64: 1, 16, 16, 4>}]} {
    %c0 = arith.constant 0 : index
    %c0_0 = arith.constant 0 : index
    %c0_1 = arith.constant 0 : index
    %c0_2 = arith.constant 0 : index
    %0 = vector.load %arg1[%c0, %c0_0, %c0_1, %c0_2] : memref<1x4x16x16xf32, #tpu.memory_space<vmem>>, vector<1x4x16x16xf32>
    %1 = tpu.transpose %0, [0, 2, 3, 1] : vector<1x4x16x16xf32> -> vector<1x16x16x4xf32>
    %c0_3 = arith.constant 0 : index
    %c0_4 = arith.constant 0 : index
    %c0_5 = arith.constant 0 : index
    %c0_6 = arith.constant 0 : index
    %2 = vector.load %arg2[%c0_3, %c0_4, %c0_5, %c0_6] : memref<1x16x16x4xf32, #tpu.memory_space<vmem>>, vector<1x16x16x4xf32>
    tpu.vector_store %arg2[%c0_3, %c0_4, %c0_5, %c0_6], %1 {strides = array<i32>} : memref<1x16x16x4xf32, #tpu.memory_space<vmem>>, vector<1x16x16x4xf32>,
    return
  }
  func.func @transform_0(%arg0: i32) -> (i32, i32, i32, i32) {
    %c0_i32 = arith.constant 0 : i32
    %c0_i32_0 = arith.constant 0 : i32
    %c0_i32_1 = arith.constant 0 : i32
    %c0_i32_2 = arith.constant 0 : i32
    return %arg0, %c0_i32, %c0_i32_0, %c0_i32_1 : i32, i32, i32, i32
  }
  func.func @transform_1(%arg0: i32) -> (i32, i32, i32, i32) {
    %c0_i32 = arith.constant 0 : i32
    %c0_i32_0 = arith.constant 0 : i32
    %c0_i32_1 = arith.constant 0 : i32
    %c0_i32_2 = arith.constant 0 : i32
    return %arg0, %c0_i32, %c0_i32_0, %c0_i32_1 : i32, i32, i32, i32
  }
}

</mosaic_0001>

<llo_original>
// kernel: tpu_custom_call.1
$region0: #{tpu_custom_call.1}
  #allocation0 [shape = 'u32[]', space=smem, size = 0x4, offset = 0x4, fixed_abs, tag = 'smem constant byte address 0x4 - core index']
  #allocation1 [shape = 'u32[144,128]{1,0:T(1,128)}', space=vmem, size = 0x12000, scoped, tag = 'internal scratch']
  %s0 = inlined_call_operand.hbm [shape: f32[2,4,16,16], index: 0, kind: input, shape index: {}]
  %s1 = inlined_call_operand.hbm [shape: f32[2,16,64], index: 1, kind: output, shape index: {}]
  %s2 = sld [smem:[#allocation0]]
  $region41: #{tpu_custom_call.1} parent=0
    _
  %s4 = ssub.s32 1, %s2
  %s5 = scalar_select 0, %s4, %s2
  $region1: #{tpu_custom_call.1} parent=0
    #allocation2 [shape = 'u8[65536]{0}', space=vmem, size = 0x10000, scoped, tag = 'input window, operand 0']
    #allocation3 [shape = 's32[2]{0}', space=sflag, size = 0x8, scoped, tag = 'scoped memory for tpu_custom_call.1']
    #allocation4 [shape = 's32[2]{0}', space=sflag, size = 0x8, scoped, tag = 'scoped memory for tpu_custom_call.1']
    #allocation5 [shape = 'u8[16384]{0}', space=vmem, size = 0x4000, scoped, tag = 'output window, operand 0']
    %6 = vsyncpa [#allocation3], 0
    %s7 = scalar_lea.sflag [#allocation3], 1
    %8 = vsyncpa %s7, 0
    %9 = vsyncpa [#allocation4], 0
    %s10 = scalar_lea.sflag [#allocation4], 1
    %11 = vsyncpa %s10, 0
    loop: start=0, step=1, limit=4
    $region2: #{tpu_custom_call.1} parent=1 // loop_pre_header
      _
    $region3: #{tpu_custom_call.1} parent=1 // loop_header
      %s13 = sphi 0, %s17
      %p14 = scmp.ge.s32.totalorder %s13, 4
      %s20 = sphi 0, %s32
      %s21 = sphi 0, %s28
      %s22 = sphi 0, %s20
      %s23 = sphi 0, %s21
      %s24 = sphi 0, %s22
      %s25 = sphi 0, %s23
      %s37 = sphi 0, %s39
      %s40 = sphi 0, %s37
      %s41 = sphi 0, %s40
      %s57 = sphi 0, %s41
      %s65 = sphi 0, %s67
      %s68 = sphi 0, %s65
      %s69 = sphi 0, %s68
      %s85 = sphi 0, %s69
    $region4: #{tpu_custom_call.1} parent=1 // loop_header_branch
      %16 = sbr.rel (%p14) target = $region8
    $region5: #{tpu_custom_call.1} parent=1 // loop_body
      %s18 = ssub.s32 %s13, 1
      %s19 = ssub.s32 %s13, 2
      %s26 = sadd.s32 1, %s21
      %p27 = scmp.ge.s32.totalorder %s26, 1
      %s28 = scalar_select %p27, 0, %s26
      %s29 = sadd.s32 1, %s20
      %s30 = scalar_select %p27, %s29, %s20
      %p31 = scmp.ge.s32.totalorder %s30, 2
      %s32 = scalar_select %p31, 0, %s30
      %s33 = ssub.s32 %s20, %s32
      %s34 = ssub.s32 %s21, %s28
      %s35 = sor.u32 %s33, %s34
      %p36 = scmp.eq.s32.totalorder %s35, 0
      %s38 = sadd.s32 %s37, 1
      %s39 = scalar_select %p36, %s37, %s38
      %p42 = pneg %p36
      %p43 = scmp.eq.s32.totalorder %s13, 1
      %p44 = por %p42, %p43
      %p45 = scmp.ne.s32.totalorder %s37, %s40
      %p46 = scmp.eq.s32.totalorder %s13, 0
      %p47 = por %p45, %p46
      %p48 = scmp.ne.s32.totalorder %s37, %s40
      %p49 = scmp.eq.s32.totalorder %s18, 1
      %p50 = por %p48, %p49
      %p51 = scmp.ne.s32.totalorder %s40, %s41
      %p52 = scmp.eq.s32.totalorder %s18, 0
      %p53 = por %p51, %p52
      %p54 = scmp.ne.s32.totalorder %s40, %s41
      %p55 = scmp.eq.s32.totalorder %s19, 1
      %p56 = por %p54, %p55
      %p58 = scmp.ne.s32.totalorder %s41, %s57
      %p59 = scmp.eq.s32.totalorder %s19, 0
      %p60 = por %p58, %p59
      %s61 = ssub.s32 %s20, %s32
      %s62 = ssub.s32 %s21, %s28
      %s63 = sor.u32 %s61, %s62
      %p64 = scmp.eq.s32.totalorder %s63, 0
      %s66 = sadd.s32 %s65, 1
      %s67 = scalar_select %p64, %s65, %s66
      %p70 = pneg %p64
      %p71 = scmp.eq.s32.totalorder %s13, 1
      %p72 = por %p70, %p71
      %p73 = scmp.ne.s32.totalorder %s65, %s68
      %p74 = scmp.eq.s32.totalorder %s13, 0
      %p75 = por %p73, %p74
      %p76 = scmp.ne.s32.totalorder %s65, %s68
      %p77 = scmp.eq.s32.totalorder %s18, 1
      %p78 = por %p76, %p77
      %p79 = scmp.ne.s32.totalorder %s68, %s69
      %p80 = scmp.eq.s32.totalorder %s18, 0
      %p81 = por %p79, %p80
      %p82 = scmp.ne.s32.totalorder %s68, %s69
      %p83 = scmp.eq.s32.totalorder %s19, 1
      %p84 = por %p82, %p83
      %p86 = scmp.ne.s32.totalorder %s69, %s85
      %p87 = scmp.eq.s32.totalorder %s19, 0
      %p88 = por %p86, %p87
      %p89 = scmp.le.s32.totalorder 1, %s13
      %p90 = scmp.lt.s32.totalorder %s13, 3
      %p91 = pnand %p89, %p90
      %p92 = pneg %p91
      // Predicated region
      $region9: #{tpu_custom_call.1} parent=5 // pred_check
        _
      $region10: #{tpu_custom_call.1} parent=5 // pred_check_branch
        %94 = sbr.rel (%p91) target = $region12
      $region11: #{tpu_custom_call.1} parent=5 // pred_region
        %s95 = ssub.s32 %s13, 1
      $region12: #{tpu_custom_call.1} parent=5 // pred_fallthru
        _
      %p96 = scmp.lt.s32.totalorder %s13, 2
      // Predicated region
      $region13: #{tpu_custom_call.1} parent=5 // pred_check
        %p97 = pneg %p96
      $region14: #{tpu_custom_call.1} parent=5 // pred_check_branch
        %99 = sbr.rel (%p97) target = $region16
      $region15: #{tpu_custom_call.1} parent=5 // pred_region
        // Predicated region
        $region17: #{tpu_custom_call.1} parent=15 // pred_check
          %p100 = pneg %p47
        $region18: #{tpu_custom_call.1} parent=15 // pred_check_branch
          %102 = sbr.rel (%p100) target = $region20
        $region19: #{tpu_custom_call.1} parent=15 // pred_region
          %s103 = sand.u32 %s37, 1
          %s104 = scalar_lea.sflag [#allocation3], %s103
          %s105 = sand.u32 %s37, 1
          %s106 = smul.addr %s105, 64
          %s107 = scalar_lea.vmem [#allocation2], %s106
          %s108 = smul.u32 2, %s21
          %s110 = ssub.s32 1024, 1024
          %111 = vsyncadd %s104, %s110
          %s112 = smul.addr %s20, 8
          %s113 = sadd.s32 %s108, %s112
          %s114 = smul.addr %s113, 128
          %s115 = scalar_lea.hbm %s0, %s114
          %s116 = sshll.u32 %s107, 4
          %s117 = int_to_ptr.vmem [resolvable:$true] %s116
          %122 = dma.hbm_to_vmem [thread:$0]  %s115, 1024, %s117, %s104, 128, 128, 8
        $region20: #{tpu_custom_call.1} parent=15 // pred_fallthru
          _
      $region16: #{tpu_custom_call.1} parent=5 // pred_fallthru
        _
      %p123 = scmp.le.s32.totalorder 1, %s13
      %p124 = scmp.lt.s32.totalorder %s13, 3
      %p125 = pnand %p123, %p124
      %p126 = pneg %p125
      // Predicated region
      $region21: #{tpu_custom_call.1} parent=5 // pred_check
        _
      $region22: #{tpu_custom_call.1} parent=5 // pred_check_branch
        %128 = sbr.rel (%p125) target = $region24
      $region23: #{tpu_custom_call.1} parent=5 // pred_region
        %s129 = ssub.s32 %s13, 1
        %s130 = sand.u32 %s40, 1
        %s131 = scalar_lea.sflag [#allocation3], %s130
        %s132 = sand.u32 %s40, 1
        %s133 = smul.addr %s132, 64
        %s134 = scalar_lea.vmem [#allocation2], %s133
        // Predicated region
        $region25: #{tpu_custom_call.1} parent=23 // pred_check
          %p135 = pneg %p53
        $region26: #{tpu_custom_call.1} parent=23 // pred_check_branch
          %137 = sbr.rel (%p135) target = $region28
        $region27: #{tpu_custom_call.1} parent=23 // pred_region
          %138 = dma.done %s131, 1024
        $region28: #{tpu_custom_call.1} parent=23 // pred_fallthru
          _
        %s139 = sand.u32 %s40, 1
        %s140 = scalar_lea.sflag [#allocation3], %s139
        %s141 = sand.u32 %s40, 1
        %s142 = smul.addr %s141, 64
        %s143 = scalar_lea.vmem [#allocation2], %s142
        %p144 = pneg %p53
        %p145 = pneg %p50
        %p146 = pneg %p81
        %p147 = pneg %p78
        %s148 = sand.u32 %s68, 1
        %s149 = scalar_lea.sflag [#allocation4], %s148
        %s150 = sand.u32 %s68, 1
        %s151 = smul.addr %s150, 16
        %s152 = scalar_lea.vmem [#allocation5], %s151
        %s153 = smul.u32 2, %s23
        %s154 = smul.u32 2, %s23
        %v155 = vld [vmem:[%s134] sm:$0xff]
        %v156 = vld [vmem:[%s134 + $0x8] sm:$0xff]
        %v157 = vld [vmem:[%s134 + $0x10] sm:$0xff]
        %v158 = vld [vmem:[%s134 + $0x18] sm:$0xff]
        %v159 = vld [vmem:[%s134 + $0x20] sm:$0xff]
        %v160 = vld [vmem:[%s134 + $0x28] sm:$0xff]
        %v161 = vld [vmem:[%s134 + $0x30] sm:$0xff]
        %v162 = vld [vmem:[%s134 + $0x38] sm:$0xff]
        %163 = vxpose.xlu0.b32.start [1/16] %v155, 128
        %164 = vxpose.xlu0.b32.cont [2/16] %v156, 128
        %165 = vxpose.xlu0.b32.cont [3/16] 0.0, 128
        %166 = vxpose.xlu0.b32.cont [4/16] 0.0, 128
        %167 = vxpose.xlu0.b32.cont [5/16] 0.0, 128
        %168 = vxpose.xlu0.b32.cont [6/16] 0.0, 128
        %169 = vxpose.xlu0.b32.cont [7/16] 0.0, 128
        %170 = vxpose.xlu0.b32.cont [8/16] 0.0, 128
        %171 = vxpose.xlu0.b32.cont [9/16] 0.0, 128
        %172 = vxpose.xlu0.b32.cont [10/16] 0.0, 128
        %173 = vxpose.xlu0.b32.cont [11/16] 0.0, 128
        %174 = vxpose.xlu0.b32.cont [12/16] 0.0, 128
        %175 = vxpose.xlu0.b32.cont [13/16] 0.0, 128
        %176 = vxpose.xlu0.b32.cont [14/16] 0.0, 128
        %177 = vxpose.xlu0.b32.cont [15/16] 0.0, 128
        %178 = vxpose.xlu0.b32.end [16/16] 0.0, 128
        %v179 = vpop.trf.xlu0
        %v180 = vpop.trf.xlu0
        %v181 = vpop.trf.xlu0
        %v182 = vpop.trf.xlu0
        %v183 = vpop.trf.xlu0
        %v184 = vpop.trf.xlu0
        %v185 = vpop.trf.xlu0
        %v186 = vpop.trf.xlu0
        %v187 = vpop.trf.xlu0
        %v188 = vpop.trf.xlu0
        %v189 = vpop.trf.xlu0
        %v190 = vpop.trf.xlu0
        %v191 = vpop.trf.xlu0
        %v192 = vpop.trf.xlu0
        %v193 = vpop.trf.xlu0
        %v194 = vpop.trf.xlu0
        %195 = vxpose.xlu0.b32.start [1/16] %v157, 128
        %196 = vxpose.xlu0.b32.cont [2/16] %v158, 128
        %197 = vxpose.xlu0.b32.cont [3/16] 0.0, 128
        %198 = vxpose.xlu0.b32.cont [4/16] 0.0, 128
        %199 = vxpose.xlu0.b32.cont [5/16] 0.0, 128
        %200 = vxpose.xlu0.b32.cont [6/16] 0.0, 128
        %201 = vxpose.xlu0.b32.cont [7/16] 0.0, 128
        %202 = vxpose.xlu0.b32.cont [8/16] 0.0, 128
        %203 = vxpose.xlu0.b32.cont [9/16] 0.0, 128
        %204 = vxpose.xlu0.b32.cont [10/16] 0.0, 128
        %205 = vxpose.xlu0.b32.cont [11/16] 0.0, 128
        %206 = vxpose.xlu0.b32.cont [12/16] 0.0, 128
        %207 = vxpose.xlu0.b32.cont [13/16] 0.0, 128
        %208 = vxpose.xlu0.b32.cont [14/16] 0.0, 128
        %209 = vxpose.xlu0.b32.cont [15/16] 0.0, 128
        %210 = vxpose.xlu0.b32.end [16/16] 0.0, 128
        %v211 = vpop.trf.xlu0
        %v212 = vpop.trf.xlu0
        %v213 = vpop.trf.xlu0
        %v214 = vpop.trf.xlu0
        %v215 = vpop.trf.xlu0
        %v216 = vpop.trf.xlu0
        %v217 = vpop.trf.xlu0
        %v218 = vpop.trf.xlu0
        %v219 = vpop.trf.xlu0
        %v220 = vpop.trf.xlu0
        %v221 = vpop.trf.xlu0
        %v222 = vpop.trf.xlu0
        %v223 = vpop.trf.xlu0
        %v224 = vpop.trf.xlu0
        %v225 = vpop.trf.xlu0
        %v226 = vpop.trf.xlu0
        %227 = vxpose.xlu0.b32.start [1/16] %v159, 128
        %228 = vxpose.xlu0.b32.cont [2/16] %v160, 128
        %229 = vxpose.xlu0.b32.cont [3/16] 0.0, 128
        %230 = vxpose.xlu0.b32.cont [4/16] 0.0, 128
        %231 = vxpose.xlu0.b32.cont [5/16] 0.0, 128
        %232 = vxpose.xlu0.b32.cont [6/16] 0.0, 128
        %233 = vxpose.xlu0.b32.cont [7/16] 0.0, 128
        %234 = vxpose.xlu0.b32.cont [8/16] 0.0, 128
        %235 = vxpose.xlu0.b32.cont [9/16] 0.0, 128
        %236 = vxpose.xlu0.b32.cont [10/16] 0.0, 128
        %237 = vxpose.xlu0.b32.cont [11/16] 0.0, 128
        %238 = vxpose.xlu0.b32.cont [12/16] 0.0, 128
        %239 = vxpose.xlu0.b32.cont [13/16] 0.0, 128
        %240 = vxpose.xlu0.b32.cont [14/16] 0.0, 128
        %241 = vxpose.xlu0.b32.cont [15/16] 0.0, 128
        %242 = vxpose.xlu0.b32.end [16/16] 0.0, 128
        %v243 = vpop.trf.xlu0
        %v244 = vpop.trf.xlu0
        %v245 = vpop.trf.xlu0
        %v246 = vpop.trf.xlu0
        %v247 = vpop.trf.xlu0
        %v248 = vpop.trf.xlu0
        %v249 = vpop.trf.xlu0
        %v250 = vpop.trf.xlu0
        %v251 = vpop.trf.xlu0
        %v252 = vpop.trf.xlu0
        %v253 = vpop.trf.xlu0
        %v254 = vpop.trf.xlu0
        %v255 = vpop.trf.xlu0
        %v256 = vpop.trf.xlu0
        %v257 = vpop.trf.xlu0
        %v258 = vpop.trf.xlu0
        %259 = vxpose.xlu0.b32.start [1/16] %v161, 128
        %260 = vxpose.xlu0.b32.cont [2/16] %v162, 128
        %261 = vxpose.xlu0.b32.cont [3/16] 0.0, 128
        %262 = vxpose.xlu0.b32.cont [4/16] 0.0, 128
        %263 = vxpose.xlu0.b32.cont [5/16] 0.0, 128
        %264 = vxpose.xlu0.b32.cont [6/16] 0.0, 128
        %265 = vxpose.xlu0.b32.cont [7/16] 0.0, 128
        %266 = vxpose.xlu0.b32.cont [8/16] 0.0, 128
        %267 = vxpose.xlu0.b32.cont [9/16] 0.0, 128
        %268 = vxpose.xlu0.b32.cont [10/16] 0.0, 128
        %269 = vxpose.xlu0.b32.cont [11/16] 0.0, 128
        %270 = vxpose.xlu0.b32.cont [12/16] 0.0, 128
        %271 = vxpose.xlu0.b32.cont [13/16] 0.0, 128
        %272 = vxpose.xlu0.b32.cont [14/16] 0.0, 128
        %273 = vxpose.xlu0.b32.cont [15/16] 0.0, 128
        %274 = vxpose.xlu0.b32.end [16/16] 0.0, 128
        %v275 = vpop.trf.xlu0
        %v276 = vpop.trf.xlu0
        %v277 = vpop.trf.xlu0
        %v278 = vpop.trf.xlu0
        %v279 = vpop.trf.xlu0
        %v280 = vpop.trf.xlu0
        %v281 = vpop.trf.xlu0
        %v282 = vpop.trf.xlu0
        %v283 = vpop.trf.xlu0
        %v284 = vpop.trf.xlu0
        %v285 = vpop.trf.xlu0
        %v286 = vpop.trf.xlu0
        %v287 = vpop.trf.xlu0
        %v288 = vpop.trf.xlu0
        %v289 = vpop.trf.xlu0
        %v290 = vpop.trf.xlu0
        %v291 = vcombine.low %v179, %v243
        %v292 = vcombine.high %v179, %v243
        %v294 = vunpack.c.l.s4 1983009808
        %v295 = vunpack.c.0.s8 %v294
        %v296 = vlaneseq
        %v297 = vshrl.u32 %v296, 7
        %v298 = vsub.s32 %v295, %v297
        %v299 = vrot.slane %v291, %v298
        %v301 = vunpack.c.l.s4 1983009808
        %v302 = vunpack.c.0.s8 %v301
        %v303 = vlaneseq
        %v304 = vshrl.u32 %v303, 7
        %v305 = vsub.s32 %v302, %v304
        %v306 = vrot.slane %v292, %v305
        %v307 = vcombine.low %v211, %v275
        %v308 = vcombine.high %v211, %v275
        %v310 = vunpack.c.l.s4 1983009808
        %v311 = vunpack.c.0.s8 %v310
        %v312 = vlaneseq
        %v313 = vshrl.u32 %v312, 7
        %v314 = vsub.s32 %v311, %v313
        %v315 = vrot.slane %v307, %v314
        %v317 = vunpack.c.l.s4 1983009808
        %v318 = vunpack.c.0.s8 %v317
        %v319 = vlaneseq
        %v320 = vshrl.u32 %v319, 7
        %v321 = vsub.s32 %v318, %v320
        %v322 = vrot.slane %v308, %v321
        %v323 = vcombine.low %v299, %v315
        %v324 = vcombine.high %v299, %v315
        %v326 = vunpack.c.l.s4 1934713408
        %v327 = vunpack.c.0.s8 %v326
        %v328 = vlaneseq
        %v329 = vshrl.u32 %v328, 7
        %v330 = vsub.s32 %v327, %v329
        %v331 = vrot.slane %v323, %v330
        %v333 = vunpack.c.l.s4 1934713408
        %v334 = vunpack.c.0.s8 %v333
        %v335 = vlaneseq
        %v336 = vshrl.u32 %v335, 7
        %v337 = vsub.s32 %v334, %v336
        %v338 = vrot.slane %v324, %v337
        %v339 = vcombine.low %v306, %v322
        %v340 = vcombine.high %v306, %v322
        %v342 = vunpack.c.l.s4 1934713408
        %v343 = vunpack.c.0.s8 %v342
        %v344 = vlaneseq
        %v345 = vshrl.u32 %v344, 7
        %v346 = vsub.s32 %v343, %v345
        %v347 = vrot.slane %v339, %v346
        %v349 = vunpack.c.l.s4 1934713408
        %v350 = vunpack.c.0.s8 %v349
        %v351 = vlaneseq
        %v352 = vshrl.u32 %v351, 7
        %v353 = vsub.s32 %v350, %v352
        %v354 = vrot.slane %v340, %v353
        %v355 = vcombine.high %v331, 0.0
        %v356 = vcombine.high %v338, 0.0
        %v357 = vcombine.high %v347, 0.0
        %v358 = vcombine.high %v354, 0.0
        %v359 = vcombine.low %v180, %v244
        %v360 = vcombine.high %v180, %v244
        %v362 = vunpack.c.l.s4 1983009808
        %v363 = vunpack.c.0.s8 %v362
        %v364 = vlaneseq
        %v365 = vshrl.u32 %v364, 7
        %v366 = vsub.s32 %v363, %v365
        %v367 = vrot.slane %v359, %v366
        %v369 = vunpack.c.l.s4 1983009808
        %v370 = vunpack.c.0.s8 %v369
        %v371 = vlaneseq
        %v372 = vshrl.u32 %v371, 7
        %v373 = vsub.s32 %v370, %v372
        %v374 = vrot.slane %v360, %v373
        %v375 = vcombine.low %v212, %v276
        %v376 = vcombine.high %v212, %v276
        %v378 = vunpack.c.l.s4 1983009808
        %v379 = vunpack.c.0.s8 %v378
        %v380 = vlaneseq
        %v381 = vshrl.u32 %v380, 7
        %v382 = vsub.s32 %v379, %v381
        %v383 = vrot.slane %v375, %v382
        %v385 = vunpack.c.l.s4 1983009808
        %v386 = vunpack.c.0.s8 %v385
        %v387 = vlaneseq
        %v388 = vshrl.u32 %v387, 7
        %v389 = vsub.s32 %v386, %v388
        %v390 = vrot.slane %v376, %v389
        %v391 = vcombine.low %v367, %v383
        %v392 = vcombine.high %v367, %v383
        %v394 = vunpack.c.l.s4 1934713408
        %v395 = vunpack.c.0.s8 %v394
        %v396 = vlaneseq
        %v397 = vshrl.u32 %v396, 7
        %v398 = vsub.s32 %v395, %v397
        %v399 = vrot.slane %v391, %v398
        %v401 = vunpack.c.l.s4 1934713408
        %v402 = vunpack.c.0.s8 %v401
        %v403 = vlaneseq
        %v404 = vshrl.u32 %v403, 7
        %v405 = vsub.s32 %v402, %v404
        %v406 = vrot.slane %v392, %v405
        %v407 = vcombine.low %v374, %v390
        %v408 = vcombine.high %v374, %v390
        %v410 = vunpack.c.l.s4 1934713408
        %v411 = vunpack.c.0.s8 %v410
        %v412 = vlaneseq
        %v413 = vshrl.u32 %v412, 7
        %v414 = vsub.s32 %v411, %v413
        %v415 = vrot.slane %v407, %v414
        %v417 = vunpack.c.l.s4 1934713408
        %v418 = vunpack.c.0.s8 %v417
        %v419 = vlaneseq
        %v420 = vshrl.u32 %v419, 7
        %v421 = vsub.s32 %v418, %v420
        %v422 = vrot.slane %v408, %v421
        %v423 = vcombine.high %v399, 0.0
        %v424 = vcombine.high %v406, 0.0
        %v425 = vcombine.high %v415, 0.0
        %v426 = vcombine.high %v422, 0.0
        %427 = vxpose.xlu0.b32.start [1/16] %v331, 128
        %428 = vxpose.xlu0.b32.cont [2/16] 0.0, 128
        %429 = vxpose.xlu0.b32.cont [3/16] 0.0, 128
        %430 = vxpose.xlu0.b32.cont [4/16] 0.0, 128
        %431 = vxpose.xlu0.b32.cont [5/16] 0.0, 128
        %432 = vxpose.xlu0.b32.cont [6/16] 0.0, 128
        %433 = vxpose.xlu0.b32.cont [7/16] 0.0, 128
        %434 = vxpose.xlu0.b32.cont [8/16] 0.0, 128
        %435 = vxpose.xlu0.b32.cont [9/16] 0.0, 128
        %436 = vxpose.xlu0.b32.cont [10/16] 0.0, 128
        %437 = vxpose.xlu0.b32.cont [11/16] 0.0, 128
        %438 = vxpose.xlu0.b32.cont [12/16] 0.0, 128
        %439 = vxpose.xlu0.b32.cont [13/16] 0.0, 128
        %440 = vxpose.xlu0.b32.cont [14/16] 0.0, 128
        %441 = vxpose.xlu0.b32.cont [15/16] 0.0, 128
        %442 = vxpose.xlu0.b32.end [16/16] 0.0, 128
        %v443 = vpop.trf.xlu0
        %v444 = vpop.trf.xlu0
        %v445 = vpop.trf.xlu0
        %v446 = vpop.trf.xlu0
        %v447 = vpop.trf.xlu0
        %v448 = vpop.trf.xlu0
        %v449 = vpop.trf.xlu0
        %v450 = vpop.trf.xlu0
        %v451 = vpop.trf.xlu0
        %v452 = vpop.trf.xlu0
        %v453 = vpop.trf.xlu0
        %v454 = vpop.trf.xlu0
        %v455 = vpop.trf.xlu0
        %v456 = vpop.trf.xlu0
        %v457 = vpop.trf.xlu0
        %v458 = vpop.trf.xlu0
        %459 = vxpose.xlu0.b32.start [1/16] %v355, 128
        %460 = vxpose.xlu0.b32.cont [2/16] 0.0, 128
        %461 = vxpose.xlu0.b32.cont [3/16] 0.0, 128
        %462 = vxpose.xlu0.b32.cont [4/16] 0.0, 128
        %463 = vxpose.xlu0.b32.cont [5/16] 0.0, 128
        %464 = vxpose.xlu0.b32.cont [6/16] 0.0, 128
        %465 = vxpose.xlu0.b32.cont [7/16] 0.0, 128
        %466 = vxpose.xlu0.b32.cont [8/16] 0.0, 128
        %467 = vxpose.xlu0.b32.cont [9/16] 0.0, 128
        %468 = vxpose.xlu0.b32.cont [10/16] 0.0, 128
        %469 = vxpose.xlu0.b32.cont [11/16] 0.0, 128
        %470 = vxpose.xlu0.b32.cont [12/16] 0.0, 128
        %471 = vxpose.xlu0.b32.cont [13/16] 0.0, 128
        %472 = vxpose.xlu0.b32.cont [14/16] 0.0, 128
        %473 = vxpose.xlu0.b32.cont [15/16] 0.0, 128
        %474 = vxpose.xlu0.b32.end [16/16] 0.0, 128
        %v475 = vpop.trf.xlu0
        %v476 = vpop.trf.xlu0
        %v477 = vpop.trf.xlu0
        %v478 = vpop.trf.xlu0
        %v479 = vpop.trf.xlu0
        %v480 = vpop.trf.xlu0
        %v481 = vpop.trf.xlu0
        %v482 = vpop.trf.xlu0
        %v483 = vpop.trf.xlu0
        %v484 = vpop.trf.xlu0
        %v485 = vpop.trf.xlu0
        %v486 = vpop.trf.xlu0
        %v487 = vpop.trf.xlu0
        %v488 = vpop.trf.xlu0
        %v489 = vpop.trf.xlu0
        %v490 = vpop.trf.xlu0
        %491 = vxpose.xlu0.b32.start [1/16] %v338, 128
        %492 = vxpose.xlu0.b32.cont [2/16] 0.0, 128
        %493 = vxpose.xlu0.b32.cont [3/16] 0.0, 128
        %494 = vxpose.xlu0.b32.cont [4/16] 0.0, 128
        %495 = vxpose.xlu0.b32.cont [5/16] 0.0, 128
        %496 = vxpose.xlu0.b32.cont [6/16] 0.0, 128
        %497 = vxpose.xlu0.b32.cont [7/16] 0.0, 128
        %498 = vxpose.xlu0.b32.cont [8/16] 0.0, 128
        %499 = vxpose.xlu0.b32.cont [9/16] 0.0, 128
        %500 = vxpose.xlu0.b32.cont [10/16] 0.0, 128
        %501 = vxpose.xlu0.b32.cont [11/16] 0.0, 128
        %502 = vxpose.xlu0.b32.cont [12/16] 0.0, 128
        %503 = vxpose.xlu0.b32.cont [13/16] 0.0, 128
        %504 = vxpose.xlu0.b32.cont [14/16] 0.0, 128
        %505 = vxpose.xlu0.b32.cont [15/16] 0.0, 128
        %506 = vxpose.xlu0.b32.end [16/16] 0.0, 128
        %v507 = vpop.trf.xlu0
        %v508 = vpop.trf.xlu0
        %v509 = vpop.trf.xlu0
        %v510 = vpop.trf.xlu0
        %v511 = vpop.trf.xlu0
        %v512 = vpop.trf.xlu0
        %v513 = vpop.trf.xlu0
        %v514 = vpop.trf.xlu0
        %v515 = vpop.trf.xlu0
        %v516 = vpop.trf.xlu0
        %v517 = vpop.trf.xlu0
        %v518 = vpop.trf.xlu0
        %v519 = vpop.trf.xlu0
        %v520 = vpop.trf.xlu0
        %v521 = vpop.trf.xlu0
        %v522 = vpop.trf.xlu0
        %523 = vxpose.xlu0.b32.start [1/16] %v356, 128
        %524 = vxpose.xlu0.b32.cont [2/16] 0.0, 128
        %525 = vxpose.xlu0.b32.cont [3/16] 0.0, 128
        %526 = vxpose.xlu0.b32.cont [4/16] 0.0, 128
        %527 = vxpose.xlu0.b32.cont [5/16] 0.0, 128
        %528 = vxpose.xlu0.b32.cont [6/16] 0.0, 128
        %529 = vxpose.xlu0.b32.cont [7/16] 0.0, 128
        %530 = vxpose.xlu0.b32.cont [8/16] 0.0, 128
        %531 = vxpose.xlu0.b32.cont [9/16] 0.0, 128
        %532 = vxpose.xlu0.b32.cont [10/16] 0.0, 128
        %533 = vxpose.xlu0.b32.cont [11/16] 0.0, 128
        %534 = vxpose.xlu0.b32.cont [12/16] 0.0, 128
        %535 = vxpose.xlu0.b32.cont [13/16] 0.0, 128
        %536 = vxpose.xlu0.b32.cont [14/16] 0.0, 128
        %537 = vxpose.xlu0.b32.cont [15/16] 0.0, 128
        %538 = vxpose.xlu0.b32.end [16/16] 0.0, 128
        %v539 = vpop.trf.xlu0
        %v540 = vpop.trf.xlu0
        %v541 = vpop.trf.xlu0
        %v542 = vpop.trf.xlu0
        %v543 = vpop.trf.xlu0
        %v544 = vpop.trf.xlu0
        %v545 = vpop.trf.xlu0
        %v546 = vpop.trf.xlu0
        %v547 = vpop.trf.xlu0
        %v548 = vpop.trf.xlu0
        %v549 = vpop.trf.xlu0
        %v550 = vpop.trf.xlu0
        %v551 = vpop.trf.xlu0
        %v552 = vpop.trf.xlu0
        %v553 = vpop.trf.xlu0
        %v554 = vpop.trf.xlu0
        %555 = vxpose.xlu0.b32.start [1/16] %v347, 128
        %556 = vxpose.xlu0.b32.cont [2/16] 0.0, 128
        %557 = vxpose.xlu0.b32.cont [3/16] 0.0, 128
        %558 = vxpose.xlu0.b32.cont [4/16] 0.0, 128
        %559 = vxpose.xlu0.b32.cont [5/16] 0.0, 128
        %560 = vxpose.xlu0.b32.cont [6/16] 0.0, 128
        %561 = vxpose.xlu0.b32.cont [7/16] 0.0, 128
        %562 = vxpose.xlu0.b32.cont [8/16] 0.0, 128
        %563 = vxpose.xlu0.b32.cont [9/16] 0.0, 128
        %564 = vxpose.xlu0.b32.cont [10/16] 0.0, 128
        %565 = vxpose.xlu0.b32.cont [11/16] 0.0, 128
        %566 = vxpose.xlu0.b32.cont [12/16] 0.0, 128
        %567 = vxpose.xlu0.b32.cont [13/16] 0.0, 128
        %568 = vxpose.xlu0.b32.cont [14/16] 0.0, 128
        %569 = vxpose.xlu0.b32.cont [15/16] 0.0, 128
        %570 = vxpose.xlu0.b32.end [16/16] 0.0, 128
        %v571 = vpop.trf.xlu0
        %v572 = vpop.trf.xlu0
        %v573 = vpop.trf.xlu0
        %v574 = vpop.trf.xlu0
        %v575 = vpop.trf.xlu0
        %v576 = vpop.trf.xlu0
        %v577 = vpop.trf.xlu0
        %v578 = vpop.trf.xlu0
        %v579 = vpop.trf.xlu0
        %v580 = vpop.trf.xlu0
        %v581 = vpop.trf.xlu0
        %v582 = vpop.trf.xlu0
        %v583 = vpop.trf.xlu0
        %v584 = vpop.trf.xlu0
        %v585 = vpop.trf.xlu0
        %v586 = vpop.trf.xlu0
        %587 = vxpose.xlu0.b32.start [1/16] %v357, 128
        %588 = vxpose.xlu0.b32.cont [2/16] 0.0, 128
        %589 = vxpose.xlu0.b32.cont [3/16] 0.0, 128
        %590 = vxpose.xlu0.b32.cont [4/16] 0.0, 128
        %591 = vxpose.xlu0.b32.cont [5/16] 0.0, 128
        %592 = vxpose.xlu0.b32.cont [6/16] 0.0, 128
        %593 = vxpose.xlu0.b32.cont [7/16] 0.0, 128
        %594 = vxpose.xlu0.b32.cont [8/16] 0.0, 128
        %595 = vxpose.xlu0.b32.cont [9/16] 0.0, 128
        %596 = vxpose.xlu0.b32.cont [10/16] 0.0, 128
        %597 = vxpose.xlu0.b32.cont [11/16] 0.0, 128
        %598 = vxpose.xlu0.b32.cont [12/16] 0.0, 128
        %599 = vxpose.xlu0.b32.cont [13/16] 0.0, 128
        %600 = vxpose.xlu0.b32.cont [14/16] 0.0, 128
        %601 = vxpose.xlu0.b32.cont [15/16] 0.0, 128
        %602 = vxpose.xlu0.b32.end [16/16] 0.0, 128
        %v603 = vpop.trf.xlu0
        %v604 = vpop.trf.xlu0
        %v605 = vpop.trf.xlu0
        %v606 = vpop.trf.xlu0
        %v607 = vpop.trf.xlu0
        %v608 = vpop.trf.xlu0
        %v609 = vpop.trf.xlu0
        %v610 = vpop.trf.xlu0
        %v611 = vpop.trf.xlu0
        %v612 = vpop.trf.xlu0
        %v613 = vpop.trf.xlu0
        %v614 = vpop.trf.xlu0
        %v615 = vpop.trf.xlu0
        %v616 = vpop.trf.xlu0
        %v617 = vpop.trf.xlu0
        %v618 = vpop.trf.xlu0
        %619 = vxpose.xlu0.b32.start [1/16] %v354, 128
        %620 = vxpose.xlu0.b32.cont [2/16] 0.0, 128
        %621 = vxpose.xlu0.b32.cont [3/16] 0.0, 128
        %622 = vxpose.xlu0.b32.cont [4/16] 0.0, 128
        %623 = vxpose.xlu0.b32.cont [5/16] 0.0, 128
        %624 = vxpose.xlu0.b32.cont [6/16] 0.0, 128
        %625 = vxpose.xlu0.b32.cont [7/16] 0.0, 128
        %626 = vxpose.xlu0.b32.cont [8/16] 0.0, 128
        %627 = vxpose.xlu0.b32.cont [9/16] 0.0, 128
        %628 = vxpose.xlu0.b32.cont [10/16] 0.0, 128
        %629 = vxpose.xlu0.b32.cont [11/16] 0.0, 128
        %630 = vxpose.xlu0.b32.cont [12/16] 0.0, 128
        %631 = vxpose.xlu0.b32.cont [13/16] 0.0, 128
        %632 = vxpose.xlu0.b32.cont [14/16] 0.0, 128
        %633 = vxpose.xlu0.b32.cont [15/16] 0.0, 128
        %634 = vxpose.xlu0.b32.end [16/16] 0.0, 128
        %v635 = vpop.trf.xlu0
        %v636 = vpop.trf.xlu0
        %v637 = vpop.trf.xlu0
        %v638 = vpop.trf.xlu0
        %v639 = vpop.trf.xlu0
        %v640 = vpop.trf.xlu0
        %v641 = vpop.trf.xlu0
        %v642 = vpop.trf.xlu0
        %v643 = vpop.trf.xlu0
        %v644 = vpop.trf.xlu0
        %v645 = vpop.trf.xlu0
        %v646 = vpop.trf.xlu0
        %v647 = vpop.trf.xlu0
        %v648 = vpop.trf.xlu0
        %v649 = vpop.trf.xlu0
        %v650 = vpop.trf.xlu0
        %651 = vxpose.xlu0.b32.start [1/16] %v358, 128
        %652 = vxpose.xlu0.b32.cont [2/16] 0.0, 128
        %653 = vxpose.xlu0.b32.cont [3/16] 0.0, 128
        %654 = vxpose.xlu0.b32.cont [4/16] 0.0, 128
        %655 = vxpose.xlu0.b32.cont [5/16] 0.0, 128
        %656 = vxpose.xlu0.b32.cont [6/16] 0.0, 128
        %657 = vxpose.xlu0.b32.cont [7/16] 0.0, 128
        %658 = vxpose.xlu0.b32.cont [8/16] 0.0, 128
        %659 = vxpose.xlu0.b32.cont [9/16] 0.0, 128
        %660 = vxpose.xlu0.b32.cont [10/16] 0.0, 128
        %661 = vxpose.xlu0.b32.cont [11/16] 0.0, 128
        %662 = vxpose.xlu0.b32.cont [12/16] 0.0, 128
        %663 = vxpose.xlu0.b32.cont [13/16] 0.0, 128
        %664 = vxpose.xlu0.b32.cont [14/16] 0.0, 128
        %665 = vxpose.xlu0.b32.cont [15/16] 0.0, 128
        %666 = vxpose.xlu0.b32.end [16/16] 0.0, 128
        %v667 = vpop.trf.xlu0
        %v668 = vpop.trf.xlu0
        %v669 = vpop.trf.xlu0
        %v670 = vpop.trf.xlu0
        %v671 = vpop.trf.xlu0
        %v672 = vpop.trf.xlu0
        %v673 = vpop.trf.xlu0
        %v674 = vpop.trf.xlu0
        %v675 = vpop.trf.xlu0
        %v676 = vpop.trf.xlu0
        %v677 = vpop.trf.xlu0
        %v678 = vpop.trf.xlu0
        %v679 = vpop.trf.xlu0
        %v680 = vpop.trf.xlu0
        %v681 = vpop.trf.xlu0
        %v682 = vpop.trf.xlu0
        %683 = vxpose.xlu0.b32.start [1/16] %v399, 128
        %684 = vxpose.xlu0.b32.cont [2/16] 0.0, 128
        %685 = vxpose.xlu0.b32.cont [3/16] 0.0, 128
        %686 = vxpose.xlu0.b32.cont [4/16] 0.0, 128
        %687 = vxpose.xlu0.b32.cont [5/16] 0.0, 128
        %688 = vxpose.xlu0.b32.cont [6/16] 0.0, 128
        %689 = vxpose.xlu0.b32.cont [7/16] 0.0, 128
        %690 = vxpose.xlu0.b32.cont [8/16] 0.0, 128
        %691 = vxpose.xlu0.b32.cont [9/16] 0.0, 128
        %692 = vxpose.xlu0.b32.cont [10/16] 0.0, 128
        %693 = vxpose.xlu0.b32.cont [11/16] 0.0, 128
        %694 = vxpose.xlu0.b32.cont [12/16] 0.0, 128
        %695 = vxpose.xlu0.b32.cont [13/16] 0.0, 128
        %696 = vxpose.xlu0.b32.cont [14/16] 0.0, 128
        %697 = vxpose.xlu0.b32.cont [15/16] 0.0, 128
        %698 = vxpose.xlu0.b32.end [16/16] 0.0, 128
        %v699 = vpop.trf.xlu0
        %v700 = vpop.trf.xlu0
        %v701 = vpop.trf.xlu0
        %v702 = vpop.trf.xlu0
        %v703 = vpop.trf.xlu0
        %v704 = vpop.trf.xlu0
        %v705 = vpop.trf.xlu0
        %v706 = vpop.trf.xlu0
        %v707 = vpop.trf.xlu0
        %v708 = vpop.trf.xlu0
        %v709 = vpop.trf.xlu0
        %v710 = vpop.trf.xlu0
        %v711 = vpop.trf.xlu0
        %v712 = vpop.trf.xlu0
        %v713 = vpop.trf.xlu0
        %v714 = vpop.trf.xlu0
        %715 = vxpose.xlu0.b32.start [1/16] %v423, 128
        %716 = vxpose.xlu0.b32.cont [2/16] 0.0, 128
        %717 = vxpose.xlu0.b32.cont [3/16] 0.0, 128
        %718 = vxpose.xlu0.b32.cont [4/16] 0.0, 128
        %719 = vxpose.xlu0.b32.cont [5/16] 0.0, 128
        %720 = vxpose.xlu0.b32.cont [6/16] 0.0, 128
        %721 = vxpose.xlu0.b32.cont [7/16] 0.0, 128
        %722 = vxpose.xlu0.b32.cont [8/16] 0.0, 128
        %723 = vxpose.xlu0.b32.cont [9/16] 0.0, 128
        %724 = vxpose.xlu0.b32.cont [10/16] 0.0, 128
        %725 = vxpose.xlu0.b32.cont [11/16] 0.0, 128
        %726 = vxpose.xlu0.b32.cont [12/16] 0.0, 128
        %727 = vxpose.xlu0.b32.cont [13/16] 0.0, 128
        %728 = vxpose.xlu0.b32.cont [14/16] 0.0, 128
        %729 = vxpose.xlu0.b32.cont [15/16] 0.0, 128
        %730 = vxpose.xlu0.b32.end [16/16] 0.0, 128
        %v731 = vpop.trf.xlu0
        %v732 = vpop.trf.xlu0
        %v733 = vpop.trf.xlu0
        %v734 = vpop.trf.xlu0
        %v735 = vpop.trf.xlu0
        %v736 = vpop.trf.xlu0
        %v737 = vpop.trf.xlu0
        %v738 = vpop.trf.xlu0
        %v739 = vpop.trf.xlu0
        %v740 = vpop.trf.xlu0
        %v741 = vpop.trf.xlu0
        %v742 = vpop.trf.xlu0
        %v743 = vpop.trf.xlu0
        %v744 = vpop.trf.xlu0
        %v745 = vpop.trf.xlu0
        %v746 = vpop.trf.xlu0
        %747 = vxpose.xlu0.b32.start [1/16] %v406, 128
        %748 = vxpose.xlu0.b32.cont [2/16] 0.0, 128
        %749 = vxpose.xlu0.b32.cont [3/16] 0.0, 128
        %750 = vxpose.xlu0.b32.cont [4/16] 0.0, 128
        %751 = vxpose.xlu0.b32.cont [5/16] 0.0, 128
        %752 = vxpose.xlu0.b32.cont [6/16] 0.0, 128
        %753 = vxpose.xlu0.b32.cont [7/16] 0.0, 128
        %754 = vxpose.xlu0.b32.cont [8/16] 0.0, 128
        %755 = vxpose.xlu0.b32.cont [9/16] 0.0, 128
        %756 = vxpose.xlu0.b32.cont [10/16] 0.0, 128
        %757 = vxpose.xlu0.b32.cont [11/16] 0.0, 128
        %758 = vxpose.xlu0.b32.cont [12/16] 0.0, 128
        %759 = vxpose.xlu0.b32.cont [13/16] 0.0, 128
        %760 = vxpose.xlu0.b32.cont [14/16] 0.0, 128
        %761 = vxpose.xlu0.b32.cont [15/16] 0.0, 128
        %762 = vxpose.xlu0.b32.end [16/16] 0.0, 128
        %v763 = vpop.trf.xlu0
        %v764 = vpop.trf.xlu0
        %v765 = vpop.trf.xlu0
        %v766 = vpop.trf.xlu0
        %v767 = vpop.trf.xlu0
        %v768 = vpop.trf.xlu0
        %v769 = vpop.trf.xlu0
        %v770 = vpop.trf.xlu0
        %v771 = vpop.trf.xlu0
        %v772 = vpop.trf.xlu0
        %v773 = vpop.trf.xlu0
        %v774 = vpop.trf.xlu0
        %v775 = vpop.trf.xlu0
        %v776 = vpop.trf.xlu0
        %v777 = vpop.trf.xlu0
        %v778 = vpop.trf.xlu0
        %779 = vxpose.xlu0.b32.start [1/16] %v424, 128
        %780 = vxpose.xlu0.b32.cont [2/16] 0.0, 128
        %781 = vxpose.xlu0.b32.cont [3/16] 0.0, 128
        %782 = vxpose.xlu0.b32.cont [4/16] 0.0, 128
        %783 = vxpose.xlu0.b32.cont [5/16] 0.0, 128
        %784 = vxpose.xlu0.b32.cont [6/16] 0.0, 128
        %785 = vxpose.xlu0.b32.cont [7/16] 0.0, 128
        %786 = vxpose.xlu0.b32.cont [8/16] 0.0, 128
        %787 = vxpose.xlu0.b32.cont [9/16] 0.0, 128
        %788 = vxpose.xlu0.b32.cont [10/16] 0.0, 128
        %789 = vxpose.xlu0.b32.cont [11/16] 0.0, 128
        %790 = vxpose.xlu0.b32.cont [12/16] 0.0, 128
        %791 = vxpose.xlu0.b32.cont [13/16] 0.0, 128
        %792 = vxpose.xlu0.b32.cont [14/16] 0.0, 128
        %793 = vxpose.xlu0.b32.cont [15/16] 0.0, 128
        %794 = vxpose.xlu0.b32.end [16/16] 0.0, 128
        %v795 = vpop.trf.xlu0
        %v796 = vpop.trf.xlu0
        %v797 = vpop.trf.xlu0
        %v798 = vpop.trf.xlu0
        %v799 = vpop.trf.xlu0
        %v800 = vpop.trf.xlu0
        %v801 = vpop.trf.xlu0
        %v802 = vpop.trf.xlu0
        %v803 = vpop.trf.xlu0
        %v804 = vpop.trf.xlu0
        %v805 = vpop.trf.xlu0
        %v806 = vpop.trf.xlu0
        %v807 = vpop.trf.xlu0
        %v808 = vpop.trf.xlu0
        %v809 = vpop.trf.xlu0
        %v810 = vpop.trf.xlu0
        %811 = vxpose.xlu0.b32.start [1/16] %v415, 128
        %812 = vxpose.xlu0.b32.cont [2/16] 0.0, 128
        %813 = vxpose.xlu0.b32.cont [3/16] 0.0, 128
        %814 = vxpose.xlu0.b32.cont [4/16] 0.0, 128
        %815 = vxpose.xlu0.b32.cont [5/16] 0.0, 128
        %816 = vxpose.xlu0.b32.cont [6/16] 0.0, 128
        %817 = vxpose.xlu0.b32.cont [7/16] 0.0, 128
        %818 = vxpose.xlu0.b32.cont [8/16] 0.0, 128
        %819 = vxpose.xlu0.b32.cont [9/16] 0.0, 128
        %820 = vxpose.xlu0.b32.cont [10/16] 0.0, 128
        %821 = vxpose.xlu0.b32.cont [11/16] 0.0, 128
        %822 = vxpose.xlu0.b32.cont [12/16] 0.0, 128
        %823 = vxpose.xlu0.b32.cont [13/16] 0.0, 128
        %824 = vxpose.xlu0.b32.cont [14/16] 0.0, 128
        %825 = vxpose.xlu0.b32.cont [15/16] 0.0, 128
        %826 = vxpose.xlu0.b32.end [16/16] 0.0, 128
        %v827 = vpop.trf.xlu0
        %v828 = vpop.trf.xlu0
        %v829 = vpop.trf.xlu0
        %v830 = vpop.trf.xlu0
        %v831 = vpop.trf.xlu0
        %v832 = vpop.trf.xlu0
        %v833 = vpop.trf.xlu0
        %v834 = vpop.trf.xlu0
        %v835 = vpop.trf.xlu0
        %v836 = vpop.trf.xlu0
        %v837 = vpop.trf.xlu0
        %v838 = vpop.trf.xlu0
        %v839 = vpop.trf.xlu0
        %v840 = vpop.trf.xlu0
        %v841 = vpop.trf.xlu0
        %v842 = vpop.trf.xlu0
        %843 = vxpose.xlu0.b32.start [1/16] %v425, 128
        %844 = vxpose.xlu0.b32.cont [2/16] 0.0, 128
        %845 = vxpose.xlu0.b32.cont [3/16] 0.0, 128
        %846 = vxpose.xlu0.b32.cont [4/16] 0.0, 128
        %847 = vxpose.xlu0.b32.cont [5/16] 0.0, 128
        %848 = vxpose.xlu0.b32.cont [6/16] 0.0, 128
        %849 = vxpose.xlu0.b32.cont [7/16] 0.0, 128
        %850 = vxpose.xlu0.b32.cont [8/16] 0.0, 128
        %851 = vxpose.xlu0.b32.cont [9/16] 0.0, 128
        %852 = vxpose.xlu0.b32.cont [10/16] 0.0, 128
        %853 = vxpose.xlu0.b32.cont [11/16] 0.0, 128
        %854 = vxpose.xlu0.b32.cont [12/16] 0.0, 128
        %855 = vxpose.xlu0.b32.cont [13/16] 0.0, 128
        %856 = vxpose.xlu0.b32.cont [14/16] 0.0, 128
        %857 = vxpose.xlu0.b32.cont [15/16] 0.0, 128
        %858 = vxpose.xlu0.b32.end [16/16] 0.0, 128
        %v859 = vpop.trf.xlu0
        %v860 = vpop.trf.xlu0
        %v861 = vpop.trf.xlu0
        %v862 = vpop.trf.xlu0
        %v863 = vpop.trf.xlu0
        %v864 = vpop.trf.xlu0
        %v865 = vpop.trf.xlu0
        %v866 = vpop.trf.xlu0
        %v867 = vpop.trf.xlu0
        %v868 = vpop.trf.xlu0
        %v869 = vpop.trf.xlu0
        %v870 = vpop.trf.xlu0
        %v871 = vpop.trf.xlu0
        %v872 = vpop.trf.xlu0
        %v873 = vpop.trf.xlu0
        %v874 = vpop.trf.xlu0
        %875 = vxpose.xlu0.b32.start [1/16] %v422, 128
        %876 = vxpose.xlu0.b32.cont [2/16] 0.0, 128
        %877 = vxpose.xlu0.b32.cont [3/16] 0.0, 128
        %878 = vxpose.xlu0.b32.cont [4/16] 0.0, 128
        %879 = vxpose.xlu0.b32.cont [5/16] 0.0, 128
        %880 = vxpose.xlu0.b32.cont [6/16] 0.0, 128
        %881 = vxpose.xlu0.b32.cont [7/16] 0.0, 128
        %882 = vxpose.xlu0.b32.cont [8/16] 0.0, 128
        %883 = vxpose.xlu0.b32.cont [9/16] 0.0, 128
        %884 = vxpose.xlu0.b32.cont [10/16] 0.0, 128
        %885 = vxpose.xlu0.b32.cont [11/16] 0.0, 128
        %886 = vxpose.xlu0.b32.cont [12/16] 0.0, 128
        %887 = vxpose.xlu0.b32.cont [13/16] 0.0, 128
        %888 = vxpose.xlu0.b32.cont [14/16] 0.0, 128
        %889 = vxpose.xlu0.b32.cont [15/16] 0.0, 128
        %890 = vxpose.xlu0.b32.end [16/16] 0.0, 128
        %v891 = vpop.trf.xlu0
        %v892 = vpop.trf.xlu0
        %v893 = vpop.trf.xlu0
        %v894 = vpop.trf.xlu0
        %v895 = vpop.trf.xlu0
        %v896 = vpop.trf.xlu0
        %v897 = vpop.trf.xlu0
        %v898 = vpop.trf.xlu0
        %v899 = vpop.trf.xlu0
        %v900 = vpop.trf.xlu0
        %v901 = vpop.trf.xlu0
        %v902 = vpop.trf.xlu0
        %v903 = vpop.trf.xlu0
        %v904 = vpop.trf.xlu0
        %v905 = vpop.trf.xlu0
        %v906 = vpop.trf.xlu0
        %907 = vxpose.xlu0.b32.start [1/16] %v426, 128
        %908 = vxpose.xlu0.b32.cont [2/16] 0.0, 128
        %909 = vxpose.xlu0.b32.cont [3/16] 0.0, 128
        %910 = vxpose.xlu0.b32.cont [4/16] 0.0, 128
        %911 = vxpose.xlu0.b32.cont [5/16] 0.0, 128
        %912 = vxpose.xlu0.b32.cont [6/16] 0.0, 128
        %913 = vxpose.xlu0.b32.cont [7/16] 0.0, 128
        %914 = vxpose.xlu0.b32.cont [8/16] 0.0, 128
        %915 = vxpose.xlu0.b32.cont [9/16] 0.0, 128
        %916 = vxpose.xlu0.b32.cont [10/16] 0.0, 128
        %917 = vxpose.xlu0.b32.cont [11/16] 0.0, 128
        %918 = vxpose.xlu0.b32.cont [12/16] 0.0, 128
        %919 = vxpose.xlu0.b32.cont [13/16] 0.0, 128
        %920 = vxpose.xlu0.b32.cont [14/16] 0.0, 128
        %921 = vxpose.xlu0.b32.cont [15/16] 0.0, 128
        %922 = vxpose.xlu0.b32.end [16/16] 0.0, 128
        %v923 = vpop.trf.xlu0
        %v924 = vpop.trf.xlu0
        %v925 = vpop.trf.xlu0
        %v926 = vpop.trf.xlu0
        %v927 = vpop.trf.xlu0
        %v928 = vpop.trf.xlu0
        %v929 = vpop.trf.xlu0
        %v930 = vpop.trf.xlu0
        %v931 = vpop.trf.xlu0
        %v932 = vpop.trf.xlu0
        %v933 = vpop.trf.xlu0
        %v934 = vpop.trf.xlu0
        %v935 = vpop.trf.xlu0
        %v936 = vpop.trf.xlu0
        %v937 = vpop.trf.xlu0
        %v938 = vpop.trf.xlu0
        %v939 = vcombine.low %v443, %v507
        %v940 = vcombine.high %v443, %v507
        %v942 = vunpack.c.l.s4 1983009808
        %v943 = vunpack.c.0.s8 %v942
        %v944 = vlaneseq
        %v945 = vshrl.u32 %v944, 7
        %v946 = vsub.s32 %v943, %v945
        %v947 = vrot.slane %v939, %v946
        %v949 = vunpack.c.l.s4 1983009808
        %v950 = vunpack.c.0.s8 %v949
        %v951 = vlaneseq
        %v952 = vshrl.u32 %v951, 7
        %v953 = vsub.s32 %v950, %v952
        %v954 = vrot.slane %v940, %v953
        %v955 = vcombine.low %v475, %v539
        %v956 = vcombine.high %v475, %v539
        %v958 = vunpack.c.l.s4 1983009808
        %v959 = vunpack.c.0.s8 %v958
        %v960 = vlaneseq
        %v961 = vshrl.u32 %v960, 7
        %v962 = vsub.s32 %v959, %v961
        %v963 = vrot.slane %v955, %v962
        %v965 = vunpack.c.l.s4 1983009808
        %v966 = vunpack.c.0.s8 %v965
        %v967 = vlaneseq
        %v968 = vshrl.u32 %v967, 7
        %v969 = vsub.s32 %v966, %v968
        %v970 = vrot.slane %v956, %v969
        %v971 = vcombine.low %v571, %v635
        %v972 = vcombine.high %v571, %v635
        %v974 = vunpack.c.l.s4 1983009808
        %v975 = vunpack.c.0.s8 %v974
        %v976 = vlaneseq
        %v977 = vshrl.u32 %v976, 7
        %v978 = vsub.s32 %v975, %v977
        %v979 = vrot.slane %v971, %v978
        %v981 = vunpack.c.l.s4 1983009808
        %v982 = vunpack.c.0.s8 %v981
        %v983 = vlaneseq
        %v984 = vshrl.u32 %v983, 7
        %v985 = vsub.s32 %v982, %v984
        %v986 = vrot.slane %v972, %v985
        %v987 = vcombine.low %v603, %v667
        %v988 = vcombine.high %v603, %v667
        %v990 = vunpack.c.l.s4 1983009808
        %v991 = vunpack.c.0.s8 %v990
        %v992 = vlaneseq
        %v993 = vshrl.u32 %v992, 7
        %v994 = vsub.s32 %v991, %v993
        %v995 = vrot.slane %v987, %v994
        %v997 = vunpack.c.l.s4 1983009808
        %v998 = vunpack.c.0.s8 %v997
        %v999 = vlaneseq
        %v1000 = vshrl.u32 %v999, 7
        %v1001 = vsub.s32 %v998, %v1000
        %v1002 = vrot.slane %v988, %v1001
        %v1003 = vcombine.low %v947, %v963
        %v1004 = vcombine.high %v947, %v963
        %v1006 = vunpack.c.l.s4 1934713408
        %v1007 = vunpack.c.0.s8 %v1006
        %v1008 = vlaneseq
        %v1009 = vshrl.u32 %v1008, 7
        %v1010 = vsub.s32 %v1007, %v1009
        %v1011 = vrot.slane %v1003, %v1010
        %v1013 = vunpack.c.l.s4 1934713408
        %v1014 = vunpack.c.0.s8 %v1013
        %v1015 = vlaneseq
        %v1016 = vshrl.u32 %v1015, 7
        %v1017 = vsub.s32 %v1014, %v1016
        %v1018 = vrot.slane %v1004, %v1017
        %v1019 = vcombine.low %v954, %v970
        %v1020 = vcombine.high %v954, %v970
        %v1022 = vunpack.c.l.s4 1934713408
        %v1023 = vunpack.c.0.s8 %v1022
        %v1024 = vlaneseq
        %v1025 = vshrl.u32 %v1024, 7
        %v1026 = vsub.s32 %v1023, %v1025
        %v1027 = vrot.slane %v1019, %v1026
        %v1029 = vunpack.c.l.s4 1934713408
        %v1030 = vunpack.c.0.s8 %v1029
        %v1031 = vlaneseq
        %v1032 = vshrl.u32 %v1031, 7
        %v1033 = vsub.s32 %v1030, %v1032
        %v1034 = vrot.slane %v1020, %v1033
        %v1035 = vcombine.low %v979, %v995
        %v1036 = vcombine.high %v979, %v995
        %v1038 = vunpack.c.l.s4 1934713408
        %v1039 = vunpack.c.0.s8 %v1038
        %v1040 = vlaneseq
        %v1041 = vshrl.u32 %v1040, 7
        %v1042 = vsub.s32 %v1039, %v1041
        %v1043 = vrot.slane %v1035, %v1042
        %v1045 = vunpack.c.l.s4 1934713408
        %v1046 = vunpack.c.0.s8 %v1045
        %v1047 = vlaneseq
        %v1048 = vshrl.u32 %v1047, 7
        %v1049 = vsub.s32 %v1046, %v1048
        %v1050 = vrot.slane %v1036, %v1049
        %v1051 = vcombine.low %v986, %v1002
        %v1052 = vcombine.high %v986, %v1002
        %v1054 = vunpack.c.l.s4 1934713408
        %v1055 = vunpack.c.0.s8 %v1054
        %v1056 = vlaneseq
        %v1057 = vshrl.u32 %v1056, 7
        %v1058 = vsub.s32 %v1055, %v1057
        %v1059 = vrot.slane %v1051, %v1058
        %v1061 = vunpack.c.l.s4 1934713408
        %v1062 = vunpack.c.0.s8 %v1061
        %v1063 = vlaneseq
        %v1064 = vshrl.u32 %v1063, 7
        %v1065 = vsub.s32 %v1062, %v1064
        %v1066 = vrot.slane %v1052, %v1065
        %v1067 = vcombine.low %v1011, %v1043
        %v1068 = vcombine.high %v1011, %v1043
        %v1069 = vcombine.low %v1018, %v1050
        %v1070 = vcombine.high %v1018, %v1050
        %v1071 = vcombine.low %v1027, %v1059
        %v1072 = vcombine.high %v1027, %v1059
        %v1073 = vcombine.low %v1034, %v1066
        %v1074 = vcombine.high %v1034, %v1066
        %v1075 = vcombine.low %v699, %v763
        %v1076 = vcombine.high %v699, %v763
        %v1078 = vunpack.c.l.s4 1983009808
        %v1079 = vunpack.c.0.s8 %v1078
        %v1080 = vlaneseq
        %v1081 = vshrl.u32 %v1080, 7
        %v1082 = vsub.s32 %v1079, %v1081
        %v1083 = vrot.slane %v1075, %v1082
        %v1085 = vunpack.c.l.s4 1983009808
        %v1086 = vunpack.c.0.s8 %v1085
        %v1087 = vlaneseq
        %v1088 = vshrl.u32 %v1087, 7
        %v1089 = vsub.s32 %v1086, %v1088
        %v1090 = vrot.slane %v1076, %v1089
        %v1091 = vcombine.low %v731, %v795
        %v1092 = vcombine.high %v731, %v795
        %v1094 = vunpack.c.l.s4 1983009808
        %v1095 = vunpack.c.0.s8 %v1094
        %v1096 = vlaneseq
        %v1097 = vshrl.u32 %v1096, 7
        %v1098 = vsub.s32 %v1095, %v1097
        %v1099 = vrot.slane %v1091, %v1098
        %v1101 = vunpack.c.l.s4 1983009808
        %v1102 = vunpack.c.0.s8 %v1101
        %v1103 = vlaneseq
        %v1104 = vshrl.u32 %v1103, 7
        %v1105 = vsub.s32 %v1102, %v1104
        %v1106 = vrot.slane %v1092, %v1105
        %v1107 = vcombine.low %v827, %v891
        %v1108 = vcombine.high %v827, %v891
        %v1110 = vunpack.c.l.s4 1983009808
        %v1111 = vunpack.c.0.s8 %v1110
        %v1112 = vlaneseq
        %v1113 = vshrl.u32 %v1112, 7
        %v1114 = vsub.s32 %v1111, %v1113
        %v1115 = vrot.slane %v1107, %v1114
        %v1117 = vunpack.c.l.s4 1983009808
        %v1118 = vunpack.c.0.s8 %v1117
        %v1119 = vlaneseq
        %v1120 = vshrl.u32 %v1119, 7
        %v1121 = vsub.s32 %v1118, %v1120
        %v1122 = vrot.slane %v1108, %v1121
        %v1123 = vcombine.low %v859, %v923
        %v1124 = vcombine.high %v859, %v923
        %v1126 = vunpack.c.l.s4 1983009808
        %v1127 = vunpack.c.0.s8 %v1126
        %v1128 = vlaneseq
        %v1129 = vshrl.u32 %v1128, 7
        %v1130 = vsub.s32 %v1127, %v1129
        %v1131 = vrot.slane %v1123, %v1130
        %v1133 = vunpack.c.l.s4 1983009808
        %v1134 = vunpack.c.0.s8 %v1133
        %v1135 = vlaneseq
        %v1136 = vshrl.u32 %v1135, 7
        %v1137 = vsub.s32 %v1134, %v1136
        %v1138 = vrot.slane %v1124, %v1137
        %v1139 = vcombine.low %v1083, %v1099
        %v1140 = vcombine.high %v1083, %v1099
        %v1142 = vunpack.c.l.s4 1934713408
        %v1143 = vunpack.c.0.s8 %v1142
        %v1144 = vlaneseq
        %v1145 = vshrl.u32 %v1144, 7
        %v1146 = vsub.s32 %v1143, %v1145
        %v1147 = vrot.slane %v1139, %v1146
        %v1149 = vunpack.c.l.s4 1934713408
        %v1150 = vunpack.c.0.s8 %v1149
        %v1151 = vlaneseq
        %v1152 = vshrl.u32 %v1151, 7
        %v1153 = vsub.s32 %v1150, %v1152
        %v1154 = vrot.slane %v1140, %v1153
        %v1155 = vcombine.low %v1090, %v1106
        %v1156 = vcombine.high %v1090, %v1106
        %v1158 = vunpack.c.l.s4 1934713408
        %v1159 = vunpack.c.0.s8 %v1158
        %v1160 = vlaneseq
        %v1161 = vshrl.u32 %v1160, 7
        %v1162 = vsub.s32 %v1159, %v1161
        %v1163 = vrot.slane %v1155, %v1162
        %v1165 = vunpack.c.l.s4 1934713408
        %v1166 = vunpack.c.0.s8 %v1165
        %v1167 = vlaneseq
        %v1168 = vshrl.u32 %v1167, 7
        %v1169 = vsub.s32 %v1166, %v1168
        %v1170 = vrot.slane %v1156, %v1169
        %v1171 = vcombine.low %v1115, %v1131
        %v1172 = vcombine.high %v1115, %v1131
        %v1174 = vunpack.c.l.s4 1934713408
        %v1175 = vunpack.c.0.s8 %v1174
        %v1176 = vlaneseq
        %v1177 = vshrl.u32 %v1176, 7
        %v1178 = vsub.s32 %v1175, %v1177
        %v1179 = vrot.slane %v1171, %v1178
        %v1181 = vunpack.c.l.s4 1934713408
        %v1182 = vunpack.c.0.s8 %v1181
        %v1183 = vlaneseq
        %v1184 = vshrl.u32 %v1183, 7
        %v1185 = vsub.s32 %v1182, %v1184
        %v1186 = vrot.slane %v1172, %v1185
        %v1187 = vcombine.low %v1122, %v1138
        %v1188 = vcombine.high %v1122, %v1138
        %v1190 = vunpack.c.l.s4 1934713408
        %v1191 = vunpack.c.0.s8 %v1190
        %v1192 = vlaneseq
        %v1193 = vshrl.u32 %v1192, 7
        %v1194 = vsub.s32 %v1191, %v1193
        %v1195 = vrot.slane %v1187, %v1194
        %v1197 = vunpack.c.l.s4 1934713408
        %v1198 = vunpack.c.0.s8 %v1197
        %v1199 = vlaneseq
        %v1200 = vshrl.u32 %v1199, 7
        %v1201 = vsub.s32 %v1198, %v1200
        %v1202 = vrot.slane %v1188, %v1201
        %v1203 = vcombine.low %v1147, %v1179
        %v1204 = vcombine.high %v1147, %v1179
        %v1205 = vcombine.low %v1154, %v1186
        %v1206 = vcombine.high %v1154, %v1186
        %v1207 = vcombine.low %v1163, %v1195
        %v1208 = vcombine.high %v1163, %v1195
        %v1209 = vcombine.low %v1170, %v1202
        %v1210 = vcombine.high %v1170, %v1202
        %v1211 = vcombine.low %v444, %v508
        %v1212 = vcombine.high %v444, %v508
        %v1214 = vunpack.c.l.s4 1983009808
        %v1215 = vunpack.c.0.s8 %v1214
        %v1216 = vlaneseq
        %v1217 = vshrl.u32 %v1216, 7
        %v1218 = vsub.s32 %v1215, %v1217
        %v1219 = vrot.slane %v1211, %v1218
        %v1221 = vunpack.c.l.s4 1983009808
        %v1222 = vunpack.c.0.s8 %v1221
        %v1223 = vlaneseq
        %v1224 = vshrl.u32 %v1223, 7
        %v1225 = vsub.s32 %v1222, %v1224
        %v1226 = vrot.slane %v1212, %v1225
        %v1227 = vcombine.low %v476, %v540
        %v1228 = vcombine.high %v476, %v540
        %v1230 = vunpack.c.l.s4 1983009808
        %v1231 = vunpack.c.0.s8 %v1230
        %v1232 = vlaneseq
        %v1233 = vshrl.u32 %v1232, 7
        %v1234 = vsub.s32 %v1231, %v1233
        %v1235 = vrot.slane %v1227, %v1234
        %v1237 = vunpack.c.l.s4 1983009808
        %v1238 = vunpack.c.0.s8 %v1237
        %v1239 = vlaneseq
        %v1240 = vshrl.u32 %v1239, 7
        %v1241 = vsub.s32 %v1238, %v1240
        %v1242 = vrot.slane %v1228, %v1241
        %v1243 = vcombine.low %v572, %v636
        %v1244 = vcombine.high %v572, %v636
        %v1246 = vunpack.c.l.s4 1983009808
        %v1247 = vunpack.c.0.s8 %v1246
        %v1248 = vlaneseq
        %v1249 = vshrl.u32 %v1248, 7
        %v1250 = vsub.s32 %v1247, %v1249
        %v1251 = vrot.slane %v1243, %v1250
        %v1253 = vunpack.c.l.s4 1983009808
        %v1254 = vunpack.c.0.s8 %v1253
        %v1255 = vlaneseq
        %v1256 = vshrl.u32 %v1255, 7
        %v1257 = vsub.s32 %v1254, %v1256
        %v1258 = vrot.slane %v1244, %v1257
        %v1259 = vcombine.low %v604, %v668
        %v1260 = vcombine.high %v604, %v668
        %v1262 = vunpack.c.l.s4 1983009808
        %v1263 = vunpack.c.0.s8 %v1262
        %v1264 = vlaneseq
        %v1265 = vshrl.u32 %v1264, 7
        %v1266 = vsub.s32 %v1263, %v1265
        %v1267 = vrot.slane %v1259, %v1266
        %v1269 = vunpack.c.l.s4 1983009808
        %v1270 = vunpack.c.0.s8 %v1269
        %v1271 = vlaneseq
        %v1272 = vshrl.u32 %v1271, 7
        %v1273 = vsub.s32 %v1270, %v1272
        %v1274 = vrot.slane %v1260, %v1273
        %v1275 = vcombine.low %v1219, %v1235
        %v1276 = vcombine.high %v1219, %v1235
        %v1278 = vunpack.c.l.s4 1934713408
        %v1279 = vunpack.c.0.s8 %v1278
        %v1280 = vlaneseq
        %v1281 = vshrl.u32 %v1280, 7
        %v1282 = vsub.s32 %v1279, %v1281
        %v1283 = vrot.slane %v1275, %v1282
        %v1285 = vunpack.c.l.s4 1934713408
        %v1286 = vunpack.c.0.s8 %v1285
        %v1287 = vlaneseq
        %v1288 = vshrl.u32 %v1287, 7
        %v1289 = vsub.s32 %v1286, %v1288
        %v1290 = vrot.slane %v1276, %v1289
        %v1291 = vcombine.low %v1226, %v1242
        %v1292 = vcombine.high %v1226, %v1242
        %v1294 = vunpack.c.l.s4 1934713408
        %v1295 = vunpack.c.0.s8 %v1294
        %v1296 = vlaneseq
        %v1297 = vshrl.u32 %v1296, 7
        %v1298 = vsub.s32 %v1295, %v1297
        %v1299 = vrot.slane %v1291, %v1298
        %v1301 = vunpack.c.l.s4 1934713408
        %v1302 = vunpack.c.0.s8 %v1301
        %v1303 = vlaneseq
        %v1304 = vshrl.u32 %v1303, 7
        %v1305 = vsub.s32 %v1302, %v1304
        %v1306 = vrot.slane %v1292, %v1305
        %v1307 = vcombine.low %v1251, %v1267
        %v1308 = vcombine.high %v1251, %v1267
        %v1310 = vunpack.c.l.s4 1934713408
        %v1311 = vunpack.c.0.s8 %v1310
        %v1312 = vlaneseq
        %v1313 = vshrl.u32 %v1312, 7
        %v1314 = vsub.s32 %v1311, %v1313
        %v1315 = vrot.slane %v1307, %v1314
        %v1317 = vunpack.c.l.s4 1934713408
        %v1318 = vunpack.c.0.s8 %v1317
        %v1319 = vlaneseq
        %v1320 = vshrl.u32 %v1319, 7
        %v1321 = vsub.s32 %v1318, %v1320
        %v1322 = vrot.slane %v1308, %v1321
        %v1323 = vcombine.low %v1258, %v1274
        %v1324 = vcombine.high %v1258, %v1274
        %v1326 = vunpack.c.l.s4 1934713408
        %v1327 = vunpack.c.0.s8 %v1326
        %v1328 = vlaneseq
        %v1329 = vshrl.u32 %v1328, 7
        %v1330 = vsub.s32 %v1327, %v1329
        %v1331 = vrot.slane %v1323, %v1330
        %v1333 = vunpack.c.l.s4 1934713408
        %v1334 = vunpack.c.0.s8 %v1333
        %v1335 = vlaneseq
        %v1336 = vshrl.u32 %v1335, 7
        %v1337 = vsub.s32 %v1334, %v1336
        %v1338 = vrot.slane %v1324, %v1337
        %v1339 = vcombine.low %v1283, %v1315
        %v1340 = vcombine.high %v1283, %v1315
        %v1341 = vcombine.low %v1290, %v1322
        %v1342 = vcombine.high %v1290, %v1322
        %v1343 = vcombine.low %v1299, %v1331
        %v1344 = vcombine.high %v1299, %v1331
        %v1345 = vcombine.low %v1306, %v1338
        %v1346 = vcombine.high %v1306, %v1338
        %v1347 = vcombine.low %v700, %v764
        %v1348 = vcombine.high %v700, %v764
        %v1350 = vunpack.c.l.s4 1983009808
        %v1351 = vunpack.c.0.s8 %v1350
        %v1352 = vlaneseq
        %v1353 = vshrl.u32 %v1352, 7
        %v1354 = vsub.s32 %v1351, %v1353
        %v1355 = vrot.slane %v1347, %v1354
        %v1357 = vunpack.c.l.s4 1983009808
        %v1358 = vunpack.c.0.s8 %v1357
        %v1359 = vlaneseq
        %v1360 = vshrl.u32 %v1359, 7
        %v1361 = vsub.s32 %v1358, %v1360
        %v1362 = vrot.slane %v1348, %v1361
        %v1363 = vcombine.low %v732, %v796
        %v1364 = vcombine.high %v732, %v796
        %v1366 = vunpack.c.l.s4 1983009808
        %v1367 = vunpack.c.0.s8 %v1366
        %v1368 = vlaneseq
        %v1369 = vshrl.u32 %v1368, 7
        %v1370 = vsub.s32 %v1367, %v1369
        %v1371 = vrot.slane %v1363, %v1370
        %v1373 = vunpack.c.l.s4 1983009808
        %v1374 = vunpack.c.0.s8 %v1373
        %v1375 = vlaneseq
        %v1376 = vshrl.u32 %v1375, 7
        %v1377 = vsub.s32 %v1374, %v1376
        %v1378 = vrot.slane %v1364, %v1377
        %v1379 = vcombine.low %v828, %v892
        %v1380 = vcombine.high %v828, %v892
        %v1382 = vunpack.c.l.s4 1983009808
        %v1383 = vunpack.c.0.s8 %v1382
        %v1384 = vlaneseq
        %v1385 = vshrl.u32 %v1384, 7
        %v1386 = vsub.s32 %v1383, %v1385
        %v1387 = vrot.slane %v1379, %v1386
        %v1389 = vunpack.c.l.s4 1983009808
        %v1390 = vunpack.c.0.s8 %v1389
        %v1391 = vlaneseq
        %v1392 = vshrl.u32 %v1391, 7
        %v1393 = vsub.s32 %v1390, %v1392
        %v1394 = vrot.slane %v1380, %v1393
        %v1395 = vcombine.low %v860, %v924
        %v1396 = vcombine.high %v860, %v924
        %v1398 = vunpack.c.l.s4 1983009808
        %v1399 = vunpack.c.0.s8 %v1398
        %v1400 = vlaneseq
        %v1401 = vshrl.u32 %v1400, 7
        %v1402 = vsub.s32 %v1399, %v1401
        %v1403 = vrot.slane %v1395, %v1402
        %v1405 = vunpack.c.l.s4 1983009808
        %v1406 = vunpack.c.0.s8 %v1405
        %v1407 = vlaneseq
        %v1408 = vshrl.u32 %v1407, 7
        %v1409 = vsub.s32 %v1406, %v1408
        %v1410 = vrot.slane %v1396, %v1409
        %v1411 = vcombine.low %v1355, %v1371
        %v1412 = vcombine.high %v1355, %v1371
        %v1414 = vunpack.c.l.s4 1934713408
        %v1415 = vunpack.c.0.s8 %v1414
        %v1416 = vlaneseq
        %v1417 = vshrl.u32 %v1416, 7
        %v1418 = vsub.s32 %v1415, %v1417
        %v1419 = vrot.slane %v1411, %v1418
        %v1421 = vunpack.c.l.s4 1934713408
        %v1422 = vunpack.c.0.s8 %v1421
        %v1423 = vlaneseq
        %v1424 = vshrl.u32 %v1423, 7
        %v1425 = vsub.s32 %v1422, %v1424
        %v1426 = vrot.slane %v1412, %v1425
        %v1427 = vcombine.low %v1362, %v1378
        %v1428 = vcombine.high %v1362, %v1378
        %v1430 = vunpack.c.l.s4 1934713408
        %v1431 = vunpack.c.0.s8 %v1430
        %v1432 = vlaneseq
        %v1433 = vshrl.u32 %v1432, 7
        %v1434 = vsub.s32 %v1431, %v1433
        %v1435 = vrot.slane %v1427, %v1434
        %v1437 = vunpack.c.l.s4 1934713408
        %v1438 = vunpack.c.0.s8 %v1437
        %v1439 = vlaneseq
        %v1440 = vshrl.u32 %v1439, 7
        %v1441 = vsub.s32 %v1438, %v1440
        %v1442 = vrot.slane %v1428, %v1441
        %v1443 = vcombine.low %v1387, %v1403
        %v1444 = vcombine.high %v1387, %v1403
        %v1446 = vunpack.c.l.s4 1934713408
        %v1447 = vunpack.c.0.s8 %v1446
        %v1448 = vlaneseq
        %v1449 = vshrl.u32 %v1448, 7
        %v1450 = vsub.s32 %v1447, %v1449
        %v1451 = vrot.slane %v1443, %v1450
        %v1453 = vunpack.c.l.s4 1934713408
        %v1454 = vunpack.c.0.s8 %v1453
        %v1455 = vlaneseq
        %v1456 = vshrl.u32 %v1455, 7
        %v1457 = vsub.s32 %v1454, %v1456
        %v1458 = vrot.slane %v1444, %v1457
        %v1459 = vcombine.low %v1394, %v1410
        %v1460 = vcombine.high %v1394, %v1410
        %v1462 = vunpack.c.l.s4 1934713408
        %v1463 = vunpack.c.0.s8 %v1462
        %v1464 = vlaneseq
        %v1465 = vshrl.u32 %v1464, 7
        %v1466 = vsub.s32 %v1463, %v1465
        %v1467 = vrot.slane %v1459, %v1466
        %v1469 = vunpack.c.l.s4 1934713408
        %v1470 = vunpack.c.0.s8 %v1469
        %v1471 = vlaneseq
        %v1472 = vshrl.u32 %v1471, 7
        %v1473 = vsub.s32 %v1470, %v1472
        %v1474 = vrot.slane %v1460, %v1473
        %v1475 = vcombine.low %v1419, %v1451
        %v1476 = vcombine.high %v1419, %v1451
        %v1477 = vcombine.low %v1426, %v1458
        %v1478 = vcombine.high %v1426, %v1458
        %v1479 = vcombine.low %v1435, %v1467
        %v1480 = vcombine.high %v1435, %v1467
        %v1481 = vcombine.low %v1442, %v1474
        %v1482 = vcombine.high %v1442, %v1474
        %v1483 = vcombine.low %v1067, %v1069
        %v1484 = vcombine.high %v1067, %v1069
        %v1486 = vunpack.c.l.s4 1983009808
        %v1487 = vunpack.c.0.s8 %v1486
        %v1488 = vlaneseq
        %v1489 = vshrl.u32 %v1488, 7
        %v1490 = vsub.s32 %v1487, %v1489
        %v1491 = vrot.slane %v1483, %v1490
        %v1493 = vunpack.c.l.s4 1983009808
        %v1494 = vunpack.c.0.s8 %v1493
        %v1495 = vlaneseq
        %v1496 = vshrl.u32 %v1495, 7
        %v1497 = vsub.s32 %v1494, %v1496
        %v1498 = vrot.slane %v1484, %v1497
        %v1499 = vcombine.low %v1068, %v1070
        %v1500 = vcombine.high %v1068, %v1070
        %v1502 = vunpack.c.l.s4 1983009808
        %v1503 = vunpack.c.0.s8 %v1502
        %v1504 = vlaneseq
        %v1505 = vshrl.u32 %v1504, 7
        %v1506 = vsub.s32 %v1503, %v1505
        %v1507 = vrot.slane %v1499, %v1506
        %v1509 = vunpack.c.l.s4 1983009808
        %v1510 = vunpack.c.0.s8 %v1509
        %v1511 = vlaneseq
        %v1512 = vshrl.u32 %v1511, 7
        %v1513 = vsub.s32 %v1510, %v1512
        %v1514 = vrot.slane %v1500, %v1513
        %v1515 = vcombine.low %v1071, %v1073
        %v1516 = vcombine.high %v1071, %v1073
        %v1518 = vunpack.c.l.s4 1983009808
        %v1519 = vunpack.c.0.s8 %v1518
        %v1520 = vlaneseq
        %v1521 = vshrl.u32 %v1520, 7
        %v1522 = vsub.s32 %v1519, %v1521
        %v1523 = vrot.slane %v1515, %v1522
        %v1525 = vunpack.c.l.s4 1983009808
        %v1526 = vunpack.c.0.s8 %v1525
        %v1527 = vlaneseq
        %v1528 = vshrl.u32 %v1527, 7
        %v1529 = vsub.s32 %v1526, %v1528
        %v1530 = vrot.slane %v1516, %v1529
        %v1531 = vcombine.low %v1072, %v1074
        %v1532 = vcombine.high %v1072, %v1074
        %v1534 = vunpack.c.l.s4 1983009808
        %v1535 = vunpack.c.0.s8 %v1534
        %v1536 = vlaneseq
        %v1537 = vshrl.u32 %v1536, 7
        %v1538 = vsub.s32 %v1535, %v1537
        %v1539 = vrot.slane %v1531, %v1538
        %v1541 = vunpack.c.l.s4 1983009808
        %v1542 = vunpack.c.0.s8 %v1541
        %v1543 = vlaneseq
        %v1544 = vshrl.u32 %v1543, 7
        %v1545 = vsub.s32 %v1542, %v1544
        %v1546 = vrot.slane %v1532, %v1545
        %v1547 = vcombine.low %v1491, %v1507
        %v1548 = vcombine.high %v1491, %v1507
        %v1550 = vunpack.c.l.s4 1934713408
        %v1551 = vunpack.c.0.s8 %v1550
        %v1552 = vlaneseq
        %v1553 = vshrl.u32 %v1552, 7
        %v1554 = vsub.s32 %v1551, %v1553
        %v1555 = vrot.slane %v1547, %v1554
        %v1557 = vunpack.c.l.s4 1934713408
        %v1558 = vunpack.c.0.s8 %v1557
        %v1559 = vlaneseq
        %v1560 = vshrl.u32 %v1559, 7
        %v1561 = vsub.s32 %v1558, %v1560
        %v1562 = vrot.slane %v1548, %v1561
        %v1563 = vcombine.low %v1498, %v1514
        %v1564 = vcombine.high %v1498, %v1514
        %v1566 = vunpack.c.l.s4 1934713408
        %v1567 = vunpack.c.0.s8 %v1566
        %v1568 = vlaneseq
        %v1569 = vshrl.u32 %v1568, 7
        %v1570 = vsub.s32 %v1567, %v1569
        %v1571 = vrot.slane %v1563, %v1570
        %v1573 = vunpack.c.l.s4 1934713408
        %v1574 = vunpack.c.0.s8 %v1573
        %v1575 = vlaneseq
        %v1576 = vshrl.u32 %v1575, 7
        %v1577 = vsub.s32 %v1574, %v1576
        %v1578 = vrot.slane %v1564, %v1577
        %v1579 = vcombine.low %v1523, %v1539
        %v1580 = vcombine.high %v1523, %v1539
        %v1582 = vunpack.c.l.s4 1934713408
        %v1583 = vunpack.c.0.s8 %v1582
        %v1584 = vlaneseq
        %v1585 = vshrl.u32 %v1584, 7
        %v1586 = vsub.s32 %v1583, %v1585
        %v1587 = vrot.slane %v1579, %v1586
        %v1589 = vunpack.c.l.s4 1934713408
        %v1590 = vunpack.c.0.s8 %v1589
        %v1591 = vlaneseq
        %v1592 = vshrl.u32 %v1591, 7
        %v1593 = vsub.s32 %v1590, %v1592
        %v1594 = vrot.slane %v1580, %v1593
        %v1595 = vcombine.low %v1530, %v1546
        %v1596 = vcombine.high %v1530, %v1546
        %v1598 = vunpack.c.l.s4 1934713408
        %v1599 = vunpack.c.0.s8 %v1598
        %v1600 = vlaneseq
        %v1601 = vshrl.u32 %v1600, 7
        %v1602 = vsub.s32 %v1599, %v1601
        %v1603 = vrot.slane %v1595, %v1602
        %v1605 = vunpack.c.l.s4 1934713408
        %v1606 = vunpack.c.0.s8 %v1605
        %v1607 = vlaneseq
        %v1608 = vshrl.u32 %v1607, 7
        %v1609 = vsub.s32 %v1606, %v1608
        %v1610 = vrot.slane %v1596, %v1609
        %v1611 = vcombine.low %v1555, %v1587
        %v1612 = vcombine.high %v1555, %v1587
        %v1613 = vcombine.low %v1562, %v1594
        %v1614 = vcombine.high %v1562, %v1594
        %v1615 = vcombine.low %v1571, %v1603
        %v1616 = vcombine.high %v1571, %v1603
        %v1617 = vcombine.low %v1578, %v1610
        %v1618 = vcombine.high %v1578, %v1610
        %v1619 = vcombine.low %v1339, %v1341
        %v1620 = vcombine.high %v1339, %v1341
        %v1622 = vunpack.c.l.s4 1983009808
        %v1623 = vunpack.c.0.s8 %v1622
        %v1624 = vlaneseq
        %v1625 = vshrl.u32 %v1624, 7
        %v1626 = vsub.s32 %v1623, %v1625
        %v1627 = vrot.slane %v1619, %v1626
        %v1629 = vunpack.c.l.s4 1983009808
        %v1630 = vunpack.c.0.s8 %v1629
        %v1631 = vlaneseq
        %v1632 = vshrl.u32 %v1631, 7
        %v1633 = vsub.s32 %v1630, %v1632
        %v1634 = vrot.slane %v1620, %v1633
        %v1635 = vcombine.low %v1340, %v1342
        %v1636 = vcombine.high %v1340, %v1342
        %v1638 = vunpack.c.l.s4 1983009808
        %v1639 = vunpack.c.0.s8 %v1638
        %v1640 = vlaneseq
        %v1641 = vshrl.u32 %v1640, 7
        %v1642 = vsub.s32 %v1639, %v1641
        %v1643 = vrot.slane %v1635, %v1642
        %v1645 = vunpack.c.l.s4 1983009808
        %v1646 = vunpack.c.0.s8 %v1645
        %v1647 = vlaneseq
        %v1648 = vshrl.u32 %v1647, 7
        %v1649 = vsub.s32 %v1646, %v1648
        %v1650 = vrot.slane %v1636, %v1649
        %v1651 = vcombine.low %v1343, %v1345
        %v1652 = vcombine.high %v1343, %v1345
        %v1654 = vunpack.c.l.s4 1983009808
        %v1655 = vunpack.c.0.s8 %v1654
        %v1656 = vlaneseq
        %v1657 = vshrl.u32 %v1656, 7
        %v1658 = vsub.s32 %v1655, %v1657
        %v1659 = vrot.slane %v1651, %v1658
        %v1661 = vunpack.c.l.s4 1983009808
        %v1662 = vunpack.c.0.s8 %v1661
        %v1663 = vlaneseq
        %v1664 = vshrl.u32 %v1663, 7
        %v1665 = vsub.s32 %v1662, %v1664
        %v1666 = vrot.slane %v1652, %v1665
        %v1667 = vcombine.low %v1344, %v1346
        %v1668 = vcombine.high %v1344, %v1346
        %v1670 = vunpack.c.l.s4 1983009808
        %v1671 = vunpack.c.0.s8 %v1670
        %v1672 = vlaneseq
        %v1673 = vshrl.u32 %v1672, 7
        %v1674 = vsub.s32 %v1671, %v1673
        %v1675 = vrot.slane %v1667, %v1674
        %v1677 = vunpack.c.l.s4 1983009808
        %v1678 = vunpack.c.0.s8 %v1677
        %v1679 = vlaneseq
        %v1680 = vshrl.u32 %v1679, 7
        %v1681 = vsub.s32 %v1678, %v1680
        %v1682 = vrot.slane %v1668, %v1681
        %v1683 = vcombine.low %v1627, %v1643
        %v1684 = vcombine.high %v1627, %v1643
        %v1686 = vunpack.c.l.s4 1934713408
        %v1687 = vunpack.c.0.s8 %v1686
        %v1688 = vlaneseq
        %v1689 = vshrl.u32 %v1688, 7
        %v1690 = vsub.s32 %v1687, %v1689
        %v1691 = vrot.slane %v1683, %v1690
        %v1693 = vunpack.c.l.s4 1934713408
        %v1694 = vunpack.c.0.s8 %v1693
        %v1695 = vlaneseq
        %v1696 = vshrl.u32 %v1695, 7
        %v1697 = vsub.s32 %v1694, %v1696
        %v1698 = vrot.slane %v1684, %v1697
        %v1699 = vcombine.low %v1634, %v1650
        %v1700 = vcombine.high %v1634, %v1650
        %v1702 = vunpack.c.l.s4 1934713408
        %v1703 = vunpack.c.0.s8 %v1702
        %v1704 = vlaneseq
        %v1705 = vshrl.u32 %v1704, 7
        %v1706 = vsub.s32 %v1703, %v1705
        %v1707 = vrot.slane %v1699, %v1706
        %v1709 = vunpack.c.l.s4 1934713408
        %v1710 = vunpack.c.0.s8 %v1709
        %v1711 = vlaneseq
        %v1712 = vshrl.u32 %v1711, 7
        %v1713 = vsub.s32 %v1710, %v1712
        %v1714 = vrot.slane %v1700, %v1713
        %v1715 = vcombine.low %v1659, %v1675
        %v1716 = vcombine.high %v1659, %v1675
        %v1718 = vunpack.c.l.s4 1934713408
        %v1719 = vunpack.c.0.s8 %v1718
        %v1720 = vlaneseq
        %v1721 = vshrl.u32 %v1720, 7
        %v1722 = vsub.s32 %v1719, %v1721
        %v1723 = vrot.slane %v1715, %v1722
        %v1725 = vunpack.c.l.s4 1934713408
        %v1726 = vunpack.c.0.s8 %v1725
        %v1727 = vlaneseq
        %v1728 = vshrl.u32 %v1727, 7
        %v1729 = vsub.s32 %v1726, %v1728
        %v1730 = vrot.slane %v1716, %v1729
        %v1731 = vcombine.low %v1666, %v1682
        %v1732 = vcombine.high %v1666, %v1682
        %v1734 = vunpack.c.l.s4 1934713408
        %v1735 = vunpack.c.0.s8 %v1734
        %v1736 = vlaneseq
        %v1737 = vshrl.u32 %v1736, 7
        %v1738 = vsub.s32 %v1735, %v1737
        %v1739 = vrot.slane %v1731, %v1738
        %v1741 = vunpack.c.l.s4 1934713408
        %v1742 = vunpack.c.0.s8 %v1741
        %v1743 = vlaneseq
        %v1744 = vshrl.u32 %v1743, 7
        %v1745 = vsub.s32 %v1742, %v1744
        %v1746 = vrot.slane %v1732, %v1745
        %v1747 = vcombine.low %v1691, %v1723
        %v1748 = vcombine.high %v1691, %v1723
        %v1749 = vcombine.low %v1698, %v1730
        %v1750 = vcombine.high %v1698, %v1730
        %v1751 = vcombine.low %v1707, %v1739
        %v1752 = vcombine.high %v1707, %v1739
        %v1753 = vcombine.low %v1714, %v1746
        %v1754 = vcombine.high %v1714, %v1746
        %v1755 = vcombine.low %v1203, %v1205
        %v1756 = vcombine.high %v1203, %v1205
        %v1758 = vunpack.c.l.s4 1983009808
        %v1759 = vunpack.c.0.s8 %v1758
        %v1760 = vlaneseq
        %v1761 = vshrl.u32 %v1760, 7
        %v1762 = vsub.s32 %v1759, %v1761
        %v1763 = vrot.slane %v1755, %v1762
        %v1765 = vunpack.c.l.s4 1983009808
        %v1766 = vunpack.c.0.s8 %v1765
        %v1767 = vlaneseq
        %v1768 = vshrl.u32 %v1767, 7
        %v1769 = vsub.s32 %v1766, %v1768
        %v1770 = vrot.slane %v1756, %v1769
        %v1771 = vcombine.low %v1204, %v1206
        %v1772 = vcombine.high %v1204, %v1206
        %v1774 = vunpack.c.l.s4 1983009808
        %v1775 = vunpack.c.0.s8 %v1774
        %v1776 = vlaneseq
        %v1777 = vshrl.u32 %v1776, 7
        %v1778 = vsub.s32 %v1775, %v1777
        %v1779 = vrot.slane %v1771, %v1778
        %v1781 = vunpack.c.l.s4 1983009808
        %v1782 = vunpack.c.0.s8 %v1781
        %v1783 = vlaneseq
        %v1784 = vshrl.u32 %v1783, 7
        %v1785 = vsub.s32 %v1782, %v1784
        %v1786 = vrot.slane %v1772, %v1785
        %v1787 = vcombine.low %v1207, %v1209
        %v1788 = vcombine.high %v1207, %v1209
        %v1790 = vunpack.c.l.s4 1983009808
        %v1791 = vunpack.c.0.s8 %v1790
        %v1792 = vlaneseq
        %v1793 = vshrl.u32 %v1792, 7
        %v1794 = vsub.s32 %v1791, %v1793
        %v1795 = vrot.slane %v1787, %v1794
        %v1797 = vunpack.c.l.s4 1983009808
        %v1798 = vunpack.c.0.s8 %v1797
        %v1799 = vlaneseq
        %v1800 = vshrl.u32 %v1799, 7
        %v1801 = vsub.s32 %v1798, %v1800
        %v1802 = vrot.slane %v1788, %v1801
        %v1803 = vcombine.low %v1208, %v1210
        %v1804 = vcombine.high %v1208, %v1210
        %v1806 = vunpack.c.l.s4 1983009808
        %v1807 = vunpack.c.0.s8 %v1806
        %v1808 = vlaneseq
        %v1809 = vshrl.u32 %v1808, 7
        %v1810 = vsub.s32 %v1807, %v1809
        %v1811 = vrot.slane %v1803, %v1810
        %v1813 = vunpack.c.l.s4 1983009808
        %v1814 = vunpack.c.0.s8 %v1813
        %v1815 = vlaneseq
        %v1816 = vshrl.u32 %v1815, 7
        %v1817 = vsub.s32 %v1814, %v1816
        %v1818 = vrot.slane %v1804, %v1817
        %v1819 = vcombine.low %v1763, %v1779
        %v1820 = vcombine.high %v1763, %v1779
        %v1822 = vunpack.c.l.s4 1934713408
        %v1823 = vunpack.c.0.s8 %v1822
        %v1824 = vlaneseq
        %v1825 = vshrl.u32 %v1824, 7
        %v1826 = vsub.s32 %v1823, %v1825
        %v1827 = vrot.slane %v1819, %v1826
        %v1829 = vunpack.c.l.s4 1934713408
        %v1830 = vunpack.c.0.s8 %v1829
        %v1831 = vlaneseq
        %v1832 = vshrl.u32 %v1831, 7
        %v1833 = vsub.s32 %v1830, %v1832
        %v1834 = vrot.slane %v1820, %v1833
        %v1835 = vcombine.low %v1770, %v1786
        %v1836 = vcombine.high %v1770, %v1786
        %v1838 = vunpack.c.l.s4 1934713408
        %v1839 = vunpack.c.0.s8 %v1838
        %v1840 = vlaneseq
        %v1841 = vshrl.u32 %v1840, 7
        %v1842 = vsub.s32 %v1839, %v1841
        %v1843 = vrot.slane %v1835, %v1842
        %v1845 = vunpack.c.l.s4 1934713408
        %v1846 = vunpack.c.0.s8 %v1845
        %v1847 = vlaneseq
        %v1848 = vshrl.u32 %v1847, 7
        %v1849 = vsub.s32 %v1846, %v1848
        %v1850 = vrot.slane %v1836, %v1849
        %v1851 = vcombine.low %v1795, %v1811
        %v1852 = vcombine.high %v1795, %v1811
        %v1854 = vunpack.c.l.s4 1934713408
        %v1855 = vunpack.c.0.s8 %v1854
        %v1856 = vlaneseq
        %v1857 = vshrl.u32 %v1856, 7
        %v1858 = vsub.s32 %v1855, %v1857
        %v1859 = vrot.slane %v1851, %v1858
        %v1861 = vunpack.c.l.s4 1934713408
        %v1862 = vunpack.c.0.s8 %v1861
        %v1863 = vlaneseq
        %v1864 = vshrl.u32 %v1863, 7
        %v1865 = vsub.s32 %v1862, %v1864
        %v1866 = vrot.slane %v1852, %v1865
        %v1867 = vcombine.low %v1802, %v1818
        %v1868 = vcombine.high %v1802, %v1818
        %v1870 = vunpack.c.l.s4 1934713408
        %v1871 = vunpack.c.0.s8 %v1870
        %v1872 = vlaneseq
        %v1873 = vshrl.u32 %v1872, 7
        %v1874 = vsub.s32 %v1871, %v1873
        %v1875 = vrot.slane %v1867, %v1874
        %v1877 = vunpack.c.l.s4 1934713408
        %v1878 = vunpack.c.0.s8 %v1877
        %v1879 = vlaneseq
        %v1880 = vshrl.u32 %v1879, 7
        %v1881 = vsub.s32 %v1878, %v1880
        %v1882 = vrot.slane %v1868, %v1881
        %v1883 = vcombine.low %v1827, %v1859
        %v1884 = vcombine.high %v1827, %v1859
        %v1885 = vcombine.low %v1834, %v1866
        %v1886 = vcombine.high %v1834, %v1866
        %v1887 = vcombine.low %v1843, %v1875
        %v1888 = vcombine.high %v1843, %v1875
        %v1889 = vcombine.low %v1850, %v1882
        %v1890 = vcombine.high %v1850, %v1882
        %v1891 = vcombine.low %v1475, %v1477
        %v1892 = vcombine.high %v1475, %v1477
        %v1894 = vunpack.c.l.s4 1983009808
        %v1895 = vunpack.c.0.s8 %v1894
        %v1896 = vlaneseq
        %v1897 = vshrl.u32 %v1896, 7
        %v1898 = vsub.s32 %v1895, %v1897
        %v1899 = vrot.slane %v1891, %v1898
        %v1901 = vunpack.c.l.s4 1983009808
        %v1902 = vunpack.c.0.s8 %v1901
        %v1903 = vlaneseq
        %v1904 = vshrl.u32 %v1903, 7
        %v1905 = vsub.s32 %v1902, %v1904
        %v1906 = vrot.slane %v1892, %v1905
        %v1907 = vcombine.low %v1476, %v1478
        %v1908 = vcombine.high %v1476, %v1478
        %v1910 = vunpack.c.l.s4 1983009808
        %v1911 = vunpack.c.0.s8 %v1910
        %v1912 = vlaneseq
        %v1913 = vshrl.u32 %v1912, 7
        %v1914 = vsub.s32 %v1911, %v1913
        %v1915 = vrot.slane %v1907, %v1914
        %v1917 = vunpack.c.l.s4 1983009808
        %v1918 = vunpack.c.0.s8 %v1917
        %v1919 = vlaneseq
        %v1920 = vshrl.u32 %v1919, 7
        %v1921 = vsub.s32 %v1918, %v1920
        %v1922 = vrot.slane %v1908, %v1921
        %v1923 = vcombine.low %v1479, %v1481
        %v1924 = vcombine.high %v1479, %v1481
        %v1926 = vunpack.c.l.s4 1983009808
        %v1927 = vunpack.c.0.s8 %v1926
        %v1928 = vlaneseq
        %v1929 = vshrl.u32 %v1928, 7
        %v1930 = vsub.s32 %v1927, %v1929
        %v1931 = vrot.slane %v1923, %v1930
        %v1933 = vunpack.c.l.s4 1983009808
        %v1934 = vunpack.c.0.s8 %v1933
        %v1935 = vlaneseq
        %v1936 = vshrl.u32 %v1935, 7
        %v1937 = vsub.s32 %v1934, %v1936
        %v1938 = vrot.slane %v1924, %v1937
        %v1939 = vcombine.low %v1480, %v1482
        %v1940 = vcombine.high %v1480, %v1482
        %v1942 = vunpack.c.l.s4 1983009808
        %v1943 = vunpack.c.0.s8 %v1942
        %v1944 = vlaneseq
        %v1945 = vshrl.u32 %v1944, 7
        %v1946 = vsub.s32 %v1943, %v1945
        %v1947 = vrot.slane %v1939, %v1946
        %v1949 = vunpack.c.l.s4 1983009808
        %v1950 = vunpack.c.0.s8 %v1949
        %v1951 = vlaneseq
        %v1952 = vshrl.u32 %v1951, 7
        %v1953 = vsub.s32 %v1950, %v1952
        %v1954 = vrot.slane %v1940, %v1953
        %v1955 = vcombine.low %v1899, %v1915
        %v1956 = vcombine.high %v1899, %v1915
        %v1958 = vunpack.c.l.s4 1934713408
        %v1959 = vunpack.c.0.s8 %v1958
        %v1960 = vlaneseq
        %v1961 = vshrl.u32 %v1960, 7
        %v1962 = vsub.s32 %v1959, %v1961
        %v1963 = vrot.slane %v1955, %v1962
        %v1965 = vunpack.c.l.s4 1934713408
        %v1966 = vunpack.c.0.s8 %v1965
        %v1967 = vlaneseq
        %v1968 = vshrl.u32 %v1967, 7
        %v1969 = vsub.s32 %v1966, %v1968
        %v1970 = vrot.slane %v1956, %v1969
        %v1971 = vcombine.low %v1906, %v1922
        %v1972 = vcombine.high %v1906, %v1922
        %v1974 = vunpack.c.l.s4 1934713408
        %v1975 = vunpack.c.0.s8 %v1974
        %v1976 = vlaneseq
        %v1977 = vshrl.u32 %v1976, 7
        %v1978 = vsub.s32 %v1975, %v1977
        %v1979 = vrot.slane %v1971, %v1978
        %v1981 = vunpack.c.l.s4 1934713408
        %v1982 = vunpack.c.0.s8 %v1981
        %v1983 = vlaneseq
        %v1984 = vshrl.u32 %v1983, 7
        %v1985 = vsub.s32 %v1982, %v1984
        %v1986 = vrot.slane %v1972, %v1985
        %v1987 = vcombine.low %v1931, %v1947
        %v1988 = vcombine.high %v1931, %v1947
        %v1990 = vunpack.c.l.s4 1934713408
        %v1991 = vunpack.c.0.s8 %v1990
        %v1992 = vlaneseq
        %v1993 = vshrl.u32 %v1992, 7
        %v1994 = vsub.s32 %v1991, %v1993
        %v1995 = vrot.slane %v1987, %v1994
        %v1997 = vunpack.c.l.s4 1934713408
        %v1998 = vunpack.c.0.s8 %v1997
        %v1999 = vlaneseq
        %v2000 = vshrl.u32 %v1999, 7
        %v2001 = vsub.s32 %v1998, %v2000
        %v2002 = vrot.slane %v1988, %v2001
        %v2003 = vcombine.low %v1938, %v1954
        %v2004 = vcombine.high %v1938, %v1954
        %v2006 = vunpack.c.l.s4 1934713408
        %v2007 = vunpack.c.0.s8 %v2006
        %v2008 = vlaneseq
        %v2009 = vshrl.u32 %v2008, 7
        %v2010 = vsub.s32 %v2007, %v2009
        %v2011 = vrot.slane %v2003, %v2010
        %v2013 = vunpack.c.l.s4 1934713408
        %v2014 = vunpack.c.0.s8 %v2013
        %v2015 = vlaneseq
        %v2016 = vshrl.u32 %v2015, 7
        %v2017 = vsub.s32 %v2014, %v2016
        %v2018 = vrot.slane %v2004, %v2017
        %v2019 = vcombine.low %v1963, %v1995
        %v2020 = vcombine.high %v1963, %v1995
        %v2021 = vcombine.low %v1970, %v2002
        %v2022 = vcombine.high %v1970, %v2002
        %v2023 = vcombine.low %v1979, %v2011
        %v2024 = vcombine.high %v1979, %v2011
        %v2025 = vcombine.low %v1986, %v2018
        %v2026 = vcombine.high %v1986, %v2018
        %2029 = vrot.lane.b32.xlu0 %v1612, 4
        %v2030 = vpop.permute.xlu0 %2029
        %2031 = vrot.lane.b32.xlu0 %v1748, 4
        %v2032 = vpop.permute.xlu0 %2031
        %2037 = vrot.lane.b32.xlu0 %v1613, 8
        %v2038 = vpop.permute.xlu0 %2037
        %2039 = vrot.lane.b32.xlu0 %v1749, 8
        %v2040 = vpop.permute.xlu0 %2039
        %2045 = vrot.lane.b32.xlu0 %v1614, 12
        %v2046 = vpop.permute.xlu0 %2045
        %2047 = vrot.lane.b32.xlu0 %v1750, 12
        %v2048 = vpop.permute.xlu0 %2047
        %2053 = vrot.lane.b32.xlu0 %v1615, 16
        %v2054 = vpop.permute.xlu0 %2053
        %2055 = vrot.lane.b32.xlu0 %v1751, 16
        %v2056 = vpop.permute.xlu0 %2055
        %2061 = vrot.lane.b32.xlu0 %v1616, 20
        %v2062 = vpop.permute.xlu0 %2061
        %2063 = vrot.lane.b32.xlu0 %v1752, 20
        %v2064 = vpop.permute.xlu0 %2063
        %2069 = vrot.lane.b32.xlu0 %v1617, 24
        %v2070 = vpop.permute.xlu0 %2069
        %2071 = vrot.lane.b32.xlu0 %v1753, 24
        %v2072 = vpop.permute.xlu0 %2071
        %2077 = vrot.lane.b32.xlu0 %v1618, 28
        %v2078 = vpop.permute.xlu0 %2077
        %2079 = vrot.lane.b32.xlu0 %v1754, 28
        %v2080 = vpop.permute.xlu0 %2079
        %2085 = vrot.lane.b32.xlu0 %v1883, 32
        %v2086 = vpop.permute.xlu0 %2085
        %2087 = vrot.lane.b32.xlu0 %v2019, 32
        %v2088 = vpop.permute.xlu0 %2087
        %2093 = vrot.lane.b32.xlu0 %v1884, 36
        %v2094 = vpop.permute.xlu0 %2093
        %2095 = vrot.lane.b32.xlu0 %v2020, 36
        %v2096 = vpop.permute.xlu0 %2095
        %2101 = vrot.lane.b32.xlu0 %v1885, 40
        %v2102 = vpop.permute.xlu0 %2101
        %2103 = vrot.lane.b32.xlu0 %v2021, 40
        %v2104 = vpop.permute.xlu0 %2103
        %2109 = vrot.lane.b32.xlu0 %v1886, 44
        %v2110 = vpop.permute.xlu0 %2109
        %2111 = vrot.lane.b32.xlu0 %v2022, 44
        %v2112 = vpop.permute.xlu0 %2111
        %2117 = vrot.lane.b32.xlu0 %v1887, 48
        %v2118 = vpop.permute.xlu0 %2117
        %2119 = vrot.lane.b32.xlu0 %v2023, 48
        %v2120 = vpop.permute.xlu0 %2119
        %2125 = vrot.lane.b32.xlu0 %v1888, 52
        %v2126 = vpop.permute.xlu0 %2125
        %2127 = vrot.lane.b32.xlu0 %v2024, 52
        %v2128 = vpop.permute.xlu0 %2127
        %2133 = vrot.lane.b32.xlu0 %v1889, 56
        %v2134 = vpop.permute.xlu0 %2133
        %2135 = vrot.lane.b32.xlu0 %v2025, 56
        %v2136 = vpop.permute.xlu0 %2135
        %2141 = vrot.lane.b32.xlu0 %v1890, 60
        %v2142 = vpop.permute.xlu0 %2141
        %2143 = vrot.lane.b32.xlu0 %v2026, 60
        %v2144 = vpop.permute.xlu0 %2143
        %vm2147 = vcmask 31744
        %v2148 = vsel %vm2147, %v1611, %v2030
        %v2149 = vsel %vm2147, %v1747, %v2032
        %vm2150 = vcmask 64512
        %v2151 = vsel %vm2150, %v2148, %v2038
        %v2152 = vsel %vm2150, %v2149, %v2040
        %vm2153 = vcmask 97280
        %v2154 = vsel %vm2153, %v2151, %v2046
        %v2155 = vsel %vm2153, %v2152, %v2048
        %vm2156 = vcmask 130048
        %v2157 = vsel %vm2156, %v2154, %v2054
        %v2158 = vsel %vm2156, %v2155, %v2056
        %vm2159 = vcmask 162816
        %v2160 = vsel %vm2159, %v2157, %v2062
        %v2161 = vsel %vm2159, %v2158, %v2064
        %vm2162 = vcmask 195584
        %v2163 = vsel %vm2162, %v2160, %v2070
        %v2164 = vsel %vm2162, %v2161, %v2072
        %vm2165 = vcmask 228352
        %v2166 = vsel %vm2165, %v2163, %v2078
        %v2167 = vsel %vm2165, %v2164, %v2080
        %vm2168 = vcmask 261120
        %v2169 = vsel %vm2168, %v2166, %v2086
        %v2170 = vsel %vm2168, %v2167, %v2088
        %vm2171 = vcmask 293888
        %v2172 = vsel %vm2171, %v2169, %v2094
        %v2173 = vsel %vm2171, %v2170, %v2096
        %vm2174 = vcmask 326656
        %v2175 = vsel %vm2174, %v2172, %v2102
        %v2176 = vsel %vm2174, %v2173, %v2104
        %vm2177 = vcmask 359424
        %v2178 = vsel %vm2177, %v2175, %v2110
        %v2179 = vsel %vm2177, %v2176, %v2112
        %vm2180 = vcmask 392192
        %v2181 = vsel %vm2180, %v2178, %v2118
        %v2182 = vsel %vm2180, %v2179, %v2120
        %vm2183 = vcmask 424960
        %v2184 = vsel %vm2183, %v2181, %v2126
        %v2185 = vsel %vm2183, %v2182, %v2128
        %vm2186 = vcmask 457728
        %v2187 = vsel %vm2186, %v2184, %v2134
        %v2188 = vsel %vm2186, %v2185, %v2136
        %vm2189 = vcmask 490496
        %v2190 = vsel %vm2189, %v2187, %v2142
        %v2191 = vsel %vm2189, %v2188, %v2144
        %vm2192 = vcmask 523264
        %2193 = vst.msk [vmem:[%s152] sm:$0xff] %vm2192, %v2190
        %2194 = vst.msk [vmem:[%s152 + $0x8] sm:$0xff] %vm2192, %v2191
        %s2195 = sand.u32 %s68, 1
        %s2196 = scalar_lea.sflag [#allocation4], %s2195
        %s2197 = sand.u32 %s68, 1
        %s2198 = smul.addr %s2197, 16
        %s2199 = scalar_lea.vmem [#allocation5], %s2198
        // Predicated region
        $region29: #{tpu_custom_call.1} parent=23 // pred_check
          %p2200 = pneg %p78
        $region30: #{tpu_custom_call.1} parent=23 // pred_check_branch
          %2202 = sbr.rel (%p2200) target = $region32
        $region31: #{tpu_custom_call.1} parent=23 // pred_region
          %s2203 = smul.u32 2, %s23
          %s2205 = ssub.s32 256, 256
          %2206 = vsyncadd %s2196, %s2205
          %s2207 = smul.addr %s22, 2
          %s2208 = sadd.s32 %s2203, %s2207
          %s2209 = smul.addr %s2208, 128
          %s2210 = scalar_lea.hbm %s1, %s2209
          %s2211 = sshll.u32 %s2199, 4
          %s2212 = int_to_ptr.vmem [resolvable:$true] %s2211
          %2217 = dma.vmem_to_hbm [thread:$0]  %s2212, 256, %s2210, %s2196, 128, 128, 8
        $region32: #{tpu_custom_call.1} parent=23 // pred_fallthru
          _
      $region24: #{tpu_custom_call.1} parent=5 // pred_fallthru
        _
      %p2218 = scmp.le.s32.totalorder 2, %s13
      // Predicated region
      $region33: #{tpu_custom_call.1} parent=5 // pred_check
        %p2219 = pneg %p2218
      $region34: #{tpu_custom_call.1} parent=5 // pred_check_branch
        %2221 = sbr.rel (%p2219) target = $region36
      $region35: #{tpu_custom_call.1} parent=5 // pred_region
        %s2222 = ssub.s32 %s13, 2
        // Predicated region
        $region37: #{tpu_custom_call.1} parent=35 // pred_check
          %p2223 = pneg %p84
        $region38: #{tpu_custom_call.1} parent=35 // pred_check_branch
          %2225 = sbr.rel (%p2223) target = $region40
        $region39: #{tpu_custom_call.1} parent=35 // pred_region
          %s2226 = sand.u32 %s69, 1
          %s2227 = scalar_lea.sflag [#allocation4], %s2226
          %s2228 = sand.u32 %s69, 1
          %s2229 = smul.addr %s2228, 16
          %s2230 = scalar_lea.vmem [#allocation5], %s2229
          %2231 = dma.done %s2227, 256
        $region40: #{tpu_custom_call.1} parent=35 // pred_fallthru
          _
      $region36: #{tpu_custom_call.1} parent=5 // pred_fallthru
        _
    $region6: #{tpu_custom_call.1} parent=1 // loop_footer
      %s17 = sadd.s32 1, %s13
    $region7: #{tpu_custom_call.1} parent=1 // loop_footer_branch
      %12 = sbr.rel target = $region3
    $region8: #{tpu_custom_call.1} parent=1 // loop_exit
      _
    %2232 = vsyncpa [#allocation3], 1
    %s2233 = scalar_lea.sflag [#allocation3], 1
    %2234 = vsyncpa %s2233, 1
    %2235 = vsyncpa [#allocation4], 1
    %s2236 = scalar_lea.sflag [#allocation4], 1
    %2237 = vsyncpa %s2236, 1

// kernel: tpu_custom_call.1
$region0: #{tpu_custom_call.1}
  #allocation0 [shape = 'u32[]', space=smem, size = 0x4, offset = 0x4, fixed_abs, tag = 'smem constant byte address 0x4 - core index']
  #allocation1 [shape = 'u32[144,128]{1,0:T(1,128)}', space=vmem, size = 0x12000, scoped, tag = 'internal scratch']
  %s0 = inlined_call_operand.hbm [shape: f32[2,4,16,16], index: 0, kind: input, shape index: {}]
  %s1 = inlined_call_operand.vmem [shape: f32[2,16,16,4], index: 1, kind: output, shape index: {}]
  %s2 = sld [smem:[#allocation0]]
  $region41: #{tpu_custom_call.1} parent=0
    _
  %s4 = ssub.s32 1, %s2
  %s5 = scalar_select 0, %s4, %s2
  $region1: #{tpu_custom_call.1} parent=0
    #allocation2 [shape = 'u8[65536]{0}', space=vmem, size = 0x10000, scoped, tag = 'input window, operand 0']
    #allocation3 [shape = 's32[2]{0}', space=sflag, size = 0x8, scoped, tag = 'scoped memory for tpu_custom_call.1']
    %6 = vsyncpa [#allocation3], 0
    %s7 = scalar_lea.sflag [#allocation3], 1
    %8 = vsyncpa %s7, 0
    loop: start=0, step=1, limit=4
    $region2: #{tpu_custom_call.1} parent=1 // loop_pre_header
      _
    $region3: #{tpu_custom_call.1} parent=1 // loop_header
      %s10 = sphi 0, %s14
      %p11 = scmp.ge.s32.totalorder %s10, 4
      %s20 = sphi 0, %s22
      %s23 = sphi 0, %s20
      %s24 = sphi 0, %s23
      %s40 = sphi 0, %s24
      %s46 = sphi 0, %s48
      %s49 = sphi 0, %s46
      %s50 = sphi 0, %s49
      %s66 = sphi 0, %s50
    $region4: #{tpu_custom_call.1} parent=1 // loop_header_branch
      %13 = sbr.rel (%p11) target = $region8
    $region5: #{tpu_custom_call.1} parent=1 // loop_body
      %s15 = ssub.s32 %s10, 1
      %s16 = ssub.s32 %s10, 2
      %s17 = sadd.s32 %s10, 1
      %s18 = ssub.s32 %s10, %s17
      %p19 = scmp.eq.s32.totalorder %s18, 0
      %s21 = sadd.s32 %s20, 1
      %s22 = scalar_select %p19, %s20, %s21
      %p25 = pneg %p19
      %p26 = scmp.eq.s32.totalorder %s10, 1
      %p27 = por %p25, %p26
      %p28 = scmp.ne.s32.totalorder %s20, %s23
      %p29 = scmp.eq.s32.totalorder %s10, 0
      %p30 = por %p28, %p29
      %p31 = scmp.ne.s32.totalorder %s20, %s23
      %p32 = scmp.eq.s32.totalorder %s15, 1
      %p33 = por %p31, %p32
      %p34 = scmp.ne.s32.totalorder %s23, %s24
      %p35 = scmp.eq.s32.totalorder %s15, 0
      %p36 = por %p34, %p35
      %p37 = scmp.ne.s32.totalorder %s23, %s24
      %p38 = scmp.eq.s32.totalorder %s16, 1
      %p39 = por %p37, %p38
      %p41 = scmp.ne.s32.totalorder %s24, %s40
      %p42 = scmp.eq.s32.totalorder %s16, 0
      %p43 = por %p41, %p42
      %s44 = ssub.s32 %s10, %s17
      %p45 = scmp.eq.s32.totalorder %s44, 0
      %s47 = sadd.s32 %s46, 1
      %s48 = scalar_select %p45, %s46, %s47
      %p51 = pneg %p45
      %p52 = scmp.eq.s32.totalorder %s10, 1
      %p53 = por %p51, %p52
      %p54 = scmp.ne.s32.totalorder %s46, %s49
      %p55 = scmp.eq.s32.totalorder %s10, 0
      %p56 = por %p54, %p55
      %p57 = scmp.ne.s32.totalorder %s46, %s49
      %p58 = scmp.eq.s32.totalorder %s15, 1
      %p59 = por %p57, %p58
      %p60 = scmp.ne.s32.totalorder %s49, %s50
      %p61 = scmp.eq.s32.totalorder %s15, 0
      %p62 = por %p60, %p61
      %p63 = scmp.ne.s32.totalorder %s49, %s50
      %p64 = scmp.eq.s32.totalorder %s16, 1
      %p65 = por %p63, %p64
      %p67 = scmp.ne.s32.totalorder %s50, %s66
      %p68 = scmp.eq.s32.totalorder %s16, 0
      %p69 = por %p67, %p68
      %p70 = scmp.le.s32.totalorder 1, %s10
      %p71 = scmp.lt.s32.totalorder %s10, 3
      %p72 = pnand %p70, %p71
      %p73 = pneg %p72
      // Predicated region
      $region9: #{tpu_custom_call.1} parent=5 // pred_check
        _
      $region10: #{tpu_custom_call.1} parent=5 // pred_check_branch
        %75 = sbr.rel (%p72) target = $region12
      $region11: #{tpu_custom_call.1} parent=5 // pred_region
        %s76 = ssub.s32 %s10, 1
      $region12: #{tpu_custom_call.1} parent=5 // pred_fallthru
        _
      %p77 = scmp.lt.s32.totalorder %s10, 2
      // Predicated region
      $region13: #{tpu_custom_call.1} parent=5 // pred_check
        %p78 = pneg %p77
      $region14: #{tpu_custom_call.1} parent=5 // pred_check_branch
        %80 = sbr.rel (%p78) target = $region16
      $region15: #{tpu_custom_call.1} parent=5 // pred_region
        // Predicated region
        $region17: #{tpu_custom_call.1} parent=15 // pred_check
          %p81 = pneg %p30
        $region18: #{tpu_custom_call.1} parent=15 // pred_check_branch
          %83 = sbr.rel (%p81) target = $region20
        $region19: #{tpu_custom_call.1} parent=15 // pred_region
          %s84 = sand.u32 %s20, 1
          %s85 = scalar_lea.sflag [#allocation3], %s84
          %s86 = sand.u32 %s20, 1
          %s87 = smul.addr %s86, 64
          %s88 = scalar_lea.vmem [#allocation2], %s87
          %s90 = ssub.s32 1024, 1024
          %91 = vsyncadd %s85, %s90
          %s92 = smul.addr %s10, 8
          %s93 = smul.addr %s92, 128
          %s94 = scalar_lea.hbm %s0, %s93
          %s95 = sshll.u32 %s88, 4
          %s96 = int_to_ptr.vmem [resolvable:$true] %s95
          %101 = dma.hbm_to_vmem [thread:$0]  %s94, 1024, %s96, %s85, 128, 128, 8
        $region20: #{tpu_custom_call.1} parent=15 // pred_fallthru
          _
      $region16: #{tpu_custom_call.1} parent=5 // pred_fallthru
        _
      %p102 = scmp.le.s32.totalorder 1, %s10
      %p103 = scmp.lt.s32.totalorder %s10, 3
      %p104 = pnand %p102, %p103
      %p105 = pneg %p104
      // Predicated region
      $region21: #{tpu_custom_call.1} parent=5 // pred_check
        _
      $region22: #{tpu_custom_call.1} parent=5 // pred_check_branch
        %107 = sbr.rel (%p104) target = $region24
      $region23: #{tpu_custom_call.1} parent=5 // pred_region
        %s108 = ssub.s32 %s10, 1
        %s109 = sand.u32 %s23, 1
        %s110 = scalar_lea.sflag [#allocation3], %s109
        %s111 = sand.u32 %s23, 1
        %s112 = smul.addr %s111, 64
        %s113 = scalar_lea.vmem [#allocation2], %s112
        // Predicated region
        $region25: #{tpu_custom_call.1} parent=23 // pred_check
          %p114 = pneg %p36
        $region26: #{tpu_custom_call.1} parent=23 // pred_check_branch
          %116 = sbr.rel (%p114) target = $region28
        $region27: #{tpu_custom_call.1} parent=23 // pred_region
          %117 = dma.done %s110, 1024
        $region28: #{tpu_custom_call.1} parent=23 // pred_fallthru
          _
        %s118 = sand.u32 %s23, 1
        %s119 = scalar_lea.sflag [#allocation3], %s118
        %s120 = sand.u32 %s23, 1
        %s121 = smul.addr %s120, 64
        %s122 = scalar_lea.vmem [#allocation2], %s121
        %p123 = pneg %p36
        %p124 = pneg %p33
        %p125 = pneg %p62
        %p126 = pneg %p59
        %p127 = scmp.lt.s32.totalorder %s15, 1
        %s128 = scalar_select %p127, %s15, 1
        %s129 = smul.addr %s128, 32
        %s130 = smul.addr %s129, 8
        %s131 = scalar_lea.vmem %s1, %s130
        %p132 = scmp.lt.s32.totalorder %s15, 1
        %s133 = scalar_select %p132, %s15, 1
        %s134 = smul.addr %s133, 32
        %s135 = smul.addr %s134, 8
        %s136 = scalar_lea.vmem %s1, %s135
        %v137 = vld [vmem:[%s113] sm:$0xff]
        %v138 = vld [vmem:[%s113 + $0x8] sm:$0xff]
        %v139 = vld [vmem:[%s113 + $0x10] sm:$0xff]
        %v140 = vld [vmem:[%s113 + $0x18] sm:$0xff]
        %v141 = vld [vmem:[%s113 + $0x20] sm:$0xff]
        %v142 = vld [vmem:[%s113 + $0x28] sm:$0xff]
        %v143 = vld [vmem:[%s113 + $0x30] sm:$0xff]
        %v144 = vld [vmem:[%s113 + $0x38] sm:$0xff]
        %145 = vxpose.xlu0.b32.start [1/16] %v137, 128
        %146 = vxpose.xlu0.b32.cont [2/16] %v138, 128
        %147 = vxpose.xlu0.b32.cont [3/16] 0.0, 128
        %148 = vxpose.xlu0.b32.cont [4/16] 0.0, 128
        %149 = vxpose.xlu0.b32.cont [5/16] 0.0, 128
        %150 = vxpose.xlu0.b32.cont [6/16] 0.0, 128
        %151 = vxpose.xlu0.b32.cont [7/16] 0.0, 128
        %152 = vxpose.xlu0.b32.cont [8/16] 0.0, 128
        %153 = vxpose.xlu0.b32.cont [9/16] 0.0, 128
        %154 = vxpose.xlu0.b32.cont [10/16] 0.0, 128
        %155 = vxpose.xlu0.b32.cont [11/16] 0.0, 128
        %156 = vxpose.xlu0.b32.cont [12/16] 0.0, 128
        %157 = vxpose.xlu0.b32.cont [13/16] 0.0, 128
        %158 = vxpose.xlu0.b32.cont [14/16] 0.0, 128
        %159 = vxpose.xlu0.b32.cont [15/16] 0.0, 128
        %160 = vxpose.xlu0.b32.end [16/16] 0.0, 128
        %v161 = vpop.trf.xlu0
        %v162 = vpop.trf.xlu0
        %v163 = vpop.trf.xlu0
        %v164 = vpop.trf.xlu0
        %v165 = vpop.trf.xlu0
        %v166 = vpop.trf.xlu0
        %v167 = vpop.trf.xlu0
        %v168 = vpop.trf.xlu0
        %v169 = vpop.trf.xlu0
        %v170 = vpop.trf.xlu0
        %v171 = vpop.trf.xlu0
        %v172 = vpop.trf.xlu0
        %v173 = vpop.trf.xlu0
        %v174 = vpop.trf.xlu0
        %v175 = vpop.trf.xlu0
        %v176 = vpop.trf.xlu0
        %177 = vxpose.xlu0.b32.start [1/16] %v139, 128
        %178 = vxpose.xlu0.b32.cont [2/16] %v140, 128
        %179 = vxpose.xlu0.b32.cont [3/16] 0.0, 128
        %180 = vxpose.xlu0.b32.cont [4/16] 0.0, 128
        %181 = vxpose.xlu0.b32.cont [5/16] 0.0, 128
        %182 = vxpose.xlu0.b32.cont [6/16] 0.0, 128
        %183 = vxpose.xlu0.b32.cont [7/16] 0.0, 128
        %184 = vxpose.xlu0.b32.cont [8/16] 0.0, 128
        %185 = vxpose.xlu0.b32.cont [9/16] 0.0, 128
        %186 = vxpose.xlu0.b32.cont [10/16] 0.0, 128
        %187 = vxpose.xlu0.b32.cont [11/16] 0.0, 128
        %188 = vxpose.xlu0.b32.cont [12/16] 0.0, 128
        %189 = vxpose.xlu0.b32.cont [13/16] 0.0, 128
        %190 = vxpose.xlu0.b32.cont [14/16] 0.0, 128
        %191 = vxpose.xlu0.b32.cont [15/16] 0.0, 128
        %192 = vxpose.xlu0.b32.end [16/16] 0.0, 128
        %v193 = vpop.trf.xlu0
        %v194 = vpop.trf.xlu0
        %v195 = vpop.trf.xlu0
        %v196 = vpop.trf.xlu0
        %v197 = vpop.trf.xlu0
        %v198 = vpop.trf.xlu0
        %v199 = vpop.trf.xlu0
        %v200 = vpop.trf.xlu0
        %v201 = vpop.trf.xlu0
        %v202 = vpop.trf.xlu0
        %v203 = vpop.trf.xlu0
        %v204 = vpop.trf.xlu0
        %v205 = vpop.trf.xlu0
        %v206 = vpop.trf.xlu0
        %v207 = vpop.trf.xlu0
        %v208 = vpop.trf.xlu0
        %209 = vxpose.xlu0.b32.start [1/16] %v141, 128
        %210 = vxpose.xlu0.b32.cont [2/16] %v142, 128
        %211 = vxpose.xlu0.b32.cont [3/16] 0.0, 128
        %212 = vxpose.xlu0.b32.cont [4/16] 0.0, 128
        %213 = vxpose.xlu0.b32.cont [5/16] 0.0, 128
        %214 = vxpose.xlu0.b32.cont [6/16] 0.0, 128
        %215 = vxpose.xlu0.b32.cont [7/16] 0.0, 128
        %216 = vxpose.xlu0.b32.cont [8/16] 0.0, 128
        %217 = vxpose.xlu0.b32.cont [9/16] 0.0, 128
        %218 = vxpose.xlu0.b32.cont [10/16] 0.0, 128
        %219 = vxpose.xlu0.b32.cont [11/16] 0.0, 128
        %220 = vxpose.xlu0.b32.cont [12/16] 0.0, 128
        %221 = vxpose.xlu0.b32.cont [13/16] 0.0, 128
        %222 = vxpose.xlu0.b32.cont [14/16] 0.0, 128
        %223 = vxpose.xlu0.b32.cont [15/16] 0.0, 128
        %224 = vxpose.xlu0.b32.end [16/16] 0.0, 128
        %v225 = vpop.trf.xlu0
        %v226 = vpop.trf.xlu0
        %v227 = vpop.trf.xlu0
        %v228 = vpop.trf.xlu0
        %v229 = vpop.trf.xlu0
        %v230 = vpop.trf.xlu0
        %v231 = vpop.trf.xlu0
        %v232 = vpop.trf.xlu0
        %v233 = vpop.trf.xlu0
        %v234 = vpop.trf.xlu0
        %v235 = vpop.trf.xlu0
        %v236 = vpop.trf.xlu0
        %v237 = vpop.trf.xlu0
        %v238 = vpop.trf.xlu0
        %v239 = vpop.trf.xlu0
        %v240 = vpop.trf.xlu0
        %241 = vxpose.xlu0.b32.start [1/16] %v143, 128
        %242 = vxpose.xlu0.b32.cont [2/16] %v144, 128
        %243 = vxpose.xlu0.b32.cont [3/16] 0.0, 128
        %244 = vxpose.xlu0.b32.cont [4/16] 0.0, 128
        %245 = vxpose.xlu0.b32.cont [5/16] 0.0, 128
        %246 = vxpose.xlu0.b32.cont [6/16] 0.0, 128
        %247 = vxpose.xlu0.b32.cont [7/16] 0.0, 128
        %248 = vxpose.xlu0.b32.cont [8/16] 0.0, 128
        %249 = vxpose.xlu0.b32.cont [9/16] 0.0, 128
        %250 = vxpose.xlu0.b32.cont [10/16] 0.0, 128
        %251 = vxpose.xlu0.b32.cont [11/16] 0.0, 128
        %252 = vxpose.xlu0.b32.cont [12/16] 0.0, 128
        %253 = vxpose.xlu0.b32.cont [13/16] 0.0, 128
        %254 = vxpose.xlu0.b32.cont [14/16] 0.0, 128
        %255 = vxpose.xlu0.b32.cont [15/16] 0.0, 128
        %256 = vxpose.xlu0.b32.end [16/16] 0.0, 128
        %v257 = vpop.trf.xlu0
        %v258 = vpop.trf.xlu0
        %v259 = vpop.trf.xlu0
        %v260 = vpop.trf.xlu0
        %v261 = vpop.trf.xlu0
        %v262 = vpop.trf.xlu0
        %v263 = vpop.trf.xlu0
        %v264 = vpop.trf.xlu0
        %v265 = vpop.trf.xlu0
        %v266 = vpop.trf.xlu0
        %v267 = vpop.trf.xlu0
        %v268 = vpop.trf.xlu0
        %v269 = vpop.trf.xlu0
        %v270 = vpop.trf.xlu0
        %v271 = vpop.trf.xlu0
        %v272 = vpop.trf.xlu0
        %v273 = vcombine.low %v161, %v225
        %v274 = vcombine.high %v161, %v225
        %v276 = vunpack.c.l.s4 1983009808
        %v277 = vunpack.c.0.s8 %v276
        %v278 = vlaneseq
        %v279 = vshrl.u32 %v278, 7
        %v280 = vsub.s32 %v277, %v279
        %v281 = vrot.slane %v273, %v280
        %v283 = vunpack.c.l.s4 1983009808
        %v284 = vunpack.c.0.s8 %v283
        %v285 = vlaneseq
        %v286 = vshrl.u32 %v285, 7
        %v287 = vsub.s32 %v284, %v286
        %v288 = vrot.slane %v274, %v287
        %v289 = vcombine.low %v193, %v257
        %v290 = vcombine.high %v193, %v257
        %v292 = vunpack.c.l.s4 1983009808
        %v293 = vunpack.c.0.s8 %v292
        %v294 = vlaneseq
        %v295 = vshrl.u32 %v294, 7
        %v296 = vsub.s32 %v293, %v295
        %v297 = vrot.slane %v289, %v296
        %v299 = vunpack.c.l.s4 1983009808
        %v300 = vunpack.c.0.s8 %v299
        %v301 = vlaneseq
        %v302 = vshrl.u32 %v301, 7
        %v303 = vsub.s32 %v300, %v302
        %v304 = vrot.slane %v290, %v303
        %v305 = vcombine.low %v281, %v297
        %v306 = vcombine.high %v281, %v297
        %v308 = vunpack.c.l.s4 1934713408
        %v309 = vunpack.c.0.s8 %v308
        %v310 = vlaneseq
        %v311 = vshrl.u32 %v310, 7
        %v312 = vsub.s32 %v309, %v311
        %v313 = vrot.slane %v305, %v312
        %v315 = vunpack.c.l.s4 1934713408
        %v316 = vunpack.c.0.s8 %v315
        %v317 = vlaneseq
        %v318 = vshrl.u32 %v317, 7
        %v319 = vsub.s32 %v316, %v318
        %v320 = vrot.slane %v306, %v319
        %v321 = vcombine.low %v288, %v304
        %v322 = vcombine.high %v288, %v304
        %v324 = vunpack.c.l.s4 1934713408
        %v325 = vunpack.c.0.s8 %v324
        %v326 = vlaneseq
        %v327 = vshrl.u32 %v326, 7
        %v328 = vsub.s32 %v325, %v327
        %v329 = vrot.slane %v321, %v328
        %v331 = vunpack.c.l.s4 1934713408
        %v332 = vunpack.c.0.s8 %v331
        %v333 = vlaneseq
        %v334 = vshrl.u32 %v333, 7
        %v335 = vsub.s32 %v332, %v334
        %v336 = vrot.slane %v322, %v335
        %v337 = vcombine.high %v313, 0.0
        %v338 = vcombine.high %v320, 0.0
        %v339 = vcombine.high %v329, 0.0
        %v340 = vcombine.high %v336, 0.0
        %v341 = vcombine.low %v162, %v226
        %v342 = vcombine.high %v162, %v226
        %v344 = vunpack.c.l.s4 1983009808
        %v345 = vunpack.c.0.s8 %v344
        %v346 = vlaneseq
        %v347 = vshrl.u32 %v346, 7
        %v348 = vsub.s32 %v345, %v347
        %v349 = vrot.slane %v341, %v348
        %v351 = vunpack.c.l.s4 1983009808
        %v352 = vunpack.c.0.s8 %v351
        %v353 = vlaneseq
        %v354 = vshrl.u32 %v353, 7
        %v355 = vsub.s32 %v352, %v354
        %v356 = vrot.slane %v342, %v355
        %v357 = vcombine.low %v194, %v258
        %v358 = vcombine.high %v194, %v258
        %v360 = vunpack.c.l.s4 1983009808
        %v361 = vunpack.c.0.s8 %v360
        %v362 = vlaneseq
        %v363 = vshrl.u32 %v362, 7
        %v364 = vsub.s32 %v361, %v363
        %v365 = vrot.slane %v357, %v364
        %v367 = vunpack.c.l.s4 1983009808
        %v368 = vunpack.c.0.s8 %v367
        %v369 = vlaneseq
        %v370 = vshrl.u32 %v369, 7
        %v371 = vsub.s32 %v368, %v370
        %v372 = vrot.slane %v358, %v371
        %v373 = vcombine.low %v349, %v365
        %v374 = vcombine.high %v349, %v365
        %v376 = vunpack.c.l.s4 1934713408
        %v377 = vunpack.c.0.s8 %v376
        %v378 = vlaneseq
        %v379 = vshrl.u32 %v378, 7
        %v380 = vsub.s32 %v377, %v379
        %v381 = vrot.slane %v373, %v380
        %v383 = vunpack.c.l.s4 1934713408
        %v384 = vunpack.c.0.s8 %v383
        %v385 = vlaneseq
        %v386 = vshrl.u32 %v385, 7
        %v387 = vsub.s32 %v384, %v386
        %v388 = vrot.slane %v374, %v387
        %v389 = vcombine.low %v356, %v372
        %v390 = vcombine.high %v356, %v372
        %v392 = vunpack.c.l.s4 1934713408
        %v393 = vunpack.c.0.s8 %v392
        %v394 = vlaneseq
        %v395 = vshrl.u32 %v394, 7
        %v396 = vsub.s32 %v393, %v395
        %v397 = vrot.slane %v389, %v396
        %v399 = vunpack.c.l.s4 1934713408
        %v400 = vunpack.c.0.s8 %v399
        %v401 = vlaneseq
        %v402 = vshrl.u32 %v401, 7
        %v403 = vsub.s32 %v400, %v402
        %v404 = vrot.slane %v390, %v403
        %v405 = vcombine.high %v381, 0.0
        %v406 = vcombine.high %v388, 0.0
        %v407 = vcombine.high %v397, 0.0
        %v408 = vcombine.high %v404, 0.0
        %409 = vxpose.xlu0.b32.start [1/16] %v313, 128
        %410 = vxpose.xlu0.b32.cont [2/16] 0.0, 128
        %411 = vxpose.xlu0.b32.cont [3/16] 0.0, 128
        %412 = vxpose.xlu0.b32.cont [4/16] 0.0, 128
        %413 = vxpose.xlu0.b32.cont [5/16] 0.0, 128
        %414 = vxpose.xlu0.b32.cont [6/16] 0.0, 128
        %415 = vxpose.xlu0.b32.cont [7/16] 0.0, 128
        %416 = vxpose.xlu0.b32.cont [8/16] 0.0, 128
        %417 = vxpose.xlu0.b32.cont [9/16] 0.0, 128
        %418 = vxpose.xlu0.b32.cont [10/16] 0.0, 128
        %419 = vxpose.xlu0.b32.cont [11/16] 0.0, 128
        %420 = vxpose.xlu0.b32.cont [12/16] 0.0, 128
        %421 = vxpose.xlu0.b32.cont [13/16] 0.0, 128
        %422 = vxpose.xlu0.b32.cont [14/16] 0.0, 128
        %423 = vxpose.xlu0.b32.cont [15/16] 0.0, 128
        %424 = vxpose.xlu0.b32.end [16/16] 0.0, 128
        %v425 = vpop.trf.xlu0
        %v426 = vpop.trf.xlu0
        %v427 = vpop.trf.xlu0
        %v428 = vpop.trf.xlu0
        %v429 = vpop.trf.xlu0
        %v430 = vpop.trf.xlu0
        %v431 = vpop.trf.xlu0
        %v432 = vpop.trf.xlu0
        %v433 = vpop.trf.xlu0
        %v434 = vpop.trf.xlu0
        %v435 = vpop.trf.xlu0
        %v436 = vpop.trf.xlu0
        %v437 = vpop.trf.xlu0
        %v438 = vpop.trf.xlu0
        %v439 = vpop.trf.xlu0
        %v440 = vpop.trf.xlu0
        %441 = vxpose.xlu0.b32.start [1/16] %v337, 128
        %442 = vxpose.xlu0.b32.cont [2/16] 0.0, 128
        %443 = vxpose.xlu0.b32.cont [3/16] 0.0, 128
        %444 = vxpose.xlu0.b32.cont [4/16] 0.0, 128
        %445 = vxpose.xlu0.b32.cont [5/16] 0.0, 128
        %446 = vxpose.xlu0.b32.cont [6/16] 0.0, 128
        %447 = vxpose.xlu0.b32.cont [7/16] 0.0, 128
        %448 = vxpose.xlu0.b32.cont [8/16] 0.0, 128
        %449 = vxpose.xlu0.b32.cont [9/16] 0.0, 128
        %450 = vxpose.xlu0.b32.cont [10/16] 0.0, 128
        %451 = vxpose.xlu0.b32.cont [11/16] 0.0, 128
        %452 = vxpose.xlu0.b32.cont [12/16] 0.0, 128
        %453 = vxpose.xlu0.b32.cont [13/16] 0.0, 128
        %454 = vxpose.xlu0.b32.cont [14/16] 0.0, 128
        %455 = vxpose.xlu0.b32.cont [15/16] 0.0, 128
        %456 = vxpose.xlu0.b32.end [16/16] 0.0, 128
        %v457 = vpop.trf.xlu0
        %v458 = vpop.trf.xlu0
        %v459 = vpop.trf.xlu0
        %v460 = vpop.trf.xlu0
        %v461 = vpop.trf.xlu0
        %v462 = vpop.trf.xlu0
        %v463 = vpop.trf.xlu0
        %v464 = vpop.trf.xlu0
        %v465 = vpop.trf.xlu0
        %v466 = vpop.trf.xlu0
        %v467 = vpop.trf.xlu0
        %v468 = vpop.trf.xlu0
        %v469 = vpop.trf.xlu0
        %v470 = vpop.trf.xlu0
        %v471 = vpop.trf.xlu0
        %v472 = vpop.trf.xlu0
        %473 = vxpose.xlu0.b32.start [1/16] %v320, 128
        %474 = vxpose.xlu0.b32.cont [2/16] 0.0, 128
        %475 = vxpose.xlu0.b32.cont [3/16] 0.0, 128
        %476 = vxpose.xlu0.b32.cont [4/16] 0.0, 128
        %477 = vxpose.xlu0.b32.cont [5/16] 0.0, 128
        %478 = vxpose.xlu0.b32.cont [6/16] 0.0, 128
        %479 = vxpose.xlu0.b32.cont [7/16] 0.0, 128
        %480 = vxpose.xlu0.b32.cont [8/16] 0.0, 128
        %481 = vxpose.xlu0.b32.cont [9/16] 0.0, 128
        %482 = vxpose.xlu0.b32.cont [10/16] 0.0, 128
        %483 = vxpose.xlu0.b32.cont [11/16] 0.0, 128
        %484 = vxpose.xlu0.b32.cont [12/16] 0.0, 128
        %485 = vxpose.xlu0.b32.cont [13/16] 0.0, 128
        %486 = vxpose.xlu0.b32.cont [14/16] 0.0, 128
        %487 = vxpose.xlu0.b32.cont [15/16] 0.0, 128
        %488 = vxpose.xlu0.b32.end [16/16] 0.0, 128
        %v489 = vpop.trf.xlu0
        %v490 = vpop.trf.xlu0
        %v491 = vpop.trf.xlu0
        %v492 = vpop.trf.xlu0
        %v493 = vpop.trf.xlu0
        %v494 = vpop.trf.xlu0
        %v495 = vpop.trf.xlu0
        %v496 = vpop.trf.xlu0
        %v497 = vpop.trf.xlu0
        %v498 = vpop.trf.xlu0
        %v499 = vpop.trf.xlu0
        %v500 = vpop.trf.xlu0
        %v501 = vpop.trf.xlu0
        %v502 = vpop.trf.xlu0
        %v503 = vpop.trf.xlu0
        %v504 = vpop.trf.xlu0
        %505 = vxpose.xlu0.b32.start [1/16] %v338, 128
        %506 = vxpose.xlu0.b32.cont [2/16] 0.0, 128
        %507 = vxpose.xlu0.b32.cont [3/16] 0.0, 128
        %508 = vxpose.xlu0.b32.cont [4/16] 0.0, 128
        %509 = vxpose.xlu0.b32.cont [5/16] 0.0, 128
        %510 = vxpose.xlu0.b32.cont [6/16] 0.0, 128
        %511 = vxpose.xlu0.b32.cont [7/16] 0.0, 128
        %512 = vxpose.xlu0.b32.cont [8/16] 0.0, 128
        %513 = vxpose.xlu0.b32.cont [9/16] 0.0, 128
        %514 = vxpose.xlu0.b32.cont [10/16] 0.0, 128
        %515 = vxpose.xlu0.b32.cont [11/16] 0.0, 128
        %516 = vxpose.xlu0.b32.cont [12/16] 0.0, 128
        %517 = vxpose.xlu0.b32.cont [13/16] 0.0, 128
        %518 = vxpose.xlu0.b32.cont [14/16] 0.0, 128
        %519 = vxpose.xlu0.b32.cont [15/16] 0.0, 128
        %520 = vxpose.xlu0.b32.end [16/16] 0.0, 128
        %v521 = vpop.trf.xlu0
        %v522 = vpop.trf.xlu0
        %v523 = vpop.trf.xlu0
        %v524 = vpop.trf.xlu0
        %v525 = vpop.trf.xlu0
        %v526 = vpop.trf.xlu0
        %v527 = vpop.trf.xlu0
        %v528 = vpop.trf.xlu0
        %v529 = vpop.trf.xlu0
        %v530 = vpop.trf.xlu0
        %v531 = vpop.trf.xlu0
        %v532 = vpop.trf.xlu0
        %v533 = vpop.trf.xlu0
        %v534 = vpop.trf.xlu0
        %v535 = vpop.trf.xlu0
        %v536 = vpop.trf.xlu0
        %537 = vxpose.xlu0.b32.start [1/16] %v329, 128
        %538 = vxpose.xlu0.b32.cont [2/16] 0.0, 128
        %539 = vxpose.xlu0.b32.cont [3/16] 0.0, 128
        %540 = vxpose.xlu0.b32.cont [4/16] 0.0, 128
        %541 = vxpose.xlu0.b32.cont [5/16] 0.0, 128
        %542 = vxpose.xlu0.b32.cont [6/16] 0.0, 128
        %543 = vxpose.xlu0.b32.cont [7/16] 0.0, 128
        %544 = vxpose.xlu0.b32.cont [8/16] 0.0, 128
        %545 = vxpose.xlu0.b32.cont [9/16] 0.0, 128
        %546 = vxpose.xlu0.b32.cont [10/16] 0.0, 128
        %547 = vxpose.xlu0.b32.cont [11/16] 0.0, 128
        %548 = vxpose.xlu0.b32.cont [12/16] 0.0, 128
        %549 = vxpose.xlu0.b32.cont [13/16] 0.0, 128
        %550 = vxpose.xlu0.b32.cont [14/16] 0.0, 128
        %551 = vxpose.xlu0.b32.cont [15/16] 0.0, 128
        %552 = vxpose.xlu0.b32.end [16/16] 0.0, 128
        %v553 = vpop.trf.xlu0
        %v554 = vpop.trf.xlu0
        %v555 = vpop.trf.xlu0
        %v556 = vpop.trf.xlu0
        %v557 = vpop.trf.xlu0
        %v558 = vpop.trf.xlu0
        %v559 = vpop.trf.xlu0
        %v560 = vpop.trf.xlu0
        %v561 = vpop.trf.xlu0
        %v562 = vpop.trf.xlu0
        %v563 = vpop.trf.xlu0
        %v564 = vpop.trf.xlu0
        %v565 = vpop.trf.xlu0
        %v566 = vpop.trf.xlu0
        %v567 = vpop.trf.xlu0
        %v568 = vpop.trf.xlu0
        %569 = vxpose.xlu0.b32.start [1/16] %v339, 128
        %570 = vxpose.xlu0.b32.cont [2/16] 0.0, 128
        %571 = vxpose.xlu0.b32.cont [3/16] 0.0, 128
        %572 = vxpose.xlu0.b32.cont [4/16] 0.0, 128
        %573 = vxpose.xlu0.b32.cont [5/16] 0.0, 128
        %574 = vxpose.xlu0.b32.cont [6/16] 0.0, 128
        %575 = vxpose.xlu0.b32.cont [7/16] 0.0, 128
        %576 = vxpose.xlu0.b32.cont [8/16] 0.0, 128
        %577 = vxpose.xlu0.b32.cont [9/16] 0.0, 128
        %578 = vxpose.xlu0.b32.cont [10/16] 0.0, 128
        %579 = vxpose.xlu0.b32.cont [11/16] 0.0, 128
        %580 = vxpose.xlu0.b32.cont [12/16] 0.0, 128
        %581 = vxpose.xlu0.b32.cont [13/16] 0.0, 128
        %582 = vxpose.xlu0.b32.cont [14/16] 0.0, 128
        %583 = vxpose.xlu0.b32.cont [15/16] 0.0, 128
        %584 = vxpose.xlu0.b32.end [16/16] 0.0, 128
        %v585 = vpop.trf.xlu0
        %v586 = vpop.trf.xlu0
        %v587 = vpop.trf.xlu0
        %v588 = vpop.trf.xlu0
        %v589 = vpop.trf.xlu0
        %v590 = vpop.trf.xlu0
        %v591 = vpop.trf.xlu0
        %v592 = vpop.trf.xlu0
        %v593 = vpop.trf.xlu0
        %v594 = vpop.trf.xlu0
        %v595 = vpop.trf.xlu0
        %v596 = vpop.trf.xlu0
        %v597 = vpop.trf.xlu0
        %v598 = vpop.trf.xlu0
        %v599 = vpop.trf.xlu0
        %v600 = vpop.trf.xlu0
        %601 = vxpose.xlu0.b32.start [1/16] %v336, 128
        %602 = vxpose.xlu0.b32.cont [2/16] 0.0, 128
        %603 = vxpose.xlu0.b32.cont [3/16] 0.0, 128
        %604 = vxpose.xlu0.b32.cont [4/16] 0.0, 128
        %605 = vxpose.xlu0.b32.cont [5/16] 0.0, 128
        %606 = vxpose.xlu0.b32.cont [6/16] 0.0, 128
        %607 = vxpose.xlu0.b32.cont [7/16] 0.0, 128
        %608 = vxpose.xlu0.b32.cont [8/16] 0.0, 128
        %609 = vxpose.xlu0.b32.cont [9/16] 0.0, 128
        %610 = vxpose.xlu0.b32.cont [10/16] 0.0, 128
        %611 = vxpose.xlu0.b32.cont [11/16] 0.0, 128
        %612 = vxpose.xlu0.b32.cont [12/16] 0.0, 128
        %613 = vxpose.xlu0.b32.cont [13/16] 0.0, 128
        %614 = vxpose.xlu0.b32.cont [14/16] 0.0, 128
        %615 = vxpose.xlu0.b32.cont [15/16] 0.0, 128
        %616 = vxpose.xlu0.b32.end [16/16] 0.0, 128
        %v617 = vpop.trf.xlu0
        %v618 = vpop.trf.xlu0
        %v619 = vpop.trf.xlu0
        %v620 = vpop.trf.xlu0
        %v621 = vpop.trf.xlu0
        %v622 = vpop.trf.xlu0
        %v623 = vpop.trf.xlu0
        %v624 = vpop.trf.xlu0
        %v625 = vpop.trf.xlu0
        %v626 = vpop.trf.xlu0
        %v627 = vpop.trf.xlu0
        %v628 = vpop.trf.xlu0
        %v629 = vpop.trf.xlu0
        %v630 = vpop.trf.xlu0
        %v631 = vpop.trf.xlu0
        %v632 = vpop.trf.xlu0
        %633 = vxpose.xlu0.b32.start [1/16] %v340, 128
        %634 = vxpose.xlu0.b32.cont [2/16] 0.0, 128
        %635 = vxpose.xlu0.b32.cont [3/16] 0.0, 128
        %636 = vxpose.xlu0.b32.cont [4/16] 0.0, 128
        %637 = vxpose.xlu0.b32.cont [5/16] 0.0, 128
        %638 = vxpose.xlu0.b32.cont [6/16] 0.0, 128
        %639 = vxpose.xlu0.b32.cont [7/16] 0.0, 128
        %640 = vxpose.xlu0.b32.cont [8/16] 0.0, 128
        %641 = vxpose.xlu0.b32.cont [9/16] 0.0, 128
        %642 = vxpose.xlu0.b32.cont [10/16] 0.0, 128
        %643 = vxpose.xlu0.b32.cont [11/16] 0.0, 128
        %644 = vxpose.xlu0.b32.cont [12/16] 0.0, 128
        %645 = vxpose.xlu0.b32.cont [13/16] 0.0, 128
        %646 = vxpose.xlu0.b32.cont [14/16] 0.0, 128
        %647 = vxpose.xlu0.b32.cont [15/16] 0.0, 128
        %648 = vxpose.xlu0.b32.end [16/16] 0.0, 128
        %v649 = vpop.trf.xlu0
        %v650 = vpop.trf.xlu0
        %v651 = vpop.trf.xlu0
        %v652 = vpop.trf.xlu0
        %v653 = vpop.trf.xlu0
        %v654 = vpop.trf.xlu0
        %v655 = vpop.trf.xlu0
        %v656 = vpop.trf.xlu0
        %v657 = vpop.trf.xlu0
        %v658 = vpop.trf.xlu0
        %v659 = vpop.trf.xlu0
        %v660 = vpop.trf.xlu0
        %v661 = vpop.trf.xlu0
        %v662 = vpop.trf.xlu0
        %v663 = vpop.trf.xlu0
        %v664 = vpop.trf.xlu0
        %665 = vxpose.xlu0.b32.start [1/16] %v381, 128
        %666 = vxpose.xlu0.b32.cont [2/16] 0.0, 128
        %667 = vxpose.xlu0.b32.cont [3/16] 0.0, 128
        %668 = vxpose.xlu0.b32.cont [4/16] 0.0, 128
        %669 = vxpose.xlu0.b32.cont [5/16] 0.0, 128
        %670 = vxpose.xlu0.b32.cont [6/16] 0.0, 128
        %671 = vxpose.xlu0.b32.cont [7/16] 0.0, 128
        %672 = vxpose.xlu0.b32.cont [8/16] 0.0, 128
        %673 = vxpose.xlu0.b32.cont [9/16] 0.0, 128
        %674 = vxpose.xlu0.b32.cont [10/16] 0.0, 128
        %675 = vxpose.xlu0.b32.cont [11/16] 0.0, 128
        %676 = vxpose.xlu0.b32.cont [12/16] 0.0, 128
        %677 = vxpose.xlu0.b32.cont [13/16] 0.0, 128
        %678 = vxpose.xlu0.b32.cont [14/16] 0.0, 128
        %679 = vxpose.xlu0.b32.cont [15/16] 0.0, 128
        %680 = vxpose.xlu0.b32.end [16/16] 0.0, 128
        %v681 = vpop.trf.xlu0
        %v682 = vpop.trf.xlu0
        %v683 = vpop.trf.xlu0
        %v684 = vpop.trf.xlu0
        %v685 = vpop.trf.xlu0
        %v686 = vpop.trf.xlu0
        %v687 = vpop.trf.xlu0
        %v688 = vpop.trf.xlu0
        %v689 = vpop.trf.xlu0
        %v690 = vpop.trf.xlu0
        %v691 = vpop.trf.xlu0
        %v692 = vpop.trf.xlu0
        %v693 = vpop.trf.xlu0
        %v694 = vpop.trf.xlu0
        %v695 = vpop.trf.xlu0
        %v696 = vpop.trf.xlu0
        %697 = vxpose.xlu0.b32.start [1/16] %v405, 128
        %698 = vxpose.xlu0.b32.cont [2/16] 0.0, 128
        %699 = vxpose.xlu0.b32.cont [3/16] 0.0, 128
        %700 = vxpose.xlu0.b32.cont [4/16] 0.0, 128
        %701 = vxpose.xlu0.b32.cont [5/16] 0.0, 128
        %702 = vxpose.xlu0.b32.cont [6/16] 0.0, 128
        %703 = vxpose.xlu0.b32.cont [7/16] 0.0, 128
        %704 = vxpose.xlu0.b32.cont [8/16] 0.0, 128
        %705 = vxpose.xlu0.b32.cont [9/16] 0.0, 128
        %706 = vxpose.xlu0.b32.cont [10/16] 0.0, 128
        %707 = vxpose.xlu0.b32.cont [11/16] 0.0, 128
        %708 = vxpose.xlu0.b32.cont [12/16] 0.0, 128
        %709 = vxpose.xlu0.b32.cont [13/16] 0.0, 128
        %710 = vxpose.xlu0.b32.cont [14/16] 0.0, 128
        %711 = vxpose.xlu0.b32.cont [15/16] 0.0, 128
        %712 = vxpose.xlu0.b32.end [16/16] 0.0, 128
        %v713 = vpop.trf.xlu0
        %v714 = vpop.trf.xlu0
        %v715 = vpop.trf.xlu0
        %v716 = vpop.trf.xlu0
        %v717 = vpop.trf.xlu0
        %v718 = vpop.trf.xlu0
        %v719 = vpop.trf.xlu0
        %v720 = vpop.trf.xlu0
        %v721 = vpop.trf.xlu0
        %v722 = vpop.trf.xlu0
        %v723 = vpop.trf.xlu0
        %v724 = vpop.trf.xlu0
        %v725 = vpop.trf.xlu0
        %v726 = vpop.trf.xlu0
        %v727 = vpop.trf.xlu0
        %v728 = vpop.trf.xlu0
        %729 = vxpose.xlu0.b32.start [1/16] %v388, 128
        %730 = vxpose.xlu0.b32.cont [2/16] 0.0, 128
        %731 = vxpose.xlu0.b32.cont [3/16] 0.0, 128
        %732 = vxpose.xlu0.b32.cont [4/16] 0.0, 128
        %733 = vxpose.xlu0.b32.cont [5/16] 0.0, 128
        %734 = vxpose.xlu0.b32.cont [6/16] 0.0, 128
        %735 = vxpose.xlu0.b32.cont [7/16] 0.0, 128
        %736 = vxpose.xlu0.b32.cont [8/16] 0.0, 128
        %737 = vxpose.xlu0.b32.cont [9/16] 0.0, 128
        %738 = vxpose.xlu0.b32.cont [10/16] 0.0, 128
        %739 = vxpose.xlu0.b32.cont [11/16] 0.0, 128
        %740 = vxpose.xlu0.b32.cont [12/16] 0.0, 128
        %741 = vxpose.xlu0.b32.cont [13/16] 0.0, 128
        %742 = vxpose.xlu0.b32.cont [14/16] 0.0, 128
        %743 = vxpose.xlu0.b32.cont [15/16] 0.0, 128
        %744 = vxpose.xlu0.b32.end [16/16] 0.0, 128
        %v745 = vpop.trf.xlu0
        %v746 = vpop.trf.xlu0
        %v747 = vpop.trf.xlu0
        %v748 = vpop.trf.xlu0
        %v749 = vpop.trf.xlu0
        %v750 = vpop.trf.xlu0
        %v751 = vpop.trf.xlu0
        %v752 = vpop.trf.xlu0
        %v753 = vpop.trf.xlu0
        %v754 = vpop.trf.xlu0
        %v755 = vpop.trf.xlu0
        %v756 = vpop.trf.xlu0
        %v757 = vpop.trf.xlu0
        %v758 = vpop.trf.xlu0
        %v759 = vpop.trf.xlu0
        %v760 = vpop.trf.xlu0
        %761 = vxpose.xlu0.b32.start [1/16] %v406, 128
        %762 = vxpose.xlu0.b32.cont [2/16] 0.0, 128
        %763 = vxpose.xlu0.b32.cont [3/16] 0.0, 128
        %764 = vxpose.xlu0.b32.cont [4/16] 0.0, 128
        %765 = vxpose.xlu0.b32.cont [5/16] 0.0, 128
        %766 = vxpose.xlu0.b32.cont [6/16] 0.0, 128
        %767 = vxpose.xlu0.b32.cont [7/16] 0.0, 128
        %768 = vxpose.xlu0.b32.cont [8/16] 0.0, 128
        %769 = vxpose.xlu0.b32.cont [9/16] 0.0, 128
        %770 = vxpose.xlu0.b32.cont [10/16] 0.0, 128
        %771 = vxpose.xlu0.b32.cont [11/16] 0.0, 128
        %772 = vxpose.xlu0.b32.cont [12/16] 0.0, 128
        %773 = vxpose.xlu0.b32.cont [13/16] 0.0, 128
        %774 = vxpose.xlu0.b32.cont [14/16] 0.0, 128
        %775 = vxpose.xlu0.b32.cont [15/16] 0.0, 128
        %776 = vxpose.xlu0.b32.end [16/16] 0.0, 128
        %v777 = vpop.trf.xlu0
        %v778 = vpop.trf.xlu0
        %v779 = vpop.trf.xlu0
        %v780 = vpop.trf.xlu0
        %v781 = vpop.trf.xlu0
        %v782 = vpop.trf.xlu0
        %v783 = vpop.trf.xlu0
        %v784 = vpop.trf.xlu0
        %v785 = vpop.trf.xlu0
        %v786 = vpop.trf.xlu0
        %v787 = vpop.trf.xlu0
        %v788 = vpop.trf.xlu0
        %v789 = vpop.trf.xlu0
        %v790 = vpop.trf.xlu0
        %v791 = vpop.trf.xlu0
        %v792 = vpop.trf.xlu0
        %793 = vxpose.xlu0.b32.start [1/16] %v397, 128
        %794 = vxpose.xlu0.b32.cont [2/16] 0.0, 128
        %795 = vxpose.xlu0.b32.cont [3/16] 0.0, 128
        %796 = vxpose.xlu0.b32.cont [4/16] 0.0, 128
        %797 = vxpose.xlu0.b32.cont [5/16] 0.0, 128
        %798 = vxpose.xlu0.b32.cont [6/16] 0.0, 128
        %799 = vxpose.xlu0.b32.cont [7/16] 0.0, 128
        %800 = vxpose.xlu0.b32.cont [8/16] 0.0, 128
        %801 = vxpose.xlu0.b32.cont [9/16] 0.0, 128
        %802 = vxpose.xlu0.b32.cont [10/16] 0.0, 128
        %803 = vxpose.xlu0.b32.cont [11/16] 0.0, 128
        %804 = vxpose.xlu0.b32.cont [12/16] 0.0, 128
        %805 = vxpose.xlu0.b32.cont [13/16] 0.0, 128
        %806 = vxpose.xlu0.b32.cont [14/16] 0.0, 128
        %807 = vxpose.xlu0.b32.cont [15/16] 0.0, 128
        %808 = vxpose.xlu0.b32.end [16/16] 0.0, 128
        %v809 = vpop.trf.xlu0
        %v810 = vpop.trf.xlu0
        %v811 = vpop.trf.xlu0
        %v812 = vpop.trf.xlu0
        %v813 = vpop.trf.xlu0
        %v814 = vpop.trf.xlu0
        %v815 = vpop.trf.xlu0
        %v816 = vpop.trf.xlu0
        %v817 = vpop.trf.xlu0
        %v818 = vpop.trf.xlu0
        %v819 = vpop.trf.xlu0
        %v820 = vpop.trf.xlu0
        %v821 = vpop.trf.xlu0
        %v822 = vpop.trf.xlu0
        %v823 = vpop.trf.xlu0
        %v824 = vpop.trf.xlu0
        %825 = vxpose.xlu0.b32.start [1/16] %v407, 128
        %826 = vxpose.xlu0.b32.cont [2/16] 0.0, 128
        %827 = vxpose.xlu0.b32.cont [3/16] 0.0, 128
        %828 = vxpose.xlu0.b32.cont [4/16] 0.0, 128
        %829 = vxpose.xlu0.b32.cont [5/16] 0.0, 128
        %830 = vxpose.xlu0.b32.cont [6/16] 0.0, 128
        %831 = vxpose.xlu0.b32.cont [7/16] 0.0, 128
        %832 = vxpose.xlu0.b32.cont [8/16] 0.0, 128
        %833 = vxpose.xlu0.b32.cont [9/16] 0.0, 128
        %834 = vxpose.xlu0.b32.cont [10/16] 0.0, 128
        %835 = vxpose.xlu0.b32.cont [11/16] 0.0, 128
        %836 = vxpose.xlu0.b32.cont [12/16] 0.0, 128
        %837 = vxpose.xlu0.b32.cont [13/16] 0.0, 128
        %838 = vxpose.xlu0.b32.cont [14/16] 0.0, 128
        %839 = vxpose.xlu0.b32.cont [15/16] 0.0, 128
        %840 = vxpose.xlu0.b32.end [16/16] 0.0, 128
        %v841 = vpop.trf.xlu0
        %v842 = vpop.trf.xlu0
        %v843 = vpop.trf.xlu0
        %v844 = vpop.trf.xlu0
        %v845 = vpop.trf.xlu0
        %v846 = vpop.trf.xlu0
        %v847 = vpop.trf.xlu0
        %v848 = vpop.trf.xlu0
        %v849 = vpop.trf.xlu0
        %v850 = vpop.trf.xlu0
        %v851 = vpop.trf.xlu0
        %v852 = vpop.trf.xlu0
        %v853 = vpop.trf.xlu0
        %v854 = vpop.trf.xlu0
        %v855 = vpop.trf.xlu0
        %v856 = vpop.trf.xlu0
        %857 = vxpose.xlu0.b32.start [1/16] %v404, 128
        %858 = vxpose.xlu0.b32.cont [2/16] 0.0, 128
        %859 = vxpose.xlu0.b32.cont [3/16] 0.0, 128
        %860 = vxpose.xlu0.b32.cont [4/16] 0.0, 128
        %861 = vxpose.xlu0.b32.cont [5/16] 0.0, 128
        %862 = vxpose.xlu0.b32.cont [6/16] 0.0, 128
        %863 = vxpose.xlu0.b32.cont [7/16] 0.0, 128
        %864 = vxpose.xlu0.b32.cont [8/16] 0.0, 128
        %865 = vxpose.xlu0.b32.cont [9/16] 0.0, 128
        %866 = vxpose.xlu0.b32.cont [10/16] 0.0, 128
        %867 = vxpose.xlu0.b32.cont [11/16] 0.0, 128
        %868 = vxpose.xlu0.b32.cont [12/16] 0.0, 128
        %869 = vxpose.xlu0.b32.cont [13/16] 0.0, 128
        %870 = vxpose.xlu0.b32.cont [14/16] 0.0, 128
        %871 = vxpose.xlu0.b32.cont [15/16] 0.0, 128
        %872 = vxpose.xlu0.b32.end [16/16] 0.0, 128
        %v873 = vpop.trf.xlu0
        %v874 = vpop.trf.xlu0
        %v875 = vpop.trf.xlu0
        %v876 = vpop.trf.xlu0
        %v877 = vpop.trf.xlu0
        %v878 = vpop.trf.xlu0
        %v879 = vpop.trf.xlu0
        %v880 = vpop.trf.xlu0
        %v881 = vpop.trf.xlu0
        %v882 = vpop.trf.xlu0
        %v883 = vpop.trf.xlu0
        %v884 = vpop.trf.xlu0
        %v885 = vpop.trf.xlu0
        %v886 = vpop.trf.xlu0
        %v887 = vpop.trf.xlu0
        %v888 = vpop.trf.xlu0
        %889 = vxpose.xlu0.b32.start [1/16] %v408, 128
        %890 = vxpose.xlu0.b32.cont [2/16] 0.0, 128
        %891 = vxpose.xlu0.b32.cont [3/16] 0.0, 128
        %892 = vxpose.xlu0.b32.cont [4/16] 0.0, 128
        %893 = vxpose.xlu0.b32.cont [5/16] 0.0, 128
        %894 = vxpose.xlu0.b32.cont [6/16] 0.0, 128
        %895 = vxpose.xlu0.b32.cont [7/16] 0.0, 128
        %896 = vxpose.xlu0.b32.cont [8/16] 0.0, 128
        %897 = vxpose.xlu0.b32.cont [9/16] 0.0, 128
        %898 = vxpose.xlu0.b32.cont [10/16] 0.0, 128
        %899 = vxpose.xlu0.b32.cont [11/16] 0.0, 128
        %900 = vxpose.xlu0.b32.cont [12/16] 0.0, 128
        %901 = vxpose.xlu0.b32.cont [13/16] 0.0, 128
        %902 = vxpose.xlu0.b32.cont [14/16] 0.0, 128
        %903 = vxpose.xlu0.b32.cont [15/16] 0.0, 128
        %904 = vxpose.xlu0.b32.end [16/16] 0.0, 128
        %v905 = vpop.trf.xlu0
        %v906 = vpop.trf.xlu0
        %v907 = vpop.trf.xlu0
        %v908 = vpop.trf.xlu0
        %v909 = vpop.trf.xlu0
        %v910 = vpop.trf.xlu0
        %v911 = vpop.trf.xlu0
        %v912 = vpop.trf.xlu0
        %v913 = vpop.trf.xlu0
        %v914 = vpop.trf.xlu0
        %v915 = vpop.trf.xlu0
        %v916 = vpop.trf.xlu0
        %v917 = vpop.trf.xlu0
        %v918 = vpop.trf.xlu0
        %v919 = vpop.trf.xlu0
        %v920 = vpop.trf.xlu0
        %v921 = vcombine.low %v425, %v489
        %v922 = vcombine.high %v425, %v489
        %v924 = vunpack.c.l.s4 1983009808
        %v925 = vunpack.c.0.s8 %v924
        %v926 = vlaneseq
        %v927 = vshrl.u32 %v926, 7
        %v928 = vsub.s32 %v925, %v927
        %v929 = vrot.slane %v921, %v928
        %v931 = vunpack.c.l.s4 1983009808
        %v932 = vunpack.c.0.s8 %v931
        %v933 = vlaneseq
        %v934 = vshrl.u32 %v933, 7
        %v935 = vsub.s32 %v932, %v934
        %v936 = vrot.slane %v922, %v935
        %v937 = vcombine.low %v457, %v521
        %v938 = vcombine.high %v457, %v521
        %v940 = vunpack.c.l.s4 1983009808
        %v941 = vunpack.c.0.s8 %v940
        %v942 = vlaneseq
        %v943 = vshrl.u32 %v942, 7
        %v944 = vsub.s32 %v941, %v943
        %v945 = vrot.slane %v937, %v944
        %v947 = vunpack.c.l.s4 1983009808
        %v948 = vunpack.c.0.s8 %v947
        %v949 = vlaneseq
        %v950 = vshrl.u32 %v949, 7
        %v951 = vsub.s32 %v948, %v950
        %v952 = vrot.slane %v938, %v951
        %v953 = vcombine.low %v553, %v617
        %v954 = vcombine.high %v553, %v617
        %v956 = vunpack.c.l.s4 1983009808
        %v957 = vunpack.c.0.s8 %v956
        %v958 = vlaneseq
        %v959 = vshrl.u32 %v958, 7
        %v960 = vsub.s32 %v957, %v959
        %v961 = vrot.slane %v953, %v960
        %v963 = vunpack.c.l.s4 1983009808
        %v964 = vunpack.c.0.s8 %v963
        %v965 = vlaneseq
        %v966 = vshrl.u32 %v965, 7
        %v967 = vsub.s32 %v964, %v966
        %v968 = vrot.slane %v954, %v967
        %v969 = vcombine.low %v585, %v649
        %v970 = vcombine.high %v585, %v649
        %v972 = vunpack.c.l.s4 1983009808
        %v973 = vunpack.c.0.s8 %v972
        %v974 = vlaneseq
        %v975 = vshrl.u32 %v974, 7
        %v976 = vsub.s32 %v973, %v975
        %v977 = vrot.slane %v969, %v976
        %v979 = vunpack.c.l.s4 1983009808
        %v980 = vunpack.c.0.s8 %v979
        %v981 = vlaneseq
        %v982 = vshrl.u32 %v981, 7
        %v983 = vsub.s32 %v980, %v982
        %v984 = vrot.slane %v970, %v983
        %v985 = vcombine.low %v929, %v945
        %v986 = vcombine.high %v929, %v945
        %v988 = vunpack.c.l.s4 1934713408
        %v989 = vunpack.c.0.s8 %v988
        %v990 = vlaneseq
        %v991 = vshrl.u32 %v990, 7
        %v992 = vsub.s32 %v989, %v991
        %v993 = vrot.slane %v985, %v992
        %v995 = vunpack.c.l.s4 1934713408
        %v996 = vunpack.c.0.s8 %v995
        %v997 = vlaneseq
        %v998 = vshrl.u32 %v997, 7
        %v999 = vsub.s32 %v996, %v998
        %v1000 = vrot.slane %v986, %v999
        %v1001 = vcombine.low %v936, %v952
        %v1002 = vcombine.high %v936, %v952
        %v1004 = vunpack.c.l.s4 1934713408
        %v1005 = vunpack.c.0.s8 %v1004
        %v1006 = vlaneseq
        %v1007 = vshrl.u32 %v1006, 7
        %v1008 = vsub.s32 %v1005, %v1007
        %v1009 = vrot.slane %v1001, %v1008
        %v1011 = vunpack.c.l.s4 1934713408
        %v1012 = vunpack.c.0.s8 %v1011
        %v1013 = vlaneseq
        %v1014 = vshrl.u32 %v1013, 7
        %v1015 = vsub.s32 %v1012, %v1014
        %v1016 = vrot.slane %v1002, %v1015
        %v1017 = vcombine.low %v961, %v977
        %v1018 = vcombine.high %v961, %v977
        %v1020 = vunpack.c.l.s4 1934713408
        %v1021 = vunpack.c.0.s8 %v1020
        %v1022 = vlaneseq
        %v1023 = vshrl.u32 %v1022, 7
        %v1024 = vsub.s32 %v1021, %v1023
        %v1025 = vrot.slane %v1017, %v1024
        %v1027 = vunpack.c.l.s4 1934713408
        %v1028 = vunpack.c.0.s8 %v1027
        %v1029 = vlaneseq
        %v1030 = vshrl.u32 %v1029, 7
        %v1031 = vsub.s32 %v1028, %v1030
        %v1032 = vrot.slane %v1018, %v1031
        %v1033 = vcombine.low %v968, %v984
        %v1034 = vcombine.high %v968, %v984
        %v1036 = vunpack.c.l.s4 1934713408
        %v1037 = vunpack.c.0.s8 %v1036
        %v1038 = vlaneseq
        %v1039 = vshrl.u32 %v1038, 7
        %v1040 = vsub.s32 %v1037, %v1039
        %v1041 = vrot.slane %v1033, %v1040
        %v1043 = vunpack.c.l.s4 1934713408
        %v1044 = vunpack.c.0.s8 %v1043
        %v1045 = vlaneseq
        %v1046 = vshrl.u32 %v1045, 7
        %v1047 = vsub.s32 %v1044, %v1046
        %v1048 = vrot.slane %v1034, %v1047
        %v1049 = vcombine.low %v993, %v1025
        %v1050 = vcombine.high %v993, %v1025
        %v1051 = vcombine.low %v1000, %v1032
        %v1052 = vcombine.high %v1000, %v1032
        %v1053 = vcombine.low %v1009, %v1041
        %v1054 = vcombine.high %v1009, %v1041
        %v1055 = vcombine.low %v1016, %v1048
        %v1056 = vcombine.high %v1016, %v1048
        %v1057 = vcombine.low %v681, %v745
        %v1058 = vcombine.high %v681, %v745
        %v1060 = vunpack.c.l.s4 1983009808
        %v1061 = vunpack.c.0.s8 %v1060
        %v1062 = vlaneseq
        %v1063 = vshrl.u32 %v1062, 7
        %v1064 = vsub.s32 %v1061, %v1063
        %v1065 = vrot.slane %v1057, %v1064
        %v1067 = vunpack.c.l.s4 1983009808
        %v1068 = vunpack.c.0.s8 %v1067
        %v1069 = vlaneseq
        %v1070 = vshrl.u32 %v1069, 7
        %v1071 = vsub.s32 %v1068, %v1070
        %v1072 = vrot.slane %v1058, %v1071
        %v1073 = vcombine.low %v713, %v777
        %v1074 = vcombine.high %v713, %v777
        %v1076 = vunpack.c.l.s4 1983009808
        %v1077 = vunpack.c.0.s8 %v1076
        %v1078 = vlaneseq
        %v1079 = vshrl.u32 %v1078, 7
        %v1080 = vsub.s32 %v1077, %v1079
        %v1081 = vrot.slane %v1073, %v1080
        %v1083 = vunpack.c.l.s4 1983009808
        %v1084 = vunpack.c.0.s8 %v1083
        %v1085 = vlaneseq
        %v1086 = vshrl.u32 %v1085, 7
        %v1087 = vsub.s32 %v1084, %v1086
        %v1088 = vrot.slane %v1074, %v1087
        %v1089 = vcombine.low %v809, %v873
        %v1090 = vcombine.high %v809, %v873
        %v1092 = vunpack.c.l.s4 1983009808
        %v1093 = vunpack.c.0.s8 %v1092
        %v1094 = vlaneseq
        %v1095 = vshrl.u32 %v1094, 7
        %v1096 = vsub.s32 %v1093, %v1095
        %v1097 = vrot.slane %v1089, %v1096
        %v1099 = vunpack.c.l.s4 1983009808
        %v1100 = vunpack.c.0.s8 %v1099
        %v1101 = vlaneseq
        %v1102 = vshrl.u32 %v1101, 7
        %v1103 = vsub.s32 %v1100, %v1102
        %v1104 = vrot.slane %v1090, %v1103
        %v1105 = vcombine.low %v841, %v905
        %v1106 = vcombine.high %v841, %v905
        %v1108 = vunpack.c.l.s4 1983009808
        %v1109 = vunpack.c.0.s8 %v1108
        %v1110 = vlaneseq
        %v1111 = vshrl.u32 %v1110, 7
        %v1112 = vsub.s32 %v1109, %v1111
        %v1113 = vrot.slane %v1105, %v1112
        %v1115 = vunpack.c.l.s4 1983009808
        %v1116 = vunpack.c.0.s8 %v1115
        %v1117 = vlaneseq
        %v1118 = vshrl.u32 %v1117, 7
        %v1119 = vsub.s32 %v1116, %v1118
        %v1120 = vrot.slane %v1106, %v1119
        %v1121 = vcombine.low %v1065, %v1081
        %v1122 = vcombine.high %v1065, %v1081
        %v1124 = vunpack.c.l.s4 1934713408
        %v1125 = vunpack.c.0.s8 %v1124
        %v1126 = vlaneseq
        %v1127 = vshrl.u32 %v1126, 7
        %v1128 = vsub.s32 %v1125, %v1127
        %v1129 = vrot.slane %v1121, %v1128
        %v1131 = vunpack.c.l.s4 1934713408
        %v1132 = vunpack.c.0.s8 %v1131
        %v1133 = vlaneseq
        %v1134 = vshrl.u32 %v1133, 7
        %v1135 = vsub.s32 %v1132, %v1134
        %v1136 = vrot.slane %v1122, %v1135
        %v1137 = vcombine.low %v1072, %v1088
        %v1138 = vcombine.high %v1072, %v1088
        %v1140 = vunpack.c.l.s4 1934713408
        %v1141 = vunpack.c.0.s8 %v1140
        %v1142 = vlaneseq
        %v1143 = vshrl.u32 %v1142, 7
        %v1144 = vsub.s32 %v1141, %v1143
        %v1145 = vrot.slane %v1137, %v1144
        %v1147 = vunpack.c.l.s4 1934713408
        %v1148 = vunpack.c.0.s8 %v1147
        %v1149 = vlaneseq
        %v1150 = vshrl.u32 %v1149, 7
        %v1151 = vsub.s32 %v1148, %v1150
        %v1152 = vrot.slane %v1138, %v1151
        %v1153 = vcombine.low %v1097, %v1113
        %v1154 = vcombine.high %v1097, %v1113
        %v1156 = vunpack.c.l.s4 1934713408
        %v1157 = vunpack.c.0.s8 %v1156
        %v1158 = vlaneseq
        %v1159 = vshrl.u32 %v1158, 7
        %v1160 = vsub.s32 %v1157, %v1159
        %v1161 = vrot.slane %v1153, %v1160
        %v1163 = vunpack.c.l.s4 1934713408
        %v1164 = vunpack.c.0.s8 %v1163
        %v1165 = vlaneseq
        %v1166 = vshrl.u32 %v1165, 7
        %v1167 = vsub.s32 %v1164, %v1166
        %v1168 = vrot.slane %v1154, %v1167
        %v1169 = vcombine.low %v1104, %v1120
        %v1170 = vcombine.high %v1104, %v1120
        %v1172 = vunpack.c.l.s4 1934713408
        %v1173 = vunpack.c.0.s8 %v1172
        %v1174 = vlaneseq
        %v1175 = vshrl.u32 %v1174, 7
        %v1176 = vsub.s32 %v1173, %v1175
        %v1177 = vrot.slane %v1169, %v1176
        %v1179 = vunpack.c.l.s4 1934713408
        %v1180 = vunpack.c.0.s8 %v1179
        %v1181 = vlaneseq
        %v1182 = vshrl.u32 %v1181, 7
        %v1183 = vsub.s32 %v1180, %v1182
        %v1184 = vrot.slane %v1170, %v1183
        %v1185 = vcombine.low %v1129, %v1161
        %v1186 = vcombine.high %v1129, %v1161
        %v1187 = vcombine.low %v1136, %v1168
        %v1188 = vcombine.high %v1136, %v1168
        %v1189 = vcombine.low %v1145, %v1177
        %v1190 = vcombine.high %v1145, %v1177
        %v1191 = vcombine.low %v1152, %v1184
        %v1192 = vcombine.high %v1152, %v1184
        %v1193 = vcombine.low %v426, %v490
        %v1194 = vcombine.high %v426, %v490
        %v1196 = vunpack.c.l.s4 1983009808
        %v1197 = vunpack.c.0.s8 %v1196
        %v1198 = vlaneseq
        %v1199 = vshrl.u32 %v1198, 7
        %v1200 = vsub.s32 %v1197, %v1199
        %v1201 = vrot.slane %v1193, %v1200
        %v1203 = vunpack.c.l.s4 1983009808
        %v1204 = vunpack.c.0.s8 %v1203
        %v1205 = vlaneseq
        %v1206 = vshrl.u32 %v1205, 7
        %v1207 = vsub.s32 %v1204, %v1206
        %v1208 = vrot.slane %v1194, %v1207
        %v1209 = vcombine.low %v458, %v522
        %v1210 = vcombine.high %v458, %v522
        %v1212 = vunpack.c.l.s4 1983009808
        %v1213 = vunpack.c.0.s8 %v1212
        %v1214 = vlaneseq
        %v1215 = vshrl.u32 %v1214, 7
        %v1216 = vsub.s32 %v1213, %v1215
        %v1217 = vrot.slane %v1209, %v1216
        %v1219 = vunpack.c.l.s4 1983009808
        %v1220 = vunpack.c.0.s8 %v1219
        %v1221 = vlaneseq
        %v1222 = vshrl.u32 %v1221, 7
        %v1223 = vsub.s32 %v1220, %v1222
        %v1224 = vrot.slane %v1210, %v1223
        %v1225 = vcombine.low %v554, %v618
        %v1226 = vcombine.high %v554, %v618
        %v1228 = vunpack.c.l.s4 1983009808
        %v1229 = vunpack.c.0.s8 %v1228
        %v1230 = vlaneseq
        %v1231 = vshrl.u32 %v1230, 7
        %v1232 = vsub.s32 %v1229, %v1231
        %v1233 = vrot.slane %v1225, %v1232
        %v1235 = vunpack.c.l.s4 1983009808
        %v1236 = vunpack.c.0.s8 %v1235
        %v1237 = vlaneseq
        %v1238 = vshrl.u32 %v1237, 7
        %v1239 = vsub.s32 %v1236, %v1238
        %v1240 = vrot.slane %v1226, %v1239
        %v1241 = vcombine.low %v586, %v650
        %v1242 = vcombine.high %v586, %v650
        %v1244 = vunpack.c.l.s4 1983009808
        %v1245 = vunpack.c.0.s8 %v1244
        %v1246 = vlaneseq
        %v1247 = vshrl.u32 %v1246, 7
        %v1248 = vsub.s32 %v1245, %v1247
        %v1249 = vrot.slane %v1241, %v1248
        %v1251 = vunpack.c.l.s4 1983009808
        %v1252 = vunpack.c.0.s8 %v1251
        %v1253 = vlaneseq
        %v1254 = vshrl.u32 %v1253, 7
        %v1255 = vsub.s32 %v1252, %v1254
        %v1256 = vrot.slane %v1242, %v1255
        %v1257 = vcombine.low %v1201, %v1217
        %v1258 = vcombine.high %v1201, %v1217
        %v1260 = vunpack.c.l.s4 1934713408
        %v1261 = vunpack.c.0.s8 %v1260
        %v1262 = vlaneseq
        %v1263 = vshrl.u32 %v1262, 7
        %v1264 = vsub.s32 %v1261, %v1263
        %v1265 = vrot.slane %v1257, %v1264
        %v1267 = vunpack.c.l.s4 1934713408
        %v1268 = vunpack.c.0.s8 %v1267
        %v1269 = vlaneseq
        %v1270 = vshrl.u32 %v1269, 7
        %v1271 = vsub.s32 %v1268, %v1270
        %v1272 = vrot.slane %v1258, %v1271
        %v1273 = vcombine.low %v1208, %v1224
        %v1274 = vcombine.high %v1208, %v1224
        %v1276 = vunpack.c.l.s4 1934713408
        %v1277 = vunpack.c.0.s8 %v1276
        %v1278 = vlaneseq
        %v1279 = vshrl.u32 %v1278, 7
        %v1280 = vsub.s32 %v1277, %v1279
        %v1281 = vrot.slane %v1273, %v1280
        %v1283 = vunpack.c.l.s4 1934713408
        %v1284 = vunpack.c.0.s8 %v1283
        %v1285 = vlaneseq
        %v1286 = vshrl.u32 %v1285, 7
        %v1287 = vsub.s32 %v1284, %v1286
        %v1288 = vrot.slane %v1274, %v1287
        %v1289 = vcombine.low %v1233, %v1249
        %v1290 = vcombine.high %v1233, %v1249
        %v1292 = vunpack.c.l.s4 1934713408
        %v1293 = vunpack.c.0.s8 %v1292
        %v1294 = vlaneseq
        %v1295 = vshrl.u32 %v1294, 7
        %v1296 = vsub.s32 %v1293, %v1295
        %v1297 = vrot.slane %v1289, %v1296
        %v1299 = vunpack.c.l.s4 1934713408
        %v1300 = vunpack.c.0.s8 %v1299
        %v1301 = vlaneseq
        %v1302 = vshrl.u32 %v1301, 7
        %v1303 = vsub.s32 %v1300, %v1302
        %v1304 = vrot.slane %v1290, %v1303
        %v1305 = vcombine.low %v1240, %v1256
        %v1306 = vcombine.high %v1240, %v1256
        %v1308 = vunpack.c.l.s4 1934713408
        %v1309 = vunpack.c.0.s8 %v1308
        %v1310 = vlaneseq
        %v1311 = vshrl.u32 %v1310, 7
        %v1312 = vsub.s32 %v1309, %v1311
        %v1313 = vrot.slane %v1305, %v1312
        %v1315 = vunpack.c.l.s4 1934713408
        %v1316 = vunpack.c.0.s8 %v1315
        %v1317 = vlaneseq
        %v1318 = vshrl.u32 %v1317, 7
        %v1319 = vsub.s32 %v1316, %v1318
        %v1320 = vrot.slane %v1306, %v1319
        %v1321 = vcombine.low %v1265, %v1297
        %v1322 = vcombine.high %v1265, %v1297
        %v1323 = vcombine.low %v1272, %v1304
        %v1324 = vcombine.high %v1272, %v1304
        %v1325 = vcombine.low %v1281, %v1313
        %v1326 = vcombine.high %v1281, %v1313
        %v1327 = vcombine.low %v1288, %v1320
        %v1328 = vcombine.high %v1288, %v1320
        %v1329 = vcombine.low %v682, %v746
        %v1330 = vcombine.high %v682, %v746
        %v1332 = vunpack.c.l.s4 1983009808
        %v1333 = vunpack.c.0.s8 %v1332
        %v1334 = vlaneseq
        %v1335 = vshrl.u32 %v1334, 7
        %v1336 = vsub.s32 %v1333, %v1335
        %v1337 = vrot.slane %v1329, %v1336
        %v1339 = vunpack.c.l.s4 1983009808
        %v1340 = vunpack.c.0.s8 %v1339
        %v1341 = vlaneseq
        %v1342 = vshrl.u32 %v1341, 7
        %v1343 = vsub.s32 %v1340, %v1342
        %v1344 = vrot.slane %v1330, %v1343
        %v1345 = vcombine.low %v714, %v778
        %v1346 = vcombine.high %v714, %v778
        %v1348 = vunpack.c.l.s4 1983009808
        %v1349 = vunpack.c.0.s8 %v1348
        %v1350 = vlaneseq
        %v1351 = vshrl.u32 %v1350, 7
        %v1352 = vsub.s32 %v1349, %v1351
        %v1353 = vrot.slane %v1345, %v1352
        %v1355 = vunpack.c.l.s4 1983009808
        %v1356 = vunpack.c.0.s8 %v1355
        %v1357 = vlaneseq
        %v1358 = vshrl.u32 %v1357, 7
        %v1359 = vsub.s32 %v1356, %v1358
        %v1360 = vrot.slane %v1346, %v1359
        %v1361 = vcombine.low %v810, %v874
        %v1362 = vcombine.high %v810, %v874
        %v1364 = vunpack.c.l.s4 1983009808
        %v1365 = vunpack.c.0.s8 %v1364
        %v1366 = vlaneseq
        %v1367 = vshrl.u32 %v1366, 7
        %v1368 = vsub.s32 %v1365, %v1367
        %v1369 = vrot.slane %v1361, %v1368
        %v1371 = vunpack.c.l.s4 1983009808
        %v1372 = vunpack.c.0.s8 %v1371
        %v1373 = vlaneseq
        %v1374 = vshrl.u32 %v1373, 7
        %v1375 = vsub.s32 %v1372, %v1374
        %v1376 = vrot.slane %v1362, %v1375
        %v1377 = vcombine.low %v842, %v906
        %v1378 = vcombine.high %v842, %v906
        %v1380 = vunpack.c.l.s4 1983009808
        %v1381 = vunpack.c.0.s8 %v1380
        %v1382 = vlaneseq
        %v1383 = vshrl.u32 %v1382, 7
        %v1384 = vsub.s32 %v1381, %v1383
        %v1385 = vrot.slane %v1377, %v1384
        %v1387 = vunpack.c.l.s4 1983009808
        %v1388 = vunpack.c.0.s8 %v1387
        %v1389 = vlaneseq
        %v1390 = vshrl.u32 %v1389, 7
        %v1391 = vsub.s32 %v1388, %v1390
        %v1392 = vrot.slane %v1378, %v1391
        %v1393 = vcombine.low %v1337, %v1353
        %v1394 = vcombine.high %v1337, %v1353
        %v1396 = vunpack.c.l.s4 1934713408
        %v1397 = vunpack.c.0.s8 %v1396
        %v1398 = vlaneseq
        %v1399 = vshrl.u32 %v1398, 7
        %v1400 = vsub.s32 %v1397, %v1399
        %v1401 = vrot.slane %v1393, %v1400
        %v1403 = vunpack.c.l.s4 1934713408
        %v1404 = vunpack.c.0.s8 %v1403
        %v1405 = vlaneseq
        %v1406 = vshrl.u32 %v1405, 7
        %v1407 = vsub.s32 %v1404, %v1406
        %v1408 = vrot.slane %v1394, %v1407
        %v1409 = vcombine.low %v1344, %v1360
        %v1410 = vcombine.high %v1344, %v1360
        %v1412 = vunpack.c.l.s4 1934713408
        %v1413 = vunpack.c.0.s8 %v1412
        %v1414 = vlaneseq
        %v1415 = vshrl.u32 %v1414, 7
        %v1416 = vsub.s32 %v1413, %v1415
        %v1417 = vrot.slane %v1409, %v1416
        %v1419 = vunpack.c.l.s4 1934713408
        %v1420 = vunpack.c.0.s8 %v1419
        %v1421 = vlaneseq
        %v1422 = vshrl.u32 %v1421, 7
        %v1423 = vsub.s32 %v1420, %v1422
        %v1424 = vrot.slane %v1410, %v1423
        %v1425 = vcombine.low %v1369, %v1385
        %v1426 = vcombine.high %v1369, %v1385
        %v1428 = vunpack.c.l.s4 1934713408
        %v1429 = vunpack.c.0.s8 %v1428
        %v1430 = vlaneseq
        %v1431 = vshrl.u32 %v1430, 7
        %v1432 = vsub.s32 %v1429, %v1431
        %v1433 = vrot.slane %v1425, %v1432
        %v1435 = vunpack.c.l.s4 1934713408
        %v1436 = vunpack.c.0.s8 %v1435
        %v1437 = vlaneseq
        %v1438 = vshrl.u32 %v1437, 7
        %v1439 = vsub.s32 %v1436, %v1438
        %v1440 = vrot.slane %v1426, %v1439
        %v1441 = vcombine.low %v1376, %v1392
        %v1442 = vcombine.high %v1376, %v1392
        %v1444 = vunpack.c.l.s4 1934713408
        %v1445 = vunpack.c.0.s8 %v1444
        %v1446 = vlaneseq
        %v1447 = vshrl.u32 %v1446, 7
        %v1448 = vsub.s32 %v1445, %v1447
        %v1449 = vrot.slane %v1441, %v1448
        %v1451 = vunpack.c.l.s4 1934713408
        %v1452 = vunpack.c.0.s8 %v1451
        %v1453 = vlaneseq
        %v1454 = vshrl.u32 %v1453, 7
        %v1455 = vsub.s32 %v1452, %v1454
        %v1456 = vrot.slane %v1442, %v1455
        %v1457 = vcombine.low %v1401, %v1433
        %v1458 = vcombine.high %v1401, %v1433
        %v1459 = vcombine.low %v1408, %v1440
        %v1460 = vcombine.high %v1408, %v1440
        %v1461 = vcombine.low %v1417, %v1449
        %v1462 = vcombine.high %v1417, %v1449
        %v1463 = vcombine.low %v1424, %v1456
        %v1464 = vcombine.high %v1424, %v1456
        %vm1465 = vcmask 31744
        %1466 = vst.msk [vmem:[%s136] sm:$0xff] %vm1465, %v1049
        %1467 = vst.msk [vmem:[%s136 + $0x8] sm:$0xff] %vm1465, %v1185
        %1468 = vst.msk [vmem:[%s136 + $0x10] sm:$0xff] %vm1465, %v1050
        %1469 = vst.msk [vmem:[%s136 + $0x18] sm:$0xff] %vm1465, %v1186
        %1470 = vst.msk [vmem:[%s136 + $0x20] sm:$0xff] %vm1465, %v1051
        %1471 = vst.msk [vmem:[%s136 + $0x28] sm:$0xff] %vm1465, %v1187
        %1472 = vst.msk [vmem:[%s136 + $0x30] sm:$0xff] %vm1465, %v1052
        %1473 = vst.msk [vmem:[%s136 + $0x38] sm:$0xff] %vm1465, %v1188
        %1474 = vst.msk [vmem:[%s136 + $0x40] sm:$0xff] %vm1465, %v1053
        %1475 = vst.msk [vmem:[%s136 + $0x48] sm:$0xff] %vm1465, %v1189
        %1476 = vst.msk [vmem:[%s136 + $0x50] sm:$0xff] %vm1465, %v1054
        %1477 = vst.msk [vmem:[%s136 + $0x58] sm:$0xff] %vm1465, %v1190
        %1478 = vst.msk [vmem:[%s136 + $0x60] sm:$0xff] %vm1465, %v1055
        %1479 = vst.msk [vmem:[%s136 + $0x68] sm:$0xff] %vm1465, %v1191
        %1480 = vst.msk [vmem:[%s136 + $0x70] sm:$0xff] %vm1465, %v1056
        %1481 = vst.msk [vmem:[%s136 + $0x78] sm:$0xff] %vm1465, %v1192
        %1482 = vst.msk [vmem:[%s136 + $0x80] sm:$0xff] %vm1465, %v1321
        %1483 = vst.msk [vmem:[%s136 + $0x88] sm:$0xff] %vm1465, %v1457
        %1484 = vst.msk [vmem:[%s136 + $0x90] sm:$0xff] %vm1465, %v1322
        %1485 = vst.msk [vmem:[%s136 + $0x98] sm:$0xff] %vm1465, %v1458
        %1486 = vst.msk [vmem:[%s136 + $0xa0] sm:$0xff] %vm1465, %v1323
        %1487 = vst.msk [vmem:[%s136 + $0xa8] sm:$0xff] %vm1465, %v1459
        %1488 = vst.msk [vmem:[%s136 + $0xb0] sm:$0xff] %vm1465, %v1324
        %1489 = vst.msk [vmem:[%s136 + $0xb8] sm:$0xff] %vm1465, %v1460
        %1490 = vst.msk [vmem:[%s136 + $0xc0] sm:$0xff] %vm1465, %v1325
        %1491 = vst.msk [vmem:[%s136 + $0xc8] sm:$0xff] %vm1465, %v1461
        %1492 = vst.msk [vmem:[%s136 + $0xd0] sm:$0xff] %vm1465, %v1326
        %1493 = vst.msk [vmem:[%s136 + $0xd8] sm:$0xff] %vm1465, %v1462
        %1494 = vst.msk [vmem:[%s136 + $0xe0] sm:$0xff] %vm1465, %v1327
        %1495 = vst.msk [vmem:[%s136 + $0xe8] sm:$0xff] %vm1465, %v1463
        %1496 = vst.msk [vmem:[%s136 + $0xf0] sm:$0xff] %vm1465, %v1328
        %1497 = vst.msk [vmem:[%s136 + $0xf8] sm:$0xff] %vm1465, %v1464
        %p1498 = scmp.lt.s32.totalorder %s15, 1
        %s1499 = scalar_select %p1498, %s15, 1
        %s1500 = smul.addr %s1499, 32
        %s1501 = smul.addr %s1500, 8
        %s1502 = scalar_lea.vmem %s1, %s1501
        // Predicated region
        $region29: #{tpu_custom_call.1} parent=23 // pred_check
          %p1503 = pneg %p59
        $region30: #{tpu_custom_call.1} parent=23 // pred_check_branch
          %1505 = sbr.rel (%p1503) target = $region32
        $region31: #{tpu_custom_call.1} parent=23 // pred_region
          _
        $region32: #{tpu_custom_call.1} parent=23 // pred_fallthru
          _
      $region24: #{tpu_custom_call.1} parent=5 // pred_fallthru
        _
      %p1506 = scmp.le.s32.totalorder 2, %s10
      // Predicated region
      $region33: #{tpu_custom_call.1} parent=5 // pred_check
        %p1507 = pneg %p1506
      $region34: #{tpu_custom_call.1} parent=5 // pred_check_branch
        %1509 = sbr.rel (%p1507) target = $region36
      $region35: #{tpu_custom_call.1} parent=5 // pred_region
        %s1510 = ssub.s32 %s10, 2
        // Predicated region
        $region37: #{tpu_custom_call.1} parent=35 // pred_check
          %p1511 = pneg %p65
        $region38: #{tpu_custom_call.1} parent=35 // pred_check_branch
          %1513 = sbr.rel (%p1511) target = $region40
        $region39: #{tpu_custom_call.1} parent=35 // pred_region
          %p1514 = scmp.lt.s32.totalorder %s16, 1
          %s1515 = scalar_select %p1514, %s16, 1
          %s1516 = smul.addr %s1515, 32
          %s1517 = smul.addr %s1516, 8
          %s1518 = scalar_lea.vmem %s1, %s1517
        $region40: #{tpu_custom_call.1} parent=35 // pred_fallthru
          _
      $region36: #{tpu_custom_call.1} parent=5 // pred_fallthru
        _
    $region6: #{tpu_custom_call.1} parent=1 // loop_footer
      %s14 = sadd.s32 1, %s10
    $region7: #{tpu_custom_call.1} parent=1 // loop_footer_branch
      %9 = sbr.rel target = $region3
    $region8: #{tpu_custom_call.1} parent=1 // loop_exit
      _
    %1519 = vsyncpa [#allocation3], 1
    %s1520 = scalar_lea.sflag [#allocation3], 1
    %1521 = vsyncpa %s1520, 1

</llo_original>
